<compile_context>
chip_gen: v7x
topology: tpu7x:2x2x1
jax: 0.10.0
libtpu: 0.0.40
codegen_flags: <defaults>
</compile_context>

<pallas_src>
import jax
import jax.numpy as jnp
from jax.experimental import pallas as pl
from jax.experimental.pallas import tpu as pltpu


# Set to jnp.bfloat16 on v6e/v7x to feed the MXU at native width (keep f32 accumulation and
# f32 h/c carries). Left at float32 here to match PyTorch numerics exactly.
MATMUL_DTYPE = jnp.float32

_MAX_UNROLL = 8


def _round_up(v, m):
    return (v + m - 1) // m * m


# ---------------------------------------------------------------------------
# In-kernel building blocks
# ---------------------------------------------------------------------------

def _prologue_gin(x_ref, wih_ref, b_ref, gin_sc):
    """Fused input projection + one-time bwd time reversal.

    gin_sc[s] columns:  [i_f i_b | f_f f_b | g_f g_b | o_f o_b], each chunk H_pad wide.
    After the in-place pair swap, the bwd-direction columns of gin_sc[s] hold the projection of
    input timestep T-1-s, so the recurrence needs a single contiguous load per step.
    """
    T, B, In = x_ref.shape
    G8 = wih_ref.shape[1]
    H2 = G8 // 4          # 2 * H_pad
    H = H2 // 2           # H_pad

    x2 = x_ref[...].astype(MATMUL_DTYPE).reshape(T * B, In)
    gin = jnp.dot(x2, wih_ref[...].astype(MATMUL_DTYPE),
                  preferred_element_type=jnp.float32) + b_ref[...]
    gin_sc[...] = gin.reshape(T, B, G8)

    fwd_cols = (jax.lax.broadcasted_iota(jnp.int32, (1, G8), 1) % H2) < H

    def swap(s, carry):
        a = gin_sc[s]
        b = gin_sc[T - 1 - s]
        gin_sc[s] = jnp.where(fwd_cols, a, b)
        gin_sc[T - 1 - s] = jnp.where(fwd_cols, b, a)
        return carry

    n_pairs = pl.cdiv(T, 2)
    jax.lax.fori_loop(0, n_pairs, swap, 0, unroll=min(n_pairs, _MAX_UNROLL))


def _recurrence(gin_sc, whh_ref, store_fn):
    """Fused bidirectional recurrence with vreg-resident (h, c) carries.

    whh_ref: (2*H_pad, 8*H_pad) block-diagonal recurrent weights (fwd rows 0:H_pad feed the fwd
    gate columns, bwd rows H_pad:2*H_pad feed the bwd gate columns), so a single MXU op per step
    produces both directions' recurrent gates. Returns the fused h = [h_f | h_b] after the final
    step (== concat(h_f at t=T-1, h_b at t=0)).
    """
    T, B, G8 = gin_sc.shape
    H2 = G8 // 4

    whh = whh_ref[...].astype(MATMUL_DTYPE)   # hoisted loop invariant

    def step(s, carry):
        h, c = carry
        gates = gin_sc[s] + jnp.dot(h.astype(MATMUL_DTYPE), whh,
                                    preferred_element_type=jnp.float32)   # (B, 8H)
        i_g = jax.nn.sigmoid(gates[:, 0 * H2:1 * H2])   # each slice = one full 128-lane chunk
        f_g = jax.nn.sigmoid(gates[:, 1 * H2:2 * H2])
        g_g = jnp.tanh(gates[:, 2 * H2:3 * H2])
        o_g = jax.nn.sigmoid(gates[:, 3 * H2:4 * H2])
        c_new = f_g * c + i_g * g_g
        h_new = o_g * jnp.tanh(c_new)                   # [h_f | h_b]
        store_fn(s, h_new)
        return (h_new, c_new)

    h0 = jnp.zeros((B, H2), jnp.float32)
    c0 = jnp.zeros((B, H2), jnp.float32)
    h_last, _ = jax.lax.fori_loop(0, T, step, (h0, c0), unroll=min(T, _MAX_UNROLL))
    return h_last


# ---------------------------------------------------------------------------
# Pallas kernels
# ---------------------------------------------------------------------------

def _bilstm_seq_kernel(x_ref, wih_ref, b_ref, whh_ref, out_ref, gin_sc, hseq_sc):
    """Intermediate layer: fused projection + recurrence; emits the (T, B, 2H) bidirectional
    output sequence with lane-dense stores (bwd-half time reversal resolved in the epilogue)."""
    T = x_ref.shape[0]
    H2 = out_ref.shape[-1]
    H = H2 // 2

    _prologue_gin(x_ref, wih_ref, b_ref, gin_sc)

    def store(s, h):
        hseq_sc[s] = h          # single full-width store per step

    _recurrence(gin_sc, whh_ref, store)

    # Epilogue: out[s] = [h_f(s) | h_b(s)].  h_b(s) lives in the bwd half of hseq_sc[T-1-s].
    fwd_lanes = jax.lax.broadcasted_iota(jnp.int32, (1, H2), 1) < H

    def writeback(s, carry):
        a = hseq_sc[s]
        b = hseq_sc[T - 1 - s]
        out_ref[s] = jnp.where(fwd_lanes, a, b)
        out_ref[T - 1 - s] = jnp.where(fwd_lanes, b, a)
        return carry

    n_pairs = pl.cdiv(T, 2)
    jax.lax.fori_loop(0, n_pairs, writeback, 0, unroll=min(n_pairs, _MAX_UNROLL))


def _bilstm_final_kernel(x_ref, wih_ref, b_ref, whh_ref, fcw_ref, fcb_ref, out_ref, gin_sc):
    """Last layer: the fused h after the final step equals concat(h_f[T-1], h_b[0]); fold the
    classifier matmul into the epilogue instead of emitting the sequence."""
    _prologue_gin(x_ref, wih_ref, b_ref, gin_sc)
    h_last = _recurrence(gin_sc, whh_ref, lambda s, h: None)
    out_ref[...] = (jnp.dot(h_last.astype(MATMUL_DTYPE), fcw_ref[...].astype(MATMUL_DTYPE),
                            preferred_element_type=jnp.float32)
                    + fcb_ref[...])


# ---------------------------------------------------------------------------
# pallas_call wrappers (grid-less; everything fits VMEM at these sizes)
# ---------------------------------------------------------------------------

def _vmem_limit(n_bytes):
    # operand + scratch footprint, 2x margin for compiler temporaries, floor 4 MiB, cap 96 MiB.
    return int(min(max(2 * n_bytes + (2 << 20), 4 << 20), 96 << 20))


def bilstm_layer_seq(x, w_ih, b, w_hh):
    """Fused projection + bidirectional layer producing the (T, B, 2H) sequence."""
    T, B, _ = x.shape
    G8 = w_ih.shape[1]
    H2 = G8 // 4
    footprint = 4 * (x.size + w_ih.size + b.size + w_hh.size
                     + T * B * H2            # output
                     + T * B * G8 + T * B * H2)   # scratches
    return pl.pallas_call(
        _bilstm_seq_kernel,
        out_shape=jax.ShapeDtypeStruct((T, B, H2), jnp.float32),
        scratch_shapes=[pltpu.VMEM((T, B, G8), jnp.float32),    # gin (both dirs, bwd pre-reversed)
                        pltpu.VMEM((T, B, H2), jnp.float32)],   # fused h sequence
        compiler_params=pltpu.CompilerParams(vmem_limit_bytes=_vmem_limit(footprint)),
    )(x, w_ih, b, w_hh)


def bilstm_final_fc(x, w_ih, b, w_hh, fc_w_t, fc_b):
    """Fused projection + bidirectional last layer + classifier -> (B, C_pad) logits."""
    T, B, _ = x.shape
    G8 = w_ih.shape[1]
    C_pad = fc_w_t.shape[1]
    footprint = 4 * (x.size + w_ih.size + b.size + w_hh.size + fc_w_t.size + fc_b.size
                     + B * C_pad + T * B * G8)
    return pl.pallas_call(
        _bilstm_final_kernel,
        out_shape=jax.ShapeDtypeStruct((B, C_pad), jnp.float32),
        scratch_shapes=[pltpu.VMEM((T, B, G8), jnp.float32)],
        compiler_params=pltpu.CompilerParams(vmem_limit_bytes=_vmem_limit(footprint)),
    )(x, w_ih, b, w_hh, fc_w_t, fc_b)


# ---------------------------------------------------------------------------
# Parameter init (deterministic, PyTorch-like), with padded fused weight layout
# ---------------------------------------------------------------------------

def _combine_direction_weights(w_ih_f, w_hh_f, b_f, w_ih_b, w_hh_b, b_b,
                               hidden, in_blocks, in_dim_pad):
    """Gate-major / direction-minor fused weights, zero-padded so 2*H_pad % 128 == 0.

    Columns of the 8*H_pad gate axis: [i_f i_b | f_f f_b | g_f g_b | o_f o_b], each chunk H_pad
    wide (real values in the first H lanes, zeros after). W_hh is block-diagonal over direction.
    `in_blocks` = [(dst_row, src_col, count)] maps raw input features to padded input rows.
    """
    H = hidden
    HP = _round_up(2 * H, 128) // 2
    H2P = 2 * HP
    G8 = 8 * HP

    w_ih_c = jnp.zeros((in_dim_pad, G8), jnp.float32)
    w_hh_c = jnp.zeros((H2P, G8), jnp.float32)
    b_c = jnp.zeros((1, G8), jnp.float32)
    for g in range(4):                       # PyTorch gate order i, f, g, o
        lo = g * H2P
        for (dst, src, cnt) in in_blocks:
            w_ih_c = w_ih_c.at[dst:dst + cnt, lo:lo + H].set(
                w_ih_f[g * H:(g + 1) * H, src:src + cnt].T)
            w_ih_c = w_ih_c.at[dst:dst + cnt, lo + HP:lo + HP + H].set(
                w_ih_b[g * H:(g + 1) * H, src:src + cnt].T)
        w_hh_c = w_hh_c.at[0:H, lo:lo + H].set(w_hh_f[g * H:(g + 1) * H, :].T)
        w_hh_c = w_hh_c.at[HP:HP + H, lo + HP:lo + HP + H].set(w_hh_b[g * H:(g + 1) * H, :].T)
        b_c = b_c.at[0, lo:lo + H].set(b_f[g * H:(g + 1) * H])
        b_c = b_c.at[0, lo + HP:lo + HP + H].set(b_b[g * H:(g + 1) * H])
    return {"w_ih": w_ih_c, "w_hh": w_hh_c, "b": b_c}


def init_params(key, vocab_size, embedding_dim, hidden_dim, n_layers, number_class):
    H = hidden_dim
    HP = _round_up(2 * H, 128) // 2
    H2P = 2 * HP
    E_pad = _round_up(embedding_dim, 128)
    C_pad = _round_up(number_class, 128)

    keys = list(jax.random.split(key, 1 + n_layers * 8 + 2))
    nxt = iter(keys)
    k = 1.0 / float(hidden_dim) ** 0.5

    emb = jax.random.normal(next(nxt), (vocab_size, embedding_dim), jnp.float32)
    emb = emb.at[1].set(0.0)  # padding_idx=1

    layers = []
    for layer in range(n_layers):
        if layer == 0:
            in_dim_raw = embedding_dim
            in_dim_pad = E_pad
            in_blocks = [(0, 0, embedding_dim)]
        else:
            in_dim_raw = 2 * H
            in_dim_pad = H2P
            in_blocks = [(0, 0, H), (HP, H, H)]   # [h_f | pad | h_b | pad] input layout
        raw = {}
        for d in ("fwd", "bwd"):
            w_ih = jax.random.uniform(next(nxt), (4 * H, in_dim_raw), jnp.float32, -k, k)
            w_hh = jax.random.uniform(next(nxt), (4 * H, H), jnp.float32, -k, k)
            b_ih = jax.random.uniform(next(nxt), (4 * H,), jnp.float32, -k, k)
            b_hh = jax.random.uniform(next(nxt), (4 * H,), jnp.float32, -k, k)
            raw[d] = (w_ih, w_hh, b_ih + b_hh)
        layers.append(_combine_direction_weights(raw["fwd"][0], raw["fwd"][1], raw["fwd"][2],
                                                 raw["bwd"][0], raw["bwd"][1], raw["bwd"][2],
                                                 H, in_blocks, in_dim_pad))

    kf = 1.0 / float(2 * H) ** 0.5
    fc_w = jax.random.uniform(next(nxt), (number_class, 2 * H), jnp.float32, -kf, kf)
    fc_b = jax.random.uniform(next(nxt), (number_class,), jnp.float32, -kf, kf)
    fc_w_t = jnp.zeros((H2P, C_pad), jnp.float32)
    fc_w_t = fc_w_t.at[0:H, 0:number_class].set(fc_w[:, :H].T)
    fc_w_t = fc_w_t.at[HP:HP + H, 0:number_class].set(fc_w[:, H:].T)
    fc_b_p = jnp.zeros((1, C_pad), jnp.float32).at[0, 0:number_class].set(fc_b)

    return {"embedding": emb, "lstm": layers, "fc": {"w_t": fc_w_t, "b": fc_b_p}}


# ---------------------------------------------------------------------------
# Forward pass
# ---------------------------------------------------------------------------

def lstm_baseline_forward(params, text, text_length, hidden_dim, number_class):
    del text_length, hidden_dim  # text_length unused in the reference forward
    # Embedding lookup (gather) stays as XLA glue; dropout is the eval-mode identity.
    emb = jnp.take(params["embedding"], text, axis=0)          # (B, T, E)
    x = jnp.transpose(emb, (1, 0, 2)).astype(jnp.float32)      # (T, B, E) time-major
    T, B, E = x.shape

    B_pad = _round_up(B, 8)                                    # sublane-align batch
    E_pad = _round_up(E, 128)                                  # lane-align layer-0 input
    x = jnp.pad(x, ((0, 0), (0, B_pad - B), (0, E_pad - E)))

    n_layers = len(params["lstm"])
    logits = None
    for li, layer in enumerate(params["lstm"]):
        if li + 1 < n_layers:
            x = bilstm_layer_seq(x, layer["w_ih"], layer["b"], layer["w_hh"])  # (T, B_pad, 2HP)
        else:
            logits = bilstm_final_fc(x, layer["w_ih"], layer["b"], layer["w_hh"],
                                     params["fc"]["w_t"], params["fc"]["b"])   # (B_pad, C_pad)
    return logits[:B, :number_class]


# ---------------------------------------------------------------------------
# Main
# ---------------------------------------------------------------------------

if __name__ == "__main__":
    vocab_size = 50
    embedding_dim = 100
    hidden_dim = 32
    n_layers = 2
    number_class = 4
    batch = 2
    seq = 8

    key = jax.random.PRNGKey(0)
    k_params, k_text = jax.random.split(key)

    params = init_params(k_params, vocab_size, embedding_dim, hidden_dim, n_layers, number_class)
    text = jax.random.randint(k_text, (batch, seq), 0, vocab_size, dtype=jnp.int32)
    text_length = jnp.full((batch,), seq, dtype=jnp.int32)

    fwd = jax.jit(lambda p, t, tl: lstm_baseline_forward(p, t, tl, hidden_dim, number_class))
    logits = fwd(params, text, text_length)
    jax.block_until_ready(logits)
    assert logits.shape == (batch, number_class)
    print("KERNEL_OK")
</pallas_src>

<mosaic_0001>
module attributes {stable_mosaic.version = 11 : i64} {
  func.func @_bilstm_seq_kernel(%arg0: memref<8x8x128xf32, #tpu.memory_space<vmem>>, %arg1: memref<128x512xf32, #tpu.memory_space<vmem>>, %arg2: memref<1x512xf32, #tpu.memory_space<vmem>>, %arg3: memref<128x512xf32, #tpu.memory_space<vmem>>, %arg4: memref<8x8x128xf32, #tpu.memory_space<vmem>>, %arg5: memref<8x8x512xf32, #tpu.memory_space<vmem>>, %arg6: memref<8x8x128xf32, #tpu.memory_space<vmem>>) attributes {dimension_semantics = [], scalar_prefetch = 0 : i64, scratch_operands = 2 : i64, tpu.core_type = #tpu.core_type<tc>} {
    %c0 = arith.constant 0 : index
    %c0_0 = arith.constant 0 : index
    %c0_1 = arith.constant 0 : index
    %0 = vector.load %arg0[%c0, %c0_0, %c0_1] : memref<8x8x128xf32, #tpu.memory_space<vmem>>, vector<8x8x128xf32>
    %1 = vector.shape_cast %0 : vector<8x8x128xf32> to vector<64x128xf32>
    %c0_2 = arith.constant 0 : index
    %c0_3 = arith.constant 0 : index
    %2 = vector.load %arg1[%c0_2, %c0_3] : memref<128x512xf32, #tpu.memory_space<vmem>>, vector<128x512xf32>
    %cst = arith.constant dense<0.000000e+00> : vector<64x512xf32>
    %3 = tpu.matmul %1, %2, %cst {dimension_numbers = #tpu.dot_dimension_numbers<[1], [0], [0], [1], [0, 0, 1, 1], [], []>} : vector<64x128xf32>, vector<128x512xf32>, vector<64x512xf32> -> vector<64x512xf32>
    %c0_4 = arith.constant 0 : index
    %c0_5 = arith.constant 0 : index
    %4 = vector.load %arg2[%c0_4, %c0_5] : memref<1x512xf32, #tpu.memory_space<vmem>>, vector<1x512xf32>
    %5 = vector.broadcast %4 : vector<1x512xf32> to vector<64x512xf32>
    %6 = arith.addf %3, %5 : vector<64x512xf32>
    %7 = vector.shape_cast %6 : vector<64x512xf32> to vector<8x8x512xf32>
    %c0_6 = arith.constant 0 : index
    %c0_7 = arith.constant 0 : index
    %c0_8 = arith.constant 0 : index
    %8 = vector.load %arg5[%c0_6, %c0_7, %c0_8] : memref<8x8x512xf32, #tpu.memory_space<vmem>>, vector<8x8x512xf32>
    tpu.vector_store %arg5[%c0_6, %c0_7, %c0_8], %7 {strides = array<i32>} : memref<8x8x512xf32, #tpu.memory_space<vmem>>, vector<8x8x512xf32>,
    %9 = tpu.iota {dimensions = array<i32: 1>} : vector<1x512xi32>
    %c128_i32 = arith.constant 128 : i32
    %c0_i32 = arith.constant 0 : i32
    %10 = arith.cmpi eq, %c128_i32, %c0_i32 : i32
    %c1_i32 = arith.constant 1 : i32
    %11 = arith.select %10, %c1_i32, %c128_i32 : i32
    %12 = vector.broadcast %11 : i32 to vector<1x512xi32>
    %13 = arith.remsi %9, %12 : vector<1x512xi32>
    %c0_i32_9 = arith.constant 0 : i32
    %14 = vector.broadcast %c0_i32_9 : i32 to vector<1x512xi32>
    %15 = arith.cmpi ne, %13, %14 : vector<1x512xi32>
    %c0_i32_10 = arith.constant 0 : i32
    %16 = vector.broadcast %c0_i32_10 : i32 to vector<1x512xi32>
    %17 = arith.cmpi slt, %13, %16 : vector<1x512xi32>
    %c0_i32_11 = arith.constant 0 : i32
    %18 = arith.cmpi slt, %11, %c0_i32_11 : i32
    %19 = vector.broadcast %18 : i1 to vector<1x512xi1>
    %20 = vector.broadcast %19 : vector<1x512xi1> to vector<1x512xi1>
    %21 = arith.xori %17, %20 : vector<1x512xi1>
    %22 = arith.andi %21, %15 : vector<1x512xi1>
    %23 = vector.broadcast %11 : i32 to vector<1x512xi32>
    %24 = arith.addi %13, %23 : vector<1x512xi32>
    %25 = arith.select %22, %24, %13 : vector<1x512xi1>, vector<1x512xi32>
    %c64_i32 = arith.constant 64 : i32
    %26 = vector.broadcast %c64_i32 : i32 to vector<1x512xi32>
    %27 = arith.cmpi slt, %25, %26 : vector<1x512xi32>
    %c0_i32_12 = arith.constant 0 : i32
    %28 = arith.index_cast %c0_i32_12 : i32 to index
    %c0_13 = arith.constant 0 : index
    %c0_14 = arith.constant 0 : index
    %29 = vector.load %arg5[%28, %c0_13, %c0_14] : memref<8x8x512xf32, #tpu.memory_space<vmem>>, vector<1x8x512xf32>
    %30 = vector.shape_cast %29 : vector<1x8x512xf32> to vector<8x512xf32>
    %c7_i32 = arith.constant 7 : i32
    %31 = arith.subi %c7_i32, %c0_i32_12 : i32
    %32 = arith.index_cast %31 : i32 to index
    %c0_15 = arith.constant 0 : index
    %c0_16 = arith.constant 0 : index
    %33 = vector.load %arg5[%32, %c0_15, %c0_16] : memref<8x8x512xf32, #tpu.memory_space<vmem>>, vector<1x8x512xf32>
    %34 = vector.shape_cast %33 : vector<1x8x512xf32> to vector<8x512xf32>
    %35 = vector.shape_cast %27 : vector<1x512xi1> to vector<1x512xi1>
    %36 = vector.broadcast %35 : vector<1x512xi1> to vector<8x512xi1>
    %37 = arith.select %36, %30, %34 : vector<8x512xi1>, vector<8x512xf32>
    %38 = arith.index_cast %c0_i32_12 : i32 to index
    %c0_17 = arith.constant 0 : index
    %c0_18 = arith.constant 0 : index
    %39 = vector.load %arg5[%38, %c0_17, %c0_18] : memref<8x8x512xf32, #tpu.memory_space<vmem>>, vector<1x8x512xf32>
    %40 = vector.shape_cast %39 : vector<1x8x512xf32> to vector<8x512xf32>
    %41 = vector.shape_cast %37 : vector<8x512xf32> to vector<1x8x512xf32>
    tpu.vector_store %arg5[%38, %c0_17, %c0_18], %41 {strides = array<i32>} : memref<8x8x512xf32, #tpu.memory_space<vmem>>, vector<1x8x512xf32>,
    %42 = vector.shape_cast %27 : vector<1x512xi1> to vector<1x512xi1>
    %43 = vector.broadcast %42 : vector<1x512xi1> to vector<8x512xi1>
    %44 = arith.select %43, %34, %30 : vector<8x512xi1>, vector<8x512xf32>
    %c7_i32_19 = arith.constant 7 : i32
    %45 = arith.subi %c7_i32_19, %c0_i32_12 : i32
    %46 = arith.index_cast %45 : i32 to index
    %c0_20 = arith.constant 0 : index
    %c0_21 = arith.constant 0 : index
    %47 = vector.load %arg5[%46, %c0_20, %c0_21] : memref<8x8x512xf32, #tpu.memory_space<vmem>>, vector<1x8x512xf32>
    %48 = vector.shape_cast %47 : vector<1x8x512xf32> to vector<8x512xf32>
    %49 = vector.shape_cast %44 : vector<8x512xf32> to vector<1x8x512xf32>
    tpu.vector_store %arg5[%46, %c0_20, %c0_21], %49 {strides = array<i32>} : memref<8x8x512xf32, #tpu.memory_space<vmem>>, vector<1x8x512xf32>,
    %c1_i32_22 = arith.constant 1 : i32
    %50 = arith.index_cast %c1_i32_22 : i32 to index
    %c0_23 = arith.constant 0 : index
    %c0_24 = arith.constant 0 : index
    %51 = vector.load %arg5[%50, %c0_23, %c0_24] : memref<8x8x512xf32, #tpu.memory_space<vmem>>, vector<1x8x512xf32>
    %52 = vector.shape_cast %51 : vector<1x8x512xf32> to vector<8x512xf32>
    %c7_i32_25 = arith.constant 7 : i32
    %53 = arith.subi %c7_i32_25, %c1_i32_22 : i32
    %54 = arith.index_cast %53 : i32 to index
    %c0_26 = arith.constant 0 : index
    %c0_27 = arith.constant 0 : index
    %55 = vector.load %arg5[%54, %c0_26, %c0_27] : memref<8x8x512xf32, #tpu.memory_space<vmem>>, vector<1x8x512xf32>
    %56 = vector.shape_cast %55 : vector<1x8x512xf32> to vector<8x512xf32>
    %57 = vector.shape_cast %27 : vector<1x512xi1> to vector<1x512xi1>
    %58 = vector.broadcast %57 : vector<1x512xi1> to vector<8x512xi1>
    %59 = arith.select %58, %52, %56 : vector<8x512xi1>, vector<8x512xf32>
    %60 = arith.index_cast %c1_i32_22 : i32 to index
    %c0_28 = arith.constant 0 : index
    %c0_29 = arith.constant 0 : index
    %61 = vector.load %arg5[%60, %c0_28, %c0_29] : memref<8x8x512xf32, #tpu.memory_space<vmem>>, vector<1x8x512xf32>
    %62 = vector.shape_cast %61 : vector<1x8x512xf32> to vector<8x512xf32>
    %63 = vector.shape_cast %59 : vector<8x512xf32> to vector<1x8x512xf32>
    tpu.vector_store %arg5[%60, %c0_28, %c0_29], %63 {strides = array<i32>} : memref<8x8x512xf32, #tpu.memory_space<vmem>>, vector<1x8x512xf32>,
    %64 = vector.shape_cast %27 : vector<1x512xi1> to vector<1x512xi1>
    %65 = vector.broadcast %64 : vector<1x512xi1> to vector<8x512xi1>
    %66 = arith.select %65, %56, %52 : vector<8x512xi1>, vector<8x512xf32>
    %c7_i32_30 = arith.constant 7 : i32
    %67 = arith.subi %c7_i32_30, %c1_i32_22 : i32
    %68 = arith.index_cast %67 : i32 to index
    %c0_31 = arith.constant 0 : index
    %c0_32 = arith.constant 0 : index
    %69 = vector.load %arg5[%68, %c0_31, %c0_32] : memref<8x8x512xf32, #tpu.memory_space<vmem>>, vector<1x8x512xf32>
    %70 = vector.shape_cast %69 : vector<1x8x512xf32> to vector<8x512xf32>
    %71 = vector.shape_cast %66 : vector<8x512xf32> to vector<1x8x512xf32>
    tpu.vector_store %arg5[%68, %c0_31, %c0_32], %71 {strides = array<i32>} : memref<8x8x512xf32, #tpu.memory_space<vmem>>, vector<1x8x512xf32>,
    %c2_i32 = arith.constant 2 : i32
    %72 = arith.index_cast %c2_i32 : i32 to index
    %c0_33 = arith.constant 0 : index
    %c0_34 = arith.constant 0 : index
    %73 = vector.load %arg5[%72, %c0_33, %c0_34] : memref<8x8x512xf32, #tpu.memory_space<vmem>>, vector<1x8x512xf32>
    %74 = vector.shape_cast %73 : vector<1x8x512xf32> to vector<8x512xf32>
    %c7_i32_35 = arith.constant 7 : i32
    %75 = arith.subi %c7_i32_35, %c2_i32 : i32
    %76 = arith.index_cast %75 : i32 to index
    %c0_36 = arith.constant 0 : index
    %c0_37 = arith.constant 0 : index
    %77 = vector.load %arg5[%76, %c0_36, %c0_37] : memref<8x8x512xf32, #tpu.memory_space<vmem>>, vector<1x8x512xf32>
    %78 = vector.shape_cast %77 : vector<1x8x512xf32> to vector<8x512xf32>
    %79 = vector.shape_cast %27 : vector<1x512xi1> to vector<1x512xi1>
    %80 = vector.broadcast %79 : vector<1x512xi1> to vector<8x512xi1>
    %81 = arith.select %80, %74, %78 : vector<8x512xi1>, vector<8x512xf32>
    %82 = arith.index_cast %c2_i32 : i32 to index
    %c0_38 = arith.constant 0 : index
    %c0_39 = arith.constant 0 : index
    %83 = vector.load %arg5[%82, %c0_38, %c0_39] : memref<8x8x512xf32, #tpu.memory_space<vmem>>, vector<1x8x512xf32>
    %84 = vector.shape_cast %83 : vector<1x8x512xf32> to vector<8x512xf32>
    %85 = vector.shape_cast %81 : vector<8x512xf32> to vector<1x8x512xf32>
    tpu.vector_store %arg5[%82, %c0_38, %c0_39], %85 {strides = array<i32>} : memref<8x8x512xf32, #tpu.memory_space<vmem>>, vector<1x8x512xf32>,
    %86 = vector.shape_cast %27 : vector<1x512xi1> to vector<1x512xi1>
    %87 = vector.broadcast %86 : vector<1x512xi1> to vector<8x512xi1>
    %88 = arith.select %87, %78, %74 : vector<8x512xi1>, vector<8x512xf32>
    %c7_i32_40 = arith.constant 7 : i32
    %89 = arith.subi %c7_i32_40, %c2_i32 : i32
    %90 = arith.index_cast %89 : i32 to index
    %c0_41 = arith.constant 0 : index
    %c0_42 = arith.constant 0 : index
    %91 = vector.load %arg5[%90, %c0_41, %c0_42] : memref<8x8x512xf32, #tpu.memory_space<vmem>>, vector<1x8x512xf32>
    %92 = vector.shape_cast %91 : vector<1x8x512xf32> to vector<8x512xf32>
    %93 = vector.shape_cast %88 : vector<8x512xf32> to vector<1x8x512xf32>
    tpu.vector_store %arg5[%90, %c0_41, %c0_42], %93 {strides = array<i32>} : memref<8x8x512xf32, #tpu.memory_space<vmem>>, vector<1x8x512xf32>,
    %c3_i32 = arith.constant 3 : i32
    %94 = arith.index_cast %c3_i32 : i32 to index
    %c0_43 = arith.constant 0 : index
    %c0_44 = arith.constant 0 : index
    %95 = vector.load %arg5[%94, %c0_43, %c0_44] : memref<8x8x512xf32, #tpu.memory_space<vmem>>, vector<1x8x512xf32>
    %96 = vector.shape_cast %95 : vector<1x8x512xf32> to vector<8x512xf32>
    %c7_i32_45 = arith.constant 7 : i32
    %97 = arith.subi %c7_i32_45, %c3_i32 : i32
    %98 = arith.index_cast %97 : i32 to index
    %c0_46 = arith.constant 0 : index
    %c0_47 = arith.constant 0 : index
    %99 = vector.load %arg5[%98, %c0_46, %c0_47] : memref<8x8x512xf32, #tpu.memory_space<vmem>>, vector<1x8x512xf32>
    %100 = vector.shape_cast %99 : vector<1x8x512xf32> to vector<8x512xf32>
    %101 = vector.shape_cast %27 : vector<1x512xi1> to vector<1x512xi1>
    %102 = vector.broadcast %101 : vector<1x512xi1> to vector<8x512xi1>
    %103 = arith.select %102, %96, %100 : vector<8x512xi1>, vector<8x512xf32>
    %104 = arith.index_cast %c3_i32 : i32 to index
    %c0_48 = arith.constant 0 : index
    %c0_49 = arith.constant 0 : index
    %105 = vector.load %arg5[%104, %c0_48, %c0_49] : memref<8x8x512xf32, #tpu.memory_space<vmem>>, vector<1x8x512xf32>
    %106 = vector.shape_cast %105 : vector<1x8x512xf32> to vector<8x512xf32>
    %107 = vector.shape_cast %103 : vector<8x512xf32> to vector<1x8x512xf32>
    tpu.vector_store %arg5[%104, %c0_48, %c0_49], %107 {strides = array<i32>} : memref<8x8x512xf32, #tpu.memory_space<vmem>>, vector<1x8x512xf32>,
    %108 = vector.shape_cast %27 : vector<1x512xi1> to vector<1x512xi1>
    %109 = vector.broadcast %108 : vector<1x512xi1> to vector<8x512xi1>
    %110 = arith.select %109, %100, %96 : vector<8x512xi1>, vector<8x512xf32>
    %c7_i32_50 = arith.constant 7 : i32
    %111 = arith.subi %c7_i32_50, %c3_i32 : i32
    %112 = arith.index_cast %111 : i32 to index
    %c0_51 = arith.constant 0 : index
    %c0_52 = arith.constant 0 : index
    %113 = vector.load %arg5[%112, %c0_51, %c0_52] : memref<8x8x512xf32, #tpu.memory_space<vmem>>, vector<1x8x512xf32>
    %114 = vector.shape_cast %113 : vector<1x8x512xf32> to vector<8x512xf32>
    %115 = vector.shape_cast %110 : vector<8x512xf32> to vector<1x8x512xf32>
    tpu.vector_store %arg5[%112, %c0_51, %c0_52], %115 {strides = array<i32>} : memref<8x8x512xf32, #tpu.memory_space<vmem>>, vector<1x8x512xf32>,
    %c4_i32 = arith.constant 4 : i32
    %c0_53 = arith.constant 0 : index
    %c0_54 = arith.constant 0 : index
    %116 = vector.load %arg3[%c0_53, %c0_54] : memref<128x512xf32, #tpu.memory_space<vmem>>, vector<128x512xf32>
    %cst_55 = arith.constant 0.000000e+00 : f32
    %117 = vector.broadcast %cst_55 : f32 to vector<8x128xf32>
    %cst_56 = arith.constant 0.000000e+00 : f32
    %118 = vector.broadcast %cst_56 : f32 to vector<8x128xf32>
    %c0_i32_57 = arith.constant 0 : i32
    %119 = arith.index_cast %c0_i32_57 : i32 to index
    %c0_58 = arith.constant 0 : index
    %c0_59 = arith.constant 0 : index
    %120 = vector.load %arg5[%119, %c0_58, %c0_59] : memref<8x8x512xf32, #tpu.memory_space<vmem>>, vector<1x8x512xf32>
    %121 = vector.shape_cast %120 : vector<1x8x512xf32> to vector<8x512xf32>
    %cst_60 = arith.constant dense<0.000000e+00> : vector<8x512xf32>
    %122 = tpu.matmul %117, %116, %cst_60 {dimension_numbers = #tpu.dot_dimension_numbers<[1], [0], [0], [1], [0, 0, 1, 1], [], []>} : vector<8x128xf32>, vector<128x512xf32>, vector<8x512xf32> -> vector<8x512xf32>
    %123 = arith.addf %121, %122 : vector<8x512xf32>
    %124 = vector.extract_strided_slice %123 {offsets = [0, 0], sizes = [8, 128], strides = [1, 1]} : vector<8x512xf32> to vector<8x128xf32>
    %125 = arith.negf %124 : vector<8x128xf32>
    %126 = math.exp %125 : vector<8x128xf32>
    %cst_61 = arith.constant 1.000000e+00 : f32
    %127 = vector.broadcast %cst_61 : f32 to vector<8x128xf32>
    %128 = arith.addf %127, %126 : vector<8x128xf32>
    %129 = arith.divf %127, %128 : vector<8x128xf32>
    %130 = vector.extract_strided_slice %123 {offsets = [0, 128], sizes = [8, 128], strides = [1, 1]} : vector<8x512xf32> to vector<8x128xf32>
    %131 = arith.negf %130 : vector<8x128xf32>
    %132 = math.exp %131 : vector<8x128xf32>
    %cst_62 = arith.constant 1.000000e+00 : f32
    %133 = vector.broadcast %cst_62 : f32 to vector<8x128xf32>
    %134 = arith.addf %133, %132 : vector<8x128xf32>
    %135 = arith.divf %133, %134 : vector<8x128xf32>
    %136 = vector.extract_strided_slice %123 {offsets = [0, 256], sizes = [8, 128], strides = [1, 1]} : vector<8x512xf32> to vector<8x128xf32>
    %137 = math.tanh %136 : vector<8x128xf32>
    %138 = vector.extract_strided_slice %123 {offsets = [0, 384], sizes = [8, 128], strides = [1, 1]} : vector<8x512xf32> to vector<8x128xf32>
    %139 = arith.negf %138 : vector<8x128xf32>
    %140 = math.exp %139 : vector<8x128xf32>
    %cst_63 = arith.constant 1.000000e+00 : f32
    %141 = vector.broadcast %cst_63 : f32 to vector<8x128xf32>
    %142 = arith.addf %141, %140 : vector<8x128xf32>
    %143 = arith.divf %141, %142 : vector<8x128xf32>
    %144 = arith.mulf %135, %118 : vector<8x128xf32>
    %145 = arith.mulf %129, %137 : vector<8x128xf32>
    %146 = arith.addf %144, %145 : vector<8x128xf32>
    %147 = math.tanh %146 : vector<8x128xf32>
    %148 = arith.mulf %143, %147 : vector<8x128xf32>
    %149 = arith.index_cast %c0_i32_57 : i32 to index
    %c0_64 = arith.constant 0 : index
    %c0_65 = arith.constant 0 : index
    %150 = vector.load %arg6[%149, %c0_64, %c0_65] : memref<8x8x128xf32, #tpu.memory_space<vmem>>, vector<1x8x128xf32>
    %151 = vector.shape_cast %150 : vector<1x8x128xf32> to vector<8x128xf32>
    %152 = vector.shape_cast %148 : vector<8x128xf32> to vector<1x8x128xf32>
    tpu.vector_store %arg6[%149, %c0_64, %c0_65], %152 {strides = array<i32>} : memref<8x8x128xf32, #tpu.memory_space<vmem>>, vector<1x8x128xf32>,
    %c1_i32_66 = arith.constant 1 : i32
    %153 = arith.index_cast %c1_i32_66 : i32 to index
    %c0_67 = arith.constant 0 : index
    %c0_68 = arith.constant 0 : index
    %154 = vector.load %arg5[%153, %c0_67, %c0_68] : memref<8x8x512xf32, #tpu.memory_space<vmem>>, vector<1x8x512xf32>
    %155 = vector.shape_cast %154 : vector<1x8x512xf32> to vector<8x512xf32>
    %cst_69 = arith.constant dense<0.000000e+00> : vector<8x512xf32>
    %156 = tpu.matmul %148, %116, %cst_69 {dimension_numbers = #tpu.dot_dimension_numbers<[1], [0], [0], [1], [0, 0, 1, 1], [], []>} : vector<8x128xf32>, vector<128x512xf32>, vector<8x512xf32> -> vector<8x512xf32>
    %157 = arith.addf %155, %156 : vector<8x512xf32>
    %158 = vector.extract_strided_slice %157 {offsets = [0, 0], sizes = [8, 128], strides = [1, 1]} : vector<8x512xf32> to vector<8x128xf32>
    %159 = arith.negf %158 : vector<8x128xf32>
    %160 = math.exp %159 : vector<8x128xf32>
    %cst_70 = arith.constant 1.000000e+00 : f32
    %161 = vector.broadcast %cst_70 : f32 to vector<8x128xf32>
    %162 = arith.addf %161, %160 : vector<8x128xf32>
    %163 = arith.divf %161, %162 : vector<8x128xf32>
    %164 = vector.extract_strided_slice %157 {offsets = [0, 128], sizes = [8, 128], strides = [1, 1]} : vector<8x512xf32> to vector<8x128xf32>
    %165 = arith.negf %164 : vector<8x128xf32>
    %166 = math.exp %165 : vector<8x128xf32>
    %cst_71 = arith.constant 1.000000e+00 : f32
    %167 = vector.broadcast %cst_71 : f32 to vector<8x128xf32>
    %168 = arith.addf %167, %166 : vector<8x128xf32>
    %169 = arith.divf %167, %168 : vector<8x128xf32>
    %170 = vector.extract_strided_slice %157 {offsets = [0, 256], sizes = [8, 128], strides = [1, 1]} : vector<8x512xf32> to vector<8x128xf32>
    %171 = math.tanh %170 : vector<8x128xf32>
    %172 = vector.extract_strided_slice %157 {offsets = [0, 384], sizes = [8, 128], strides = [1, 1]} : vector<8x512xf32> to vector<8x128xf32>
    %173 = arith.negf %172 : vector<8x128xf32>
    %174 = math.exp %173 : vector<8x128xf32>
    %cst_72 = arith.constant 1.000000e+00 : f32
    %175 = vector.broadcast %cst_72 : f32 to vector<8x128xf32>
    %176 = arith.addf %175, %174 : vector<8x128xf32>
    %177 = arith.divf %175, %176 : vector<8x128xf32>
    %178 = arith.mulf %169, %146 : vector<8x128xf32>
    %179 = arith.mulf %163, %171 : vector<8x128xf32>
    %180 = arith.addf %178, %179 : vector<8x128xf32>
    %181 = math.tanh %180 : vector<8x128xf32>
    %182 = arith.mulf %177, %181 : vector<8x128xf32>
    %183 = arith.index_cast %c1_i32_66 : i32 to index
    %c0_73 = arith.constant 0 : index
    %c0_74 = arith.constant 0 : index
    %184 = vector.load %arg6[%183, %c0_73, %c0_74] : memref<8x8x128xf32, #tpu.memory_space<vmem>>, vector<1x8x128xf32>
    %185 = vector.shape_cast %184 : vector<1x8x128xf32> to vector<8x128xf32>
    %186 = vector.shape_cast %182 : vector<8x128xf32> to vector<1x8x128xf32>
    tpu.vector_store %arg6[%183, %c0_73, %c0_74], %186 {strides = array<i32>} : memref<8x8x128xf32, #tpu.memory_space<vmem>>, vector<1x8x128xf32>,
    %c2_i32_75 = arith.constant 2 : i32
    %187 = arith.index_cast %c2_i32_75 : i32 to index
    %c0_76 = arith.constant 0 : index
    %c0_77 = arith.constant 0 : index
    %188 = vector.load %arg5[%187, %c0_76, %c0_77] : memref<8x8x512xf32, #tpu.memory_space<vmem>>, vector<1x8x512xf32>
    %189 = vector.shape_cast %188 : vector<1x8x512xf32> to vector<8x512xf32>
    %cst_78 = arith.constant dense<0.000000e+00> : vector<8x512xf32>
    %190 = tpu.matmul %182, %116, %cst_78 {dimension_numbers = #tpu.dot_dimension_numbers<[1], [0], [0], [1], [0, 0, 1, 1], [], []>} : vector<8x128xf32>, vector<128x512xf32>, vector<8x512xf32> -> vector<8x512xf32>
    %191 = arith.addf %189, %190 : vector<8x512xf32>
    %192 = vector.extract_strided_slice %191 {offsets = [0, 0], sizes = [8, 128], strides = [1, 1]} : vector<8x512xf32> to vector<8x128xf32>
    %193 = arith.negf %192 : vector<8x128xf32>
    %194 = math.exp %193 : vector<8x128xf32>
    %cst_79 = arith.constant 1.000000e+00 : f32
    %195 = vector.broadcast %cst_79 : f32 to vector<8x128xf32>
    %196 = arith.addf %195, %194 : vector<8x128xf32>
    %197 = arith.divf %195, %196 : vector<8x128xf32>
    %198 = vector.extract_strided_slice %191 {offsets = [0, 128], sizes = [8, 128], strides = [1, 1]} : vector<8x512xf32> to vector<8x128xf32>
    %199 = arith.negf %198 : vector<8x128xf32>
    %200 = math.exp %199 : vector<8x128xf32>
    %cst_80 = arith.constant 1.000000e+00 : f32
    %201 = vector.broadcast %cst_80 : f32 to vector<8x128xf32>
    %202 = arith.addf %201, %200 : vector<8x128xf32>
    %203 = arith.divf %201, %202 : vector<8x128xf32>
    %204 = vector.extract_strided_slice %191 {offsets = [0, 256], sizes = [8, 128], strides = [1, 1]} : vector<8x512xf32> to vector<8x128xf32>
    %205 = math.tanh %204 : vector<8x128xf32>
    %206 = vector.extract_strided_slice %191 {offsets = [0, 384], sizes = [8, 128], strides = [1, 1]} : vector<8x512xf32> to vector<8x128xf32>
    %207 = arith.negf %206 : vector<8x128xf32>
    %208 = math.exp %207 : vector<8x128xf32>
    %cst_81 = arith.constant 1.000000e+00 : f32
    %209 = vector.broadcast %cst_81 : f32 to vector<8x128xf32>
    %210 = arith.addf %209, %208 : vector<8x128xf32>
    %211 = arith.divf %209, %210 : vector<8x128xf32>
    %212 = arith.mulf %203, %180 : vector<8x128xf32>
    %213 = arith.mulf %197, %205 : vector<8x128xf32>
    %214 = arith.addf %212, %213 : vector<8x128xf32>
    %215 = math.tanh %214 : vector<8x128xf32>
    %216 = arith.mulf %211, %215 : vector<8x128xf32>
    %217 = arith.index_cast %c2_i32_75 : i32 to index
    %c0_82 = arith.constant 0 : index
    %c0_83 = arith.constant 0 : index
    %218 = vector.load %arg6[%217, %c0_82, %c0_83] : memref<8x8x128xf32, #tpu.memory_space<vmem>>, vector<1x8x128xf32>
    %219 = vector.shape_cast %218 : vector<1x8x128xf32> to vector<8x128xf32>
    %220 = vector.shape_cast %216 : vector<8x128xf32> to vector<1x8x128xf32>
    tpu.vector_store %arg6[%217, %c0_82, %c0_83], %220 {strides = array<i32>} : memref<8x8x128xf32, #tpu.memory_space<vmem>>, vector<1x8x128xf32>,
    %c3_i32_84 = arith.constant 3 : i32
    %221 = arith.index_cast %c3_i32_84 : i32 to index
    %c0_85 = arith.constant 0 : index
    %c0_86 = arith.constant 0 : index
    %222 = vector.load %arg5[%221, %c0_85, %c0_86] : memref<8x8x512xf32, #tpu.memory_space<vmem>>, vector<1x8x512xf32>
    %223 = vector.shape_cast %222 : vector<1x8x512xf32> to vector<8x512xf32>
    %cst_87 = arith.constant dense<0.000000e+00> : vector<8x512xf32>
    %224 = tpu.matmul %216, %116, %cst_87 {dimension_numbers = #tpu.dot_dimension_numbers<[1], [0], [0], [1], [0, 0, 1, 1], [], []>} : vector<8x128xf32>, vector<128x512xf32>, vector<8x512xf32> -> vector<8x512xf32>
    %225 = arith.addf %223, %224 : vector<8x512xf32>
    %226 = vector.extract_strided_slice %225 {offsets = [0, 0], sizes = [8, 128], strides = [1, 1]} : vector<8x512xf32> to vector<8x128xf32>
    %227 = arith.negf %226 : vector<8x128xf32>
    %228 = math.exp %227 : vector<8x128xf32>
    %cst_88 = arith.constant 1.000000e+00 : f32
    %229 = vector.broadcast %cst_88 : f32 to vector<8x128xf32>
    %230 = arith.addf %229, %228 : vector<8x128xf32>
    %231 = arith.divf %229, %230 : vector<8x128xf32>
    %232 = vector.extract_strided_slice %225 {offsets = [0, 128], sizes = [8, 128], strides = [1, 1]} : vector<8x512xf32> to vector<8x128xf32>
    %233 = arith.negf %232 : vector<8x128xf32>
    %234 = math.exp %233 : vector<8x128xf32>
    %cst_89 = arith.constant 1.000000e+00 : f32
    %235 = vector.broadcast %cst_89 : f32 to vector<8x128xf32>
    %236 = arith.addf %235, %234 : vector<8x128xf32>
    %237 = arith.divf %235, %236 : vector<8x128xf32>
    %238 = vector.extract_strided_slice %225 {offsets = [0, 256], sizes = [8, 128], strides = [1, 1]} : vector<8x512xf32> to vector<8x128xf32>
    %239 = math.tanh %238 : vector<8x128xf32>
    %240 = vector.extract_strided_slice %225 {offsets = [0, 384], sizes = [8, 128], strides = [1, 1]} : vector<8x512xf32> to vector<8x128xf32>
    %241 = arith.negf %240 : vector<8x128xf32>
    %242 = math.exp %241 : vector<8x128xf32>
    %cst_90 = arith.constant 1.000000e+00 : f32
    %243 = vector.broadcast %cst_90 : f32 to vector<8x128xf32>
    %244 = arith.addf %243, %242 : vector<8x128xf32>
    %245 = arith.divf %243, %244 : vector<8x128xf32>
    %246 = arith.mulf %237, %214 : vector<8x128xf32>
    %247 = arith.mulf %231, %239 : vector<8x128xf32>
    %248 = arith.addf %246, %247 : vector<8x128xf32>
    %249 = math.tanh %248 : vector<8x128xf32>
    %250 = arith.mulf %245, %249 : vector<8x128xf32>
    %251 = arith.index_cast %c3_i32_84 : i32 to index
    %c0_91 = arith.constant 0 : index
    %c0_92 = arith.constant 0 : index
    %252 = vector.load %arg6[%251, %c0_91, %c0_92] : memref<8x8x128xf32, #tpu.memory_space<vmem>>, vector<1x8x128xf32>
    %253 = vector.shape_cast %252 : vector<1x8x128xf32> to vector<8x128xf32>
    %254 = vector.shape_cast %250 : vector<8x128xf32> to vector<1x8x128xf32>
    tpu.vector_store %arg6[%251, %c0_91, %c0_92], %254 {strides = array<i32>} : memref<8x8x128xf32, #tpu.memory_space<vmem>>, vector<1x8x128xf32>,
    %c4_i32_93 = arith.constant 4 : i32
    %255 = arith.index_cast %c4_i32_93 : i32 to index
    %c0_94 = arith.constant 0 : index
    %c0_95 = arith.constant 0 : index
    %256 = vector.load %arg5[%255, %c0_94, %c0_95] : memref<8x8x512xf32, #tpu.memory_space<vmem>>, vector<1x8x512xf32>
    %257 = vector.shape_cast %256 : vector<1x8x512xf32> to vector<8x512xf32>
    %cst_96 = arith.constant dense<0.000000e+00> : vector<8x512xf32>
    %258 = tpu.matmul %250, %116, %cst_96 {dimension_numbers = #tpu.dot_dimension_numbers<[1], [0], [0], [1], [0, 0, 1, 1], [], []>} : vector<8x128xf32>, vector<128x512xf32>, vector<8x512xf32> -> vector<8x512xf32>
    %259 = arith.addf %257, %258 : vector<8x512xf32>
    %260 = vector.extract_strided_slice %259 {offsets = [0, 0], sizes = [8, 128], strides = [1, 1]} : vector<8x512xf32> to vector<8x128xf32>
    %261 = arith.negf %260 : vector<8x128xf32>
    %262 = math.exp %261 : vector<8x128xf32>
    %cst_97 = arith.constant 1.000000e+00 : f32
    %263 = vector.broadcast %cst_97 : f32 to vector<8x128xf32>
    %264 = arith.addf %263, %262 : vector<8x128xf32>
    %265 = arith.divf %263, %264 : vector<8x128xf32>
    %266 = vector.extract_strided_slice %259 {offsets = [0, 128], sizes = [8, 128], strides = [1, 1]} : vector<8x512xf32> to vector<8x128xf32>
    %267 = arith.negf %266 : vector<8x128xf32>
    %268 = math.exp %267 : vector<8x128xf32>
    %cst_98 = arith.constant 1.000000e+00 : f32
    %269 = vector.broadcast %cst_98 : f32 to vector<8x128xf32>
    %270 = arith.addf %269, %268 : vector<8x128xf32>
    %271 = arith.divf %269, %270 : vector<8x128xf32>
    %272 = vector.extract_strided_slice %259 {offsets = [0, 256], sizes = [8, 128], strides = [1, 1]} : vector<8x512xf32> to vector<8x128xf32>
    %273 = math.tanh %272 : vector<8x128xf32>
    %274 = vector.extract_strided_slice %259 {offsets = [0, 384], sizes = [8, 128], strides = [1, 1]} : vector<8x512xf32> to vector<8x128xf32>
    %275 = arith.negf %274 : vector<8x128xf32>
    %276 = math.exp %275 : vector<8x128xf32>
    %cst_99 = arith.constant 1.000000e+00 : f32
    %277 = vector.broadcast %cst_99 : f32 to vector<8x128xf32>
    %278 = arith.addf %277, %276 : vector<8x128xf32>
    %279 = arith.divf %277, %278 : vector<8x128xf32>
    %280 = arith.mulf %271, %248 : vector<8x128xf32>
    %281 = arith.mulf %265, %273 : vector<8x128xf32>
    %282 = arith.addf %280, %281 : vector<8x128xf32>
    %283 = math.tanh %282 : vector<8x128xf32>
    %284 = arith.mulf %279, %283 : vector<8x128xf32>
    %285 = arith.index_cast %c4_i32_93 : i32 to index
    %c0_100 = arith.constant 0 : index
    %c0_101 = arith.constant 0 : index
    %286 = vector.load %arg6[%285, %c0_100, %c0_101] : memref<8x8x128xf32, #tpu.memory_space<vmem>>, vector<1x8x128xf32>
    %287 = vector.shape_cast %286 : vector<1x8x128xf32> to vector<8x128xf32>
    %288 = vector.shape_cast %284 : vector<8x128xf32> to vector<1x8x128xf32>
    tpu.vector_store %arg6[%285, %c0_100, %c0_101], %288 {strides = array<i32>} : memref<8x8x128xf32, #tpu.memory_space<vmem>>, vector<1x8x128xf32>,
    %c5_i32 = arith.constant 5 : i32
    %289 = arith.index_cast %c5_i32 : i32 to index
    %c0_102 = arith.constant 0 : index
    %c0_103 = arith.constant 0 : index
    %290 = vector.load %arg5[%289, %c0_102, %c0_103] : memref<8x8x512xf32, #tpu.memory_space<vmem>>, vector<1x8x512xf32>
    %291 = vector.shape_cast %290 : vector<1x8x512xf32> to vector<8x512xf32>
    %cst_104 = arith.constant dense<0.000000e+00> : vector<8x512xf32>
    %292 = tpu.matmul %284, %116, %cst_104 {dimension_numbers = #tpu.dot_dimension_numbers<[1], [0], [0], [1], [0, 0, 1, 1], [], []>} : vector<8x128xf32>, vector<128x512xf32>, vector<8x512xf32> -> vector<8x512xf32>
    %293 = arith.addf %291, %292 : vector<8x512xf32>
    %294 = vector.extract_strided_slice %293 {offsets = [0, 0], sizes = [8, 128], strides = [1, 1]} : vector<8x512xf32> to vector<8x128xf32>
    %295 = arith.negf %294 : vector<8x128xf32>
    %296 = math.exp %295 : vector<8x128xf32>
    %cst_105 = arith.constant 1.000000e+00 : f32
    %297 = vector.broadcast %cst_105 : f32 to vector<8x128xf32>
    %298 = arith.addf %297, %296 : vector<8x128xf32>
    %299 = arith.divf %297, %298 : vector<8x128xf32>
    %300 = vector.extract_strided_slice %293 {offsets = [0, 128], sizes = [8, 128], strides = [1, 1]} : vector<8x512xf32> to vector<8x128xf32>
    %301 = arith.negf %300 : vector<8x128xf32>
    %302 = math.exp %301 : vector<8x128xf32>
    %cst_106 = arith.constant 1.000000e+00 : f32
    %303 = vector.broadcast %cst_106 : f32 to vector<8x128xf32>
    %304 = arith.addf %303, %302 : vector<8x128xf32>
    %305 = arith.divf %303, %304 : vector<8x128xf32>
    %306 = vector.extract_strided_slice %293 {offsets = [0, 256], sizes = [8, 128], strides = [1, 1]} : vector<8x512xf32> to vector<8x128xf32>
    %307 = math.tanh %306 : vector<8x128xf32>
    %308 = vector.extract_strided_slice %293 {offsets = [0, 384], sizes = [8, 128], strides = [1, 1]} : vector<8x512xf32> to vector<8x128xf32>
    %309 = arith.negf %308 : vector<8x128xf32>
    %310 = math.exp %309 : vector<8x128xf32>
    %cst_107 = arith.constant 1.000000e+00 : f32
    %311 = vector.broadcast %cst_107 : f32 to vector<8x128xf32>
    %312 = arith.addf %311, %310 : vector<8x128xf32>
    %313 = arith.divf %311, %312 : vector<8x128xf32>
    %314 = arith.mulf %305, %282 : vector<8x128xf32>
    %315 = arith.mulf %299, %307 : vector<8x128xf32>
    %316 = arith.addf %314, %315 : vector<8x128xf32>
    %317 = math.tanh %316 : vector<8x128xf32>
    %318 = arith.mulf %313, %317 : vector<8x128xf32>
    %319 = arith.index_cast %c5_i32 : i32 to index
    %c0_108 = arith.constant 0 : index
    %c0_109 = arith.constant 0 : index
    %320 = vector.load %arg6[%319, %c0_108, %c0_109] : memref<8x8x128xf32, #tpu.memory_space<vmem>>, vector<1x8x128xf32>
    %321 = vector.shape_cast %320 : vector<1x8x128xf32> to vector<8x128xf32>
    %322 = vector.shape_cast %318 : vector<8x128xf32> to vector<1x8x128xf32>
    tpu.vector_store %arg6[%319, %c0_108, %c0_109], %322 {strides = array<i32>} : memref<8x8x128xf32, #tpu.memory_space<vmem>>, vector<1x8x128xf32>,
    %c6_i32 = arith.constant 6 : i32
    %323 = arith.index_cast %c6_i32 : i32 to index
    %c0_110 = arith.constant 0 : index
    %c0_111 = arith.constant 0 : index
    %324 = vector.load %arg5[%323, %c0_110, %c0_111] : memref<8x8x512xf32, #tpu.memory_space<vmem>>, vector<1x8x512xf32>
    %325 = vector.shape_cast %324 : vector<1x8x512xf32> to vector<8x512xf32>
    %cst_112 = arith.constant dense<0.000000e+00> : vector<8x512xf32>
    %326 = tpu.matmul %318, %116, %cst_112 {dimension_numbers = #tpu.dot_dimension_numbers<[1], [0], [0], [1], [0, 0, 1, 1], [], []>} : vector<8x128xf32>, vector<128x512xf32>, vector<8x512xf32> -> vector<8x512xf32>
    %327 = arith.addf %325, %326 : vector<8x512xf32>
    %328 = vector.extract_strided_slice %327 {offsets = [0, 0], sizes = [8, 128], strides = [1, 1]} : vector<8x512xf32> to vector<8x128xf32>
    %329 = arith.negf %328 : vector<8x128xf32>
    %330 = math.exp %329 : vector<8x128xf32>
    %cst_113 = arith.constant 1.000000e+00 : f32
    %331 = vector.broadcast %cst_113 : f32 to vector<8x128xf32>
    %332 = arith.addf %331, %330 : vector<8x128xf32>
    %333 = arith.divf %331, %332 : vector<8x128xf32>
    %334 = vector.extract_strided_slice %327 {offsets = [0, 128], sizes = [8, 128], strides = [1, 1]} : vector<8x512xf32> to vector<8x128xf32>
    %335 = arith.negf %334 : vector<8x128xf32>
    %336 = math.exp %335 : vector<8x128xf32>
    %cst_114 = arith.constant 1.000000e+00 : f32
    %337 = vector.broadcast %cst_114 : f32 to vector<8x128xf32>
    %338 = arith.addf %337, %336 : vector<8x128xf32>
    %339 = arith.divf %337, %338 : vector<8x128xf32>
    %340 = vector.extract_strided_slice %327 {offsets = [0, 256], sizes = [8, 128], strides = [1, 1]} : vector<8x512xf32> to vector<8x128xf32>
    %341 = math.tanh %340 : vector<8x128xf32>
    %342 = vector.extract_strided_slice %327 {offsets = [0, 384], sizes = [8, 128], strides = [1, 1]} : vector<8x512xf32> to vector<8x128xf32>
    %343 = arith.negf %342 : vector<8x128xf32>
    %344 = math.exp %343 : vector<8x128xf32>
    %cst_115 = arith.constant 1.000000e+00 : f32
    %345 = vector.broadcast %cst_115 : f32 to vector<8x128xf32>
    %346 = arith.addf %345, %344 : vector<8x128xf32>
    %347 = arith.divf %345, %346 : vector<8x128xf32>
    %348 = arith.mulf %339, %316 : vector<8x128xf32>
    %349 = arith.mulf %333, %341 : vector<8x128xf32>
    %350 = arith.addf %348, %349 : vector<8x128xf32>
    %351 = math.tanh %350 : vector<8x128xf32>
    %352 = arith.mulf %347, %351 : vector<8x128xf32>
    %353 = arith.index_cast %c6_i32 : i32 to index
    %c0_116 = arith.constant 0 : index
    %c0_117 = arith.constant 0 : index
    %354 = vector.load %arg6[%353, %c0_116, %c0_117] : memref<8x8x128xf32, #tpu.memory_space<vmem>>, vector<1x8x128xf32>
    %355 = vector.shape_cast %354 : vector<1x8x128xf32> to vector<8x128xf32>
    %356 = vector.shape_cast %352 : vector<8x128xf32> to vector<1x8x128xf32>
    tpu.vector_store %arg6[%353, %c0_116, %c0_117], %356 {strides = array<i32>} : memref<8x8x128xf32, #tpu.memory_space<vmem>>, vector<1x8x128xf32>,
    %c7_i32_118 = arith.constant 7 : i32
    %357 = arith.index_cast %c7_i32_118 : i32 to index
    %c0_119 = arith.constant 0 : index
    %c0_120 = arith.constant 0 : index
    %358 = vector.load %arg5[%357, %c0_119, %c0_120] : memref<8x8x512xf32, #tpu.memory_space<vmem>>, vector<1x8x512xf32>
    %359 = vector.shape_cast %358 : vector<1x8x512xf32> to vector<8x512xf32>
    %cst_121 = arith.constant dense<0.000000e+00> : vector<8x512xf32>
    %360 = tpu.matmul %352, %116, %cst_121 {dimension_numbers = #tpu.dot_dimension_numbers<[1], [0], [0], [1], [0, 0, 1, 1], [], []>} : vector<8x128xf32>, vector<128x512xf32>, vector<8x512xf32> -> vector<8x512xf32>
    %361 = arith.addf %359, %360 : vector<8x512xf32>
    %362 = vector.extract_strided_slice %361 {offsets = [0, 0], sizes = [8, 128], strides = [1, 1]} : vector<8x512xf32> to vector<8x128xf32>
    %363 = arith.negf %362 : vector<8x128xf32>
    %364 = math.exp %363 : vector<8x128xf32>
    %cst_122 = arith.constant 1.000000e+00 : f32
    %365 = vector.broadcast %cst_122 : f32 to vector<8x128xf32>
    %366 = arith.addf %365, %364 : vector<8x128xf32>
    %367 = arith.divf %365, %366 : vector<8x128xf32>
    %368 = vector.extract_strided_slice %361 {offsets = [0, 128], sizes = [8, 128], strides = [1, 1]} : vector<8x512xf32> to vector<8x128xf32>
    %369 = arith.negf %368 : vector<8x128xf32>
    %370 = math.exp %369 : vector<8x128xf32>
    %cst_123 = arith.constant 1.000000e+00 : f32
    %371 = vector.broadcast %cst_123 : f32 to vector<8x128xf32>
    %372 = arith.addf %371, %370 : vector<8x128xf32>
    %373 = arith.divf %371, %372 : vector<8x128xf32>
    %374 = vector.extract_strided_slice %361 {offsets = [0, 256], sizes = [8, 128], strides = [1, 1]} : vector<8x512xf32> to vector<8x128xf32>
    %375 = math.tanh %374 : vector<8x128xf32>
    %376 = vector.extract_strided_slice %361 {offsets = [0, 384], sizes = [8, 128], strides = [1, 1]} : vector<8x512xf32> to vector<8x128xf32>
    %377 = arith.negf %376 : vector<8x128xf32>
    %378 = math.exp %377 : vector<8x128xf32>
    %cst_124 = arith.constant 1.000000e+00 : f32
    %379 = vector.broadcast %cst_124 : f32 to vector<8x128xf32>
    %380 = arith.addf %379, %378 : vector<8x128xf32>
    %381 = arith.divf %379, %380 : vector<8x128xf32>
    %382 = arith.mulf %373, %350 : vector<8x128xf32>
    %383 = arith.mulf %367, %375 : vector<8x128xf32>
    %384 = arith.addf %382, %383 : vector<8x128xf32>
    %385 = math.tanh %384 : vector<8x128xf32>
    %386 = arith.mulf %381, %385 : vector<8x128xf32>
    %387 = arith.index_cast %c7_i32_118 : i32 to index
    %c0_125 = arith.constant 0 : index
    %c0_126 = arith.constant 0 : index
    %388 = vector.load %arg6[%387, %c0_125, %c0_126] : memref<8x8x128xf32, #tpu.memory_space<vmem>>, vector<1x8x128xf32>
    %389 = vector.shape_cast %388 : vector<1x8x128xf32> to vector<8x128xf32>
    %390 = vector.shape_cast %386 : vector<8x128xf32> to vector<1x8x128xf32>
    tpu.vector_store %arg6[%387, %c0_125, %c0_126], %390 {strides = array<i32>} : memref<8x8x128xf32, #tpu.memory_space<vmem>>, vector<1x8x128xf32>,
    %c8_i32 = arith.constant 8 : i32
    %391 = tpu.iota {dimensions = array<i32: 1>} : vector<1x128xi32>
    %c64_i32_127 = arith.constant 64 : i32
    %392 = vector.broadcast %c64_i32_127 : i32 to vector<1x128xi32>
    %393 = arith.cmpi slt, %391, %392 : vector<1x128xi32>
    %c0_i32_128 = arith.constant 0 : i32
    %394 = arith.index_cast %c0_i32_128 : i32 to index
    %c0_129 = arith.constant 0 : index
    %c0_130 = arith.constant 0 : index
    %395 = vector.load %arg6[%394, %c0_129, %c0_130] : memref<8x8x128xf32, #tpu.memory_space<vmem>>, vector<1x8x128xf32>
    %396 = vector.shape_cast %395 : vector<1x8x128xf32> to vector<8x128xf32>
    %c7_i32_131 = arith.constant 7 : i32
    %397 = arith.subi %c7_i32_131, %c0_i32_128 : i32
    %398 = arith.index_cast %397 : i32 to index
    %c0_132 = arith.constant 0 : index
    %c0_133 = arith.constant 0 : index
    %399 = vector.load %arg6[%398, %c0_132, %c0_133] : memref<8x8x128xf32, #tpu.memory_space<vmem>>, vector<1x8x128xf32>
    %400 = vector.shape_cast %399 : vector<1x8x128xf32> to vector<8x128xf32>
    %401 = vector.shape_cast %393 : vector<1x128xi1> to vector<1x128xi1>
    %402 = vector.broadcast %401 : vector<1x128xi1> to vector<8x128xi1>
    %403 = arith.select %402, %396, %400 : vector<8x128xi1>, vector<8x128xf32>
    %404 = arith.index_cast %c0_i32_128 : i32 to index
    %c0_134 = arith.constant 0 : index
    %c0_135 = arith.constant 0 : index
    %405 = vector.load %arg4[%404, %c0_134, %c0_135] : memref<8x8x128xf32, #tpu.memory_space<vmem>>, vector<1x8x128xf32>
    %406 = vector.shape_cast %405 : vector<1x8x128xf32> to vector<8x128xf32>
    %407 = vector.shape_cast %403 : vector<8x128xf32> to vector<1x8x128xf32>
    tpu.vector_store %arg4[%404, %c0_134, %c0_135], %407 {strides = array<i32>} : memref<8x8x128xf32, #tpu.memory_space<vmem>>, vector<1x8x128xf32>,
    %408 = vector.shape_cast %393 : vector<1x128xi1> to vector<1x128xi1>
    %409 = vector.broadcast %408 : vector<1x128xi1> to vector<8x128xi1>
    %410 = arith.select %409, %400, %396 : vector<8x128xi1>, vector<8x128xf32>
    %c7_i32_136 = arith.constant 7 : i32
    %411 = arith.subi %c7_i32_136, %c0_i32_128 : i32
    %412 = arith.index_cast %411 : i32 to index
    %c0_137 = arith.constant 0 : index
    %c0_138 = arith.constant 0 : index
    %413 = vector.load %arg4[%412, %c0_137, %c0_138] : memref<8x8x128xf32, #tpu.memory_space<vmem>>, vector<1x8x128xf32>
    %414 = vector.shape_cast %413 : vector<1x8x128xf32> to vector<8x128xf32>
    %415 = vector.shape_cast %410 : vector<8x128xf32> to vector<1x8x128xf32>
    tpu.vector_store %arg4[%412, %c0_137, %c0_138], %415 {strides = array<i32>} : memref<8x8x128xf32, #tpu.memory_space<vmem>>, vector<1x8x128xf32>,
    %c1_i32_139 = arith.constant 1 : i32
    %416 = arith.index_cast %c1_i32_139 : i32 to index
    %c0_140 = arith.constant 0 : index
    %c0_141 = arith.constant 0 : index
    %417 = vector.load %arg6[%416, %c0_140, %c0_141] : memref<8x8x128xf32, #tpu.memory_space<vmem>>, vector<1x8x128xf32>
    %418 = vector.shape_cast %417 : vector<1x8x128xf32> to vector<8x128xf32>
    %c7_i32_142 = arith.constant 7 : i32
    %419 = arith.subi %c7_i32_142, %c1_i32_139 : i32
    %420 = arith.index_cast %419 : i32 to index
    %c0_143 = arith.constant 0 : index
    %c0_144 = arith.constant 0 : index
    %421 = vector.load %arg6[%420, %c0_143, %c0_144] : memref<8x8x128xf32, #tpu.memory_space<vmem>>, vector<1x8x128xf32>
    %422 = vector.shape_cast %421 : vector<1x8x128xf32> to vector<8x128xf32>
    %423 = vector.shape_cast %393 : vector<1x128xi1> to vector<1x128xi1>
    %424 = vector.broadcast %423 : vector<1x128xi1> to vector<8x128xi1>
    %425 = arith.select %424, %418, %422 : vector<8x128xi1>, vector<8x128xf32>
    %426 = arith.index_cast %c1_i32_139 : i32 to index
    %c0_145 = arith.constant 0 : index
    %c0_146 = arith.constant 0 : index
    %427 = vector.load %arg4[%426, %c0_145, %c0_146] : memref<8x8x128xf32, #tpu.memory_space<vmem>>, vector<1x8x128xf32>
    %428 = vector.shape_cast %427 : vector<1x8x128xf32> to vector<8x128xf32>
    %429 = vector.shape_cast %425 : vector<8x128xf32> to vector<1x8x128xf32>
    tpu.vector_store %arg4[%426, %c0_145, %c0_146], %429 {strides = array<i32>} : memref<8x8x128xf32, #tpu.memory_space<vmem>>, vector<1x8x128xf32>,
    %430 = vector.shape_cast %393 : vector<1x128xi1> to vector<1x128xi1>
    %431 = vector.broadcast %430 : vector<1x128xi1> to vector<8x128xi1>
    %432 = arith.select %431, %422, %418 : vector<8x128xi1>, vector<8x128xf32>
    %c7_i32_147 = arith.constant 7 : i32
    %433 = arith.subi %c7_i32_147, %c1_i32_139 : i32
    %434 = arith.index_cast %433 : i32 to index
    %c0_148 = arith.constant 0 : index
    %c0_149 = arith.constant 0 : index
    %435 = vector.load %arg4[%434, %c0_148, %c0_149] : memref<8x8x128xf32, #tpu.memory_space<vmem>>, vector<1x8x128xf32>
    %436 = vector.shape_cast %435 : vector<1x8x128xf32> to vector<8x128xf32>
    %437 = vector.shape_cast %432 : vector<8x128xf32> to vector<1x8x128xf32>
    tpu.vector_store %arg4[%434, %c0_148, %c0_149], %437 {strides = array<i32>} : memref<8x8x128xf32, #tpu.memory_space<vmem>>, vector<1x8x128xf32>,
    %c2_i32_150 = arith.constant 2 : i32
    %438 = arith.index_cast %c2_i32_150 : i32 to index
    %c0_151 = arith.constant 0 : index
    %c0_152 = arith.constant 0 : index
    %439 = vector.load %arg6[%438, %c0_151, %c0_152] : memref<8x8x128xf32, #tpu.memory_space<vmem>>, vector<1x8x128xf32>
    %440 = vector.shape_cast %439 : vector<1x8x128xf32> to vector<8x128xf32>
    %c7_i32_153 = arith.constant 7 : i32
    %441 = arith.subi %c7_i32_153, %c2_i32_150 : i32
    %442 = arith.index_cast %441 : i32 to index
    %c0_154 = arith.constant 0 : index
    %c0_155 = arith.constant 0 : index
    %443 = vector.load %arg6[%442, %c0_154, %c0_155] : memref<8x8x128xf32, #tpu.memory_space<vmem>>, vector<1x8x128xf32>
    %444 = vector.shape_cast %443 : vector<1x8x128xf32> to vector<8x128xf32>
    %445 = vector.shape_cast %393 : vector<1x128xi1> to vector<1x128xi1>
    %446 = vector.broadcast %445 : vector<1x128xi1> to vector<8x128xi1>
    %447 = arith.select %446, %440, %444 : vector<8x128xi1>, vector<8x128xf32>
    %448 = arith.index_cast %c2_i32_150 : i32 to index
    %c0_156 = arith.constant 0 : index
    %c0_157 = arith.constant 0 : index
    %449 = vector.load %arg4[%448, %c0_156, %c0_157] : memref<8x8x128xf32, #tpu.memory_space<vmem>>, vector<1x8x128xf32>
    %450 = vector.shape_cast %449 : vector<1x8x128xf32> to vector<8x128xf32>
    %451 = vector.shape_cast %447 : vector<8x128xf32> to vector<1x8x128xf32>
    tpu.vector_store %arg4[%448, %c0_156, %c0_157], %451 {strides = array<i32>} : memref<8x8x128xf32, #tpu.memory_space<vmem>>, vector<1x8x128xf32>,
    %452 = vector.shape_cast %393 : vector<1x128xi1> to vector<1x128xi1>
    %453 = vector.broadcast %452 : vector<1x128xi1> to vector<8x128xi1>
    %454 = arith.select %453, %444, %440 : vector<8x128xi1>, vector<8x128xf32>
    %c7_i32_158 = arith.constant 7 : i32
    %455 = arith.subi %c7_i32_158, %c2_i32_150 : i32
    %456 = arith.index_cast %455 : i32 to index
    %c0_159 = arith.constant 0 : index
    %c0_160 = arith.constant 0 : index
    %457 = vector.load %arg4[%456, %c0_159, %c0_160] : memref<8x8x128xf32, #tpu.memory_space<vmem>>, vector<1x8x128xf32>
    %458 = vector.shape_cast %457 : vector<1x8x128xf32> to vector<8x128xf32>
    %459 = vector.shape_cast %454 : vector<8x128xf32> to vector<1x8x128xf32>
    tpu.vector_store %arg4[%456, %c0_159, %c0_160], %459 {strides = array<i32>} : memref<8x8x128xf32, #tpu.memory_space<vmem>>, vector<1x8x128xf32>,
    %c3_i32_161 = arith.constant 3 : i32
    %460 = arith.index_cast %c3_i32_161 : i32 to index
    %c0_162 = arith.constant 0 : index
    %c0_163 = arith.constant 0 : index
    %461 = vector.load %arg6[%460, %c0_162, %c0_163] : memref<8x8x128xf32, #tpu.memory_space<vmem>>, vector<1x8x128xf32>
    %462 = vector.shape_cast %461 : vector<1x8x128xf32> to vector<8x128xf32>
    %c7_i32_164 = arith.constant 7 : i32
    %463 = arith.subi %c7_i32_164, %c3_i32_161 : i32
    %464 = arith.index_cast %463 : i32 to index
    %c0_165 = arith.constant 0 : index
    %c0_166 = arith.constant 0 : index
    %465 = vector.load %arg6[%464, %c0_165, %c0_166] : memref<8x8x128xf32, #tpu.memory_space<vmem>>, vector<1x8x128xf32>
    %466 = vector.shape_cast %465 : vector<1x8x128xf32> to vector<8x128xf32>
    %467 = vector.shape_cast %393 : vector<1x128xi1> to vector<1x128xi1>
    %468 = vector.broadcast %467 : vector<1x128xi1> to vector<8x128xi1>
    %469 = arith.select %468, %462, %466 : vector<8x128xi1>, vector<8x128xf32>
    %470 = arith.index_cast %c3_i32_161 : i32 to index
    %c0_167 = arith.constant 0 : index
    %c0_168 = arith.constant 0 : index
    %471 = vector.load %arg4[%470, %c0_167, %c0_168] : memref<8x8x128xf32, #tpu.memory_space<vmem>>, vector<1x8x128xf32>
    %472 = vector.shape_cast %471 : vector<1x8x128xf32> to vector<8x128xf32>
    %473 = vector.shape_cast %469 : vector<8x128xf32> to vector<1x8x128xf32>
    tpu.vector_store %arg4[%470, %c0_167, %c0_168], %473 {strides = array<i32>} : memref<8x8x128xf32, #tpu.memory_space<vmem>>, vector<1x8x128xf32>,
    %474 = vector.shape_cast %393 : vector<1x128xi1> to vector<1x128xi1>
    %475 = vector.broadcast %474 : vector<1x128xi1> to vector<8x128xi1>
    %476 = arith.select %475, %466, %462 : vector<8x128xi1>, vector<8x128xf32>
    %c7_i32_169 = arith.constant 7 : i32
    %477 = arith.subi %c7_i32_169, %c3_i32_161 : i32
    %478 = arith.index_cast %477 : i32 to index
    %c0_170 = arith.constant 0 : index
    %c0_171 = arith.constant 0 : index
    %479 = vector.load %arg4[%478, %c0_170, %c0_171] : memref<8x8x128xf32, #tpu.memory_space<vmem>>, vector<1x8x128xf32>
    %480 = vector.shape_cast %479 : vector<1x8x128xf32> to vector<8x128xf32>
    %481 = vector.shape_cast %476 : vector<8x128xf32> to vector<1x8x128xf32>
    tpu.vector_store %arg4[%478, %c0_170, %c0_171], %481 {strides = array<i32>} : memref<8x8x128xf32, #tpu.memory_space<vmem>>, vector<1x8x128xf32>,
    %c4_i32_172 = arith.constant 4 : i32
    return
  }
}

module attributes {stable_mosaic.version = 11 : i64} {
  func.func @_bilstm_final_kernel(%arg0: memref<8x8x128xf32, #tpu.memory_space<vmem>>, %arg1: memref<128x512xf32, #tpu.memory_space<vmem>>, %arg2: memref<1x512xf32, #tpu.memory_space<vmem>>, %arg3: memref<128x512xf32, #tpu.memory_space<vmem>>, %arg4: memref<128x128xf32, #tpu.memory_space<vmem>>, %arg5: memref<1x128xf32, #tpu.memory_space<vmem>>, %arg6: memref<8x128xf32, #tpu.memory_space<vmem>>, %arg7: memref<8x8x512xf32, #tpu.memory_space<vmem>>) attributes {dimension_semantics = [], scalar_prefetch = 0 : i64, scratch_operands = 1 : i64, tpu.core_type = #tpu.core_type<tc>} {
    %c0 = arith.constant 0 : index
    %c0_0 = arith.constant 0 : index
    %c0_1 = arith.constant 0 : index
    %0 = vector.load %arg0[%c0, %c0_0, %c0_1] : memref<8x8x128xf32, #tpu.memory_space<vmem>>, vector<8x8x128xf32>
    %1 = vector.shape_cast %0 : vector<8x8x128xf32> to vector<64x128xf32>
    %c0_2 = arith.constant 0 : index
    %c0_3 = arith.constant 0 : index
    %2 = vector.load %arg1[%c0_2, %c0_3] : memref<128x512xf32, #tpu.memory_space<vmem>>, vector<128x512xf32>
    %cst = arith.constant dense<0.000000e+00> : vector<64x512xf32>
    %3 = tpu.matmul %1, %2, %cst {dimension_numbers = #tpu.dot_dimension_numbers<[1], [0], [0], [1], [0, 0, 1, 1], [], []>} : vector<64x128xf32>, vector<128x512xf32>, vector<64x512xf32> -> vector<64x512xf32>
    %c0_4 = arith.constant 0 : index
    %c0_5 = arith.constant 0 : index
    %4 = vector.load %arg2[%c0_4, %c0_5] : memref<1x512xf32, #tpu.memory_space<vmem>>, vector<1x512xf32>
    %5 = vector.broadcast %4 : vector<1x512xf32> to vector<64x512xf32>
    %6 = arith.addf %3, %5 : vector<64x512xf32>
    %7 = vector.shape_cast %6 : vector<64x512xf32> to vector<8x8x512xf32>
    %c0_6 = arith.constant 0 : index
    %c0_7 = arith.constant 0 : index
    %c0_8 = arith.constant 0 : index
    %8 = vector.load %arg7[%c0_6, %c0_7, %c0_8] : memref<8x8x512xf32, #tpu.memory_space<vmem>>, vector<8x8x512xf32>
    tpu.vector_store %arg7[%c0_6, %c0_7, %c0_8], %7 {strides = array<i32>} : memref<8x8x512xf32, #tpu.memory_space<vmem>>, vector<8x8x512xf32>,
    %9 = tpu.iota {dimensions = array<i32: 1>} : vector<1x512xi32>
    %c128_i32 = arith.constant 128 : i32
    %c0_i32 = arith.constant 0 : i32
    %10 = arith.cmpi eq, %c128_i32, %c0_i32 : i32
    %c1_i32 = arith.constant 1 : i32
    %11 = arith.select %10, %c1_i32, %c128_i32 : i32
    %12 = vector.broadcast %11 : i32 to vector<1x512xi32>
    %13 = arith.remsi %9, %12 : vector<1x512xi32>
    %c0_i32_9 = arith.constant 0 : i32
    %14 = vector.broadcast %c0_i32_9 : i32 to vector<1x512xi32>
    %15 = arith.cmpi ne, %13, %14 : vector<1x512xi32>
    %c0_i32_10 = arith.constant 0 : i32
    %16 = vector.broadcast %c0_i32_10 : i32 to vector<1x512xi32>
    %17 = arith.cmpi slt, %13, %16 : vector<1x512xi32>
    %c0_i32_11 = arith.constant 0 : i32
    %18 = arith.cmpi slt, %11, %c0_i32_11 : i32
    %19 = vector.broadcast %18 : i1 to vector<1x512xi1>
    %20 = vector.broadcast %19 : vector<1x512xi1> to vector<1x512xi1>
    %21 = arith.xori %17, %20 : vector<1x512xi1>
    %22 = arith.andi %21, %15 : vector<1x512xi1>
    %23 = vector.broadcast %11 : i32 to vector<1x512xi32>
    %24 = arith.addi %13, %23 : vector<1x512xi32>
    %25 = arith.select %22, %24, %13 : vector<1x512xi1>, vector<1x512xi32>
    %c64_i32 = arith.constant 64 : i32
    %26 = vector.broadcast %c64_i32 : i32 to vector<1x512xi32>
    %27 = arith.cmpi slt, %25, %26 : vector<1x512xi32>
    %c0_i32_12 = arith.constant 0 : i32
    %28 = arith.index_cast %c0_i32_12 : i32 to index
    %c0_13 = arith.constant 0 : index
    %c0_14 = arith.constant 0 : index
    %29 = vector.load %arg7[%28, %c0_13, %c0_14] : memref<8x8x512xf32, #tpu.memory_space<vmem>>, vector<1x8x512xf32>
    %30 = vector.shape_cast %29 : vector<1x8x512xf32> to vector<8x512xf32>
    %c7_i32 = arith.constant 7 : i32
    %31 = arith.subi %c7_i32, %c0_i32_12 : i32
    %32 = arith.index_cast %31 : i32 to index
    %c0_15 = arith.constant 0 : index
    %c0_16 = arith.constant 0 : index
    %33 = vector.load %arg7[%32, %c0_15, %c0_16] : memref<8x8x512xf32, #tpu.memory_space<vmem>>, vector<1x8x512xf32>
    %34 = vector.shape_cast %33 : vector<1x8x512xf32> to vector<8x512xf32>
    %35 = vector.shape_cast %27 : vector<1x512xi1> to vector<1x512xi1>
    %36 = vector.broadcast %35 : vector<1x512xi1> to vector<8x512xi1>
    %37 = arith.select %36, %30, %34 : vector<8x512xi1>, vector<8x512xf32>
    %38 = arith.index_cast %c0_i32_12 : i32 to index
    %c0_17 = arith.constant 0 : index
    %c0_18 = arith.constant 0 : index
    %39 = vector.load %arg7[%38, %c0_17, %c0_18] : memref<8x8x512xf32, #tpu.memory_space<vmem>>, vector<1x8x512xf32>
    %40 = vector.shape_cast %39 : vector<1x8x512xf32> to vector<8x512xf32>
    %41 = vector.shape_cast %37 : vector<8x512xf32> to vector<1x8x512xf32>
    tpu.vector_store %arg7[%38, %c0_17, %c0_18], %41 {strides = array<i32>} : memref<8x8x512xf32, #tpu.memory_space<vmem>>, vector<1x8x512xf32>,
    %42 = vector.shape_cast %27 : vector<1x512xi1> to vector<1x512xi1>
    %43 = vector.broadcast %42 : vector<1x512xi1> to vector<8x512xi1>
    %44 = arith.select %43, %34, %30 : vector<8x512xi1>, vector<8x512xf32>
    %c7_i32_19 = arith.constant 7 : i32
    %45 = arith.subi %c7_i32_19, %c0_i32_12 : i32
    %46 = arith.index_cast %45 : i32 to index
    %c0_20 = arith.constant 0 : index
    %c0_21 = arith.constant 0 : index
    %47 = vector.load %arg7[%46, %c0_20, %c0_21] : memref<8x8x512xf32, #tpu.memory_space<vmem>>, vector<1x8x512xf32>
    %48 = vector.shape_cast %47 : vector<1x8x512xf32> to vector<8x512xf32>
    %49 = vector.shape_cast %44 : vector<8x512xf32> to vector<1x8x512xf32>
    tpu.vector_store %arg7[%46, %c0_20, %c0_21], %49 {strides = array<i32>} : memref<8x8x512xf32, #tpu.memory_space<vmem>>, vector<1x8x512xf32>,
    %c1_i32_22 = arith.constant 1 : i32
    %50 = arith.index_cast %c1_i32_22 : i32 to index
    %c0_23 = arith.constant 0 : index
    %c0_24 = arith.constant 0 : index
    %51 = vector.load %arg7[%50, %c0_23, %c0_24] : memref<8x8x512xf32, #tpu.memory_space<vmem>>, vector<1x8x512xf32>
    %52 = vector.shape_cast %51 : vector<1x8x512xf32> to vector<8x512xf32>
    %c7_i32_25 = arith.constant 7 : i32
    %53 = arith.subi %c7_i32_25, %c1_i32_22 : i32
    %54 = arith.index_cast %53 : i32 to index
    %c0_26 = arith.constant 0 : index
    %c0_27 = arith.constant 0 : index
    %55 = vector.load %arg7[%54, %c0_26, %c0_27] : memref<8x8x512xf32, #tpu.memory_space<vmem>>, vector<1x8x512xf32>
    %56 = vector.shape_cast %55 : vector<1x8x512xf32> to vector<8x512xf32>
    %57 = vector.shape_cast %27 : vector<1x512xi1> to vector<1x512xi1>
    %58 = vector.broadcast %57 : vector<1x512xi1> to vector<8x512xi1>
    %59 = arith.select %58, %52, %56 : vector<8x512xi1>, vector<8x512xf32>
    %60 = arith.index_cast %c1_i32_22 : i32 to index
    %c0_28 = arith.constant 0 : index
    %c0_29 = arith.constant 0 : index
    %61 = vector.load %arg7[%60, %c0_28, %c0_29] : memref<8x8x512xf32, #tpu.memory_space<vmem>>, vector<1x8x512xf32>
    %62 = vector.shape_cast %61 : vector<1x8x512xf32> to vector<8x512xf32>
    %63 = vector.shape_cast %59 : vector<8x512xf32> to vector<1x8x512xf32>
    tpu.vector_store %arg7[%60, %c0_28, %c0_29], %63 {strides = array<i32>} : memref<8x8x512xf32, #tpu.memory_space<vmem>>, vector<1x8x512xf32>,
    %64 = vector.shape_cast %27 : vector<1x512xi1> to vector<1x512xi1>
    %65 = vector.broadcast %64 : vector<1x512xi1> to vector<8x512xi1>
    %66 = arith.select %65, %56, %52 : vector<8x512xi1>, vector<8x512xf32>
    %c7_i32_30 = arith.constant 7 : i32
    %67 = arith.subi %c7_i32_30, %c1_i32_22 : i32
    %68 = arith.index_cast %67 : i32 to index
    %c0_31 = arith.constant 0 : index
    %c0_32 = arith.constant 0 : index
    %69 = vector.load %arg7[%68, %c0_31, %c0_32] : memref<8x8x512xf32, #tpu.memory_space<vmem>>, vector<1x8x512xf32>
    %70 = vector.shape_cast %69 : vector<1x8x512xf32> to vector<8x512xf32>
    %71 = vector.shape_cast %66 : vector<8x512xf32> to vector<1x8x512xf32>
    tpu.vector_store %arg7[%68, %c0_31, %c0_32], %71 {strides = array<i32>} : memref<8x8x512xf32, #tpu.memory_space<vmem>>, vector<1x8x512xf32>,
    %c2_i32 = arith.constant 2 : i32
    %72 = arith.index_cast %c2_i32 : i32 to index
    %c0_33 = arith.constant 0 : index
    %c0_34 = arith.constant 0 : index
    %73 = vector.load %arg7[%72, %c0_33, %c0_34] : memref<8x8x512xf32, #tpu.memory_space<vmem>>, vector<1x8x512xf32>
    %74 = vector.shape_cast %73 : vector<1x8x512xf32> to vector<8x512xf32>
    %c7_i32_35 = arith.constant 7 : i32
    %75 = arith.subi %c7_i32_35, %c2_i32 : i32
    %76 = arith.index_cast %75 : i32 to index
    %c0_36 = arith.constant 0 : index
    %c0_37 = arith.constant 0 : index
    %77 = vector.load %arg7[%76, %c0_36, %c0_37] : memref<8x8x512xf32, #tpu.memory_space<vmem>>, vector<1x8x512xf32>
    %78 = vector.shape_cast %77 : vector<1x8x512xf32> to vector<8x512xf32>
    %79 = vector.shape_cast %27 : vector<1x512xi1> to vector<1x512xi1>
    %80 = vector.broadcast %79 : vector<1x512xi1> to vector<8x512xi1>
    %81 = arith.select %80, %74, %78 : vector<8x512xi1>, vector<8x512xf32>
    %82 = arith.index_cast %c2_i32 : i32 to index
    %c0_38 = arith.constant 0 : index
    %c0_39 = arith.constant 0 : index
    %83 = vector.load %arg7[%82, %c0_38, %c0_39] : memref<8x8x512xf32, #tpu.memory_space<vmem>>, vector<1x8x512xf32>
    %84 = vector.shape_cast %83 : vector<1x8x512xf32> to vector<8x512xf32>
    %85 = vector.shape_cast %81 : vector<8x512xf32> to vector<1x8x512xf32>
    tpu.vector_store %arg7[%82, %c0_38, %c0_39], %85 {strides = array<i32>} : memref<8x8x512xf32, #tpu.memory_space<vmem>>, vector<1x8x512xf32>,
    %86 = vector.shape_cast %27 : vector<1x512xi1> to vector<1x512xi1>
    %87 = vector.broadcast %86 : vector<1x512xi1> to vector<8x512xi1>
    %88 = arith.select %87, %78, %74 : vector<8x512xi1>, vector<8x512xf32>
    %c7_i32_40 = arith.constant 7 : i32
    %89 = arith.subi %c7_i32_40, %c2_i32 : i32
    %90 = arith.index_cast %89 : i32 to index
    %c0_41 = arith.constant 0 : index
    %c0_42 = arith.constant 0 : index
    %91 = vector.load %arg7[%90, %c0_41, %c0_42] : memref<8x8x512xf32, #tpu.memory_space<vmem>>, vector<1x8x512xf32>
    %92 = vector.shape_cast %91 : vector<1x8x512xf32> to vector<8x512xf32>
    %93 = vector.shape_cast %88 : vector<8x512xf32> to vector<1x8x512xf32>
    tpu.vector_store %arg7[%90, %c0_41, %c0_42], %93 {strides = array<i32>} : memref<8x8x512xf32, #tpu.memory_space<vmem>>, vector<1x8x512xf32>,
    %c3_i32 = arith.constant 3 : i32
    %94 = arith.index_cast %c3_i32 : i32 to index
    %c0_43 = arith.constant 0 : index
    %c0_44 = arith.constant 0 : index
    %95 = vector.load %arg7[%94, %c0_43, %c0_44] : memref<8x8x512xf32, #tpu.memory_space<vmem>>, vector<1x8x512xf32>
    %96 = vector.shape_cast %95 : vector<1x8x512xf32> to vector<8x512xf32>
    %c7_i32_45 = arith.constant 7 : i32
    %97 = arith.subi %c7_i32_45, %c3_i32 : i32
    %98 = arith.index_cast %97 : i32 to index
    %c0_46 = arith.constant 0 : index
    %c0_47 = arith.constant 0 : index
    %99 = vector.load %arg7[%98, %c0_46, %c0_47] : memref<8x8x512xf32, #tpu.memory_space<vmem>>, vector<1x8x512xf32>
    %100 = vector.shape_cast %99 : vector<1x8x512xf32> to vector<8x512xf32>
    %101 = vector.shape_cast %27 : vector<1x512xi1> to vector<1x512xi1>
    %102 = vector.broadcast %101 : vector<1x512xi1> to vector<8x512xi1>
    %103 = arith.select %102, %96, %100 : vector<8x512xi1>, vector<8x512xf32>
    %104 = arith.index_cast %c3_i32 : i32 to index
    %c0_48 = arith.constant 0 : index
    %c0_49 = arith.constant 0 : index
    %105 = vector.load %arg7[%104, %c0_48, %c0_49] : memref<8x8x512xf32, #tpu.memory_space<vmem>>, vector<1x8x512xf32>
    %106 = vector.shape_cast %105 : vector<1x8x512xf32> to vector<8x512xf32>
    %107 = vector.shape_cast %103 : vector<8x512xf32> to vector<1x8x512xf32>
    tpu.vector_store %arg7[%104, %c0_48, %c0_49], %107 {strides = array<i32>} : memref<8x8x512xf32, #tpu.memory_space<vmem>>, vector<1x8x512xf32>,
    %108 = vector.shape_cast %27 : vector<1x512xi1> to vector<1x512xi1>
    %109 = vector.broadcast %108 : vector<1x512xi1> to vector<8x512xi1>
    %110 = arith.select %109, %100, %96 : vector<8x512xi1>, vector<8x512xf32>
    %c7_i32_50 = arith.constant 7 : i32
    %111 = arith.subi %c7_i32_50, %c3_i32 : i32
    %112 = arith.index_cast %111 : i32 to index
    %c0_51 = arith.constant 0 : index
    %c0_52 = arith.constant 0 : index
    %113 = vector.load %arg7[%112, %c0_51, %c0_52] : memref<8x8x512xf32, #tpu.memory_space<vmem>>, vector<1x8x512xf32>
    %114 = vector.shape_cast %113 : vector<1x8x512xf32> to vector<8x512xf32>
    %115 = vector.shape_cast %110 : vector<8x512xf32> to vector<1x8x512xf32>
    tpu.vector_store %arg7[%112, %c0_51, %c0_52], %115 {strides = array<i32>} : memref<8x8x512xf32, #tpu.memory_space<vmem>>, vector<1x8x512xf32>,
    %c4_i32 = arith.constant 4 : i32
    %c0_53 = arith.constant 0 : index
    %c0_54 = arith.constant 0 : index
    %116 = vector.load %arg3[%c0_53, %c0_54] : memref<128x512xf32, #tpu.memory_space<vmem>>, vector<128x512xf32>
    %cst_55 = arith.constant 0.000000e+00 : f32
    %117 = vector.broadcast %cst_55 : f32 to vector<8x128xf32>
    %cst_56 = arith.constant 0.000000e+00 : f32
    %118 = vector.broadcast %cst_56 : f32 to vector<8x128xf32>
    %c0_i32_57 = arith.constant 0 : i32
    %119 = arith.index_cast %c0_i32_57 : i32 to index
    %c0_58 = arith.constant 0 : index
    %c0_59 = arith.constant 0 : index
    %120 = vector.load %arg7[%119, %c0_58, %c0_59] : memref<8x8x512xf32, #tpu.memory_space<vmem>>, vector<1x8x512xf32>
    %121 = vector.shape_cast %120 : vector<1x8x512xf32> to vector<8x512xf32>
    %cst_60 = arith.constant dense<0.000000e+00> : vector<8x512xf32>
    %122 = tpu.matmul %117, %116, %cst_60 {dimension_numbers = #tpu.dot_dimension_numbers<[1], [0], [0], [1], [0, 0, 1, 1], [], []>} : vector<8x128xf32>, vector<128x512xf32>, vector<8x512xf32> -> vector<8x512xf32>
    %123 = arith.addf %121, %122 : vector<8x512xf32>
    %124 = vector.extract_strided_slice %123 {offsets = [0, 0], sizes = [8, 128], strides = [1, 1]} : vector<8x512xf32> to vector<8x128xf32>
    %125 = arith.negf %124 : vector<8x128xf32>
    %126 = math.exp %125 : vector<8x128xf32>
    %cst_61 = arith.constant 1.000000e+00 : f32
    %127 = vector.broadcast %cst_61 : f32 to vector<8x128xf32>
    %128 = arith.addf %127, %126 : vector<8x128xf32>
    %129 = arith.divf %127, %128 : vector<8x128xf32>
    %130 = vector.extract_strided_slice %123 {offsets = [0, 128], sizes = [8, 128], strides = [1, 1]} : vector<8x512xf32> to vector<8x128xf32>
    %131 = arith.negf %130 : vector<8x128xf32>
    %132 = math.exp %131 : vector<8x128xf32>
    %cst_62 = arith.constant 1.000000e+00 : f32
    %133 = vector.broadcast %cst_62 : f32 to vector<8x128xf32>
    %134 = arith.addf %133, %132 : vector<8x128xf32>
    %135 = arith.divf %133, %134 : vector<8x128xf32>
    %136 = vector.extract_strided_slice %123 {offsets = [0, 256], sizes = [8, 128], strides = [1, 1]} : vector<8x512xf32> to vector<8x128xf32>
    %137 = math.tanh %136 : vector<8x128xf32>
    %138 = vector.extract_strided_slice %123 {offsets = [0, 384], sizes = [8, 128], strides = [1, 1]} : vector<8x512xf32> to vector<8x128xf32>
    %139 = arith.negf %138 : vector<8x128xf32>
    %140 = math.exp %139 : vector<8x128xf32>
    %cst_63 = arith.constant 1.000000e+00 : f32
    %141 = vector.broadcast %cst_63 : f32 to vector<8x128xf32>
    %142 = arith.addf %141, %140 : vector<8x128xf32>
    %143 = arith.divf %141, %142 : vector<8x128xf32>
    %144 = arith.mulf %135, %118 : vector<8x128xf32>
    %145 = arith.mulf %129, %137 : vector<8x128xf32>
    %146 = arith.addf %144, %145 : vector<8x128xf32>
    %147 = math.tanh %146 : vector<8x128xf32>
    %148 = arith.mulf %143, %147 : vector<8x128xf32>
    %c1_i32_64 = arith.constant 1 : i32
    %149 = arith.index_cast %c1_i32_64 : i32 to index
    %c0_65 = arith.constant 0 : index
    %c0_66 = arith.constant 0 : index
    %150 = vector.load %arg7[%149, %c0_65, %c0_66] : memref<8x8x512xf32, #tpu.memory_space<vmem>>, vector<1x8x512xf32>
    %151 = vector.shape_cast %150 : vector<1x8x512xf32> to vector<8x512xf32>
    %cst_67 = arith.constant dense<0.000000e+00> : vector<8x512xf32>
    %152 = tpu.matmul %148, %116, %cst_67 {dimension_numbers = #tpu.dot_dimension_numbers<[1], [0], [0], [1], [0, 0, 1, 1], [], []>} : vector<8x128xf32>, vector<128x512xf32>, vector<8x512xf32> -> vector<8x512xf32>
    %153 = arith.addf %151, %152 : vector<8x512xf32>
    %154 = vector.extract_strided_slice %153 {offsets = [0, 0], sizes = [8, 128], strides = [1, 1]} : vector<8x512xf32> to vector<8x128xf32>
    %155 = arith.negf %154 : vector<8x128xf32>
    %156 = math.exp %155 : vector<8x128xf32>
    %cst_68 = arith.constant 1.000000e+00 : f32
    %157 = vector.broadcast %cst_68 : f32 to vector<8x128xf32>
    %158 = arith.addf %157, %156 : vector<8x128xf32>
    %159 = arith.divf %157, %158 : vector<8x128xf32>
    %160 = vector.extract_strided_slice %153 {offsets = [0, 128], sizes = [8, 128], strides = [1, 1]} : vector<8x512xf32> to vector<8x128xf32>
    %161 = arith.negf %160 : vector<8x128xf32>
    %162 = math.exp %161 : vector<8x128xf32>
    %cst_69 = arith.constant 1.000000e+00 : f32
    %163 = vector.broadcast %cst_69 : f32 to vector<8x128xf32>
    %164 = arith.addf %163, %162 : vector<8x128xf32>
    %165 = arith.divf %163, %164 : vector<8x128xf32>
    %166 = vector.extract_strided_slice %153 {offsets = [0, 256], sizes = [8, 128], strides = [1, 1]} : vector<8x512xf32> to vector<8x128xf32>
    %167 = math.tanh %166 : vector<8x128xf32>
    %168 = vector.extract_strided_slice %153 {offsets = [0, 384], sizes = [8, 128], strides = [1, 1]} : vector<8x512xf32> to vector<8x128xf32>
    %169 = arith.negf %168 : vector<8x128xf32>
    %170 = math.exp %169 : vector<8x128xf32>
    %cst_70 = arith.constant 1.000000e+00 : f32
    %171 = vector.broadcast %cst_70 : f32 to vector<8x128xf32>
    %172 = arith.addf %171, %170 : vector<8x128xf32>
    %173 = arith.divf %171, %172 : vector<8x128xf32>
    %174 = arith.mulf %165, %146 : vector<8x128xf32>
    %175 = arith.mulf %159, %167 : vector<8x128xf32>
    %176 = arith.addf %174, %175 : vector<8x128xf32>
    %177 = math.tanh %176 : vector<8x128xf32>
    %178 = arith.mulf %173, %177 : vector<8x128xf32>
    %c2_i32_71 = arith.constant 2 : i32
    %179 = arith.index_cast %c2_i32_71 : i32 to index
    %c0_72 = arith.constant 0 : index
    %c0_73 = arith.constant 0 : index
    %180 = vector.load %arg7[%179, %c0_72, %c0_73] : memref<8x8x512xf32, #tpu.memory_space<vmem>>, vector<1x8x512xf32>
    %181 = vector.shape_cast %180 : vector<1x8x512xf32> to vector<8x512xf32>
    %cst_74 = arith.constant dense<0.000000e+00> : vector<8x512xf32>
    %182 = tpu.matmul %178, %116, %cst_74 {dimension_numbers = #tpu.dot_dimension_numbers<[1], [0], [0], [1], [0, 0, 1, 1], [], []>} : vector<8x128xf32>, vector<128x512xf32>, vector<8x512xf32> -> vector<8x512xf32>
    %183 = arith.addf %181, %182 : vector<8x512xf32>
    %184 = vector.extract_strided_slice %183 {offsets = [0, 0], sizes = [8, 128], strides = [1, 1]} : vector<8x512xf32> to vector<8x128xf32>
    %185 = arith.negf %184 : vector<8x128xf32>
    %186 = math.exp %185 : vector<8x128xf32>
    %cst_75 = arith.constant 1.000000e+00 : f32
    %187 = vector.broadcast %cst_75 : f32 to vector<8x128xf32>
    %188 = arith.addf %187, %186 : vector<8x128xf32>
    %189 = arith.divf %187, %188 : vector<8x128xf32>
    %190 = vector.extract_strided_slice %183 {offsets = [0, 128], sizes = [8, 128], strides = [1, 1]} : vector<8x512xf32> to vector<8x128xf32>
    %191 = arith.negf %190 : vector<8x128xf32>
    %192 = math.exp %191 : vector<8x128xf32>
    %cst_76 = arith.constant 1.000000e+00 : f32
    %193 = vector.broadcast %cst_76 : f32 to vector<8x128xf32>
    %194 = arith.addf %193, %192 : vector<8x128xf32>
    %195 = arith.divf %193, %194 : vector<8x128xf32>
    %196 = vector.extract_strided_slice %183 {offsets = [0, 256], sizes = [8, 128], strides = [1, 1]} : vector<8x512xf32> to vector<8x128xf32>
    %197 = math.tanh %196 : vector<8x128xf32>
    %198 = vector.extract_strided_slice %183 {offsets = [0, 384], sizes = [8, 128], strides = [1, 1]} : vector<8x512xf32> to vector<8x128xf32>
    %199 = arith.negf %198 : vector<8x128xf32>
    %200 = math.exp %199 : vector<8x128xf32>
    %cst_77 = arith.constant 1.000000e+00 : f32
    %201 = vector.broadcast %cst_77 : f32 to vector<8x128xf32>
    %202 = arith.addf %201, %200 : vector<8x128xf32>
    %203 = arith.divf %201, %202 : vector<8x128xf32>
    %204 = arith.mulf %195, %176 : vector<8x128xf32>
    %205 = arith.mulf %189, %197 : vector<8x128xf32>
    %206 = arith.addf %204, %205 : vector<8x128xf32>
    %207 = math.tanh %206 : vector<8x128xf32>
    %208 = arith.mulf %203, %207 : vector<8x128xf32>
    %c3_i32_78 = arith.constant 3 : i32
    %209 = arith.index_cast %c3_i32_78 : i32 to index
    %c0_79 = arith.constant 0 : index
    %c0_80 = arith.constant 0 : index
    %210 = vector.load %arg7[%209, %c0_79, %c0_80] : memref<8x8x512xf32, #tpu.memory_space<vmem>>, vector<1x8x512xf32>
    %211 = vector.shape_cast %210 : vector<1x8x512xf32> to vector<8x512xf32>
    %cst_81 = arith.constant dense<0.000000e+00> : vector<8x512xf32>
    %212 = tpu.matmul %208, %116, %cst_81 {dimension_numbers = #tpu.dot_dimension_numbers<[1], [0], [0], [1], [0, 0, 1, 1], [], []>} : vector<8x128xf32>, vector<128x512xf32>, vector<8x512xf32> -> vector<8x512xf32>
    %213 = arith.addf %211, %212 : vector<8x512xf32>
    %214 = vector.extract_strided_slice %213 {offsets = [0, 0], sizes = [8, 128], strides = [1, 1]} : vector<8x512xf32> to vector<8x128xf32>
    %215 = arith.negf %214 : vector<8x128xf32>
    %216 = math.exp %215 : vector<8x128xf32>
    %cst_82 = arith.constant 1.000000e+00 : f32
    %217 = vector.broadcast %cst_82 : f32 to vector<8x128xf32>
    %218 = arith.addf %217, %216 : vector<8x128xf32>
    %219 = arith.divf %217, %218 : vector<8x128xf32>
    %220 = vector.extract_strided_slice %213 {offsets = [0, 128], sizes = [8, 128], strides = [1, 1]} : vector<8x512xf32> to vector<8x128xf32>
    %221 = arith.negf %220 : vector<8x128xf32>
    %222 = math.exp %221 : vector<8x128xf32>
    %cst_83 = arith.constant 1.000000e+00 : f32
    %223 = vector.broadcast %cst_83 : f32 to vector<8x128xf32>
    %224 = arith.addf %223, %222 : vector<8x128xf32>
    %225 = arith.divf %223, %224 : vector<8x128xf32>
    %226 = vector.extract_strided_slice %213 {offsets = [0, 256], sizes = [8, 128], strides = [1, 1]} : vector<8x512xf32> to vector<8x128xf32>
    %227 = math.tanh %226 : vector<8x128xf32>
    %228 = vector.extract_strided_slice %213 {offsets = [0, 384], sizes = [8, 128], strides = [1, 1]} : vector<8x512xf32> to vector<8x128xf32>
    %229 = arith.negf %228 : vector<8x128xf32>
    %230 = math.exp %229 : vector<8x128xf32>
    %cst_84 = arith.constant 1.000000e+00 : f32
    %231 = vector.broadcast %cst_84 : f32 to vector<8x128xf32>
    %232 = arith.addf %231, %230 : vector<8x128xf32>
    %233 = arith.divf %231, %232 : vector<8x128xf32>
    %234 = arith.mulf %225, %206 : vector<8x128xf32>
    %235 = arith.mulf %219, %227 : vector<8x128xf32>
    %236 = arith.addf %234, %235 : vector<8x128xf32>
    %237 = math.tanh %236 : vector<8x128xf32>
    %238 = arith.mulf %233, %237 : vector<8x128xf32>
    %c4_i32_85 = arith.constant 4 : i32
    %239 = arith.index_cast %c4_i32_85 : i32 to index
    %c0_86 = arith.constant 0 : index
    %c0_87 = arith.constant 0 : index
    %240 = vector.load %arg7[%239, %c0_86, %c0_87] : memref<8x8x512xf32, #tpu.memory_space<vmem>>, vector<1x8x512xf32>
    %241 = vector.shape_cast %240 : vector<1x8x512xf32> to vector<8x512xf32>
    %cst_88 = arith.constant dense<0.000000e+00> : vector<8x512xf32>
    %242 = tpu.matmul %238, %116, %cst_88 {dimension_numbers = #tpu.dot_dimension_numbers<[1], [0], [0], [1], [0, 0, 1, 1], [], []>} : vector<8x128xf32>, vector<128x512xf32>, vector<8x512xf32> -> vector<8x512xf32>
    %243 = arith.addf %241, %242 : vector<8x512xf32>
    %244 = vector.extract_strided_slice %243 {offsets = [0, 0], sizes = [8, 128], strides = [1, 1]} : vector<8x512xf32> to vector<8x128xf32>
    %245 = arith.negf %244 : vector<8x128xf32>
    %246 = math.exp %245 : vector<8x128xf32>
    %cst_89 = arith.constant 1.000000e+00 : f32
    %247 = vector.broadcast %cst_89 : f32 to vector<8x128xf32>
    %248 = arith.addf %247, %246 : vector<8x128xf32>
    %249 = arith.divf %247, %248 : vector<8x128xf32>
    %250 = vector.extract_strided_slice %243 {offsets = [0, 128], sizes = [8, 128], strides = [1, 1]} : vector<8x512xf32> to vector<8x128xf32>
    %251 = arith.negf %250 : vector<8x128xf32>
    %252 = math.exp %251 : vector<8x128xf32>
    %cst_90 = arith.constant 1.000000e+00 : f32
    %253 = vector.broadcast %cst_90 : f32 to vector<8x128xf32>
    %254 = arith.addf %253, %252 : vector<8x128xf32>
    %255 = arith.divf %253, %254 : vector<8x128xf32>
    %256 = vector.extract_strided_slice %243 {offsets = [0, 256], sizes = [8, 128], strides = [1, 1]} : vector<8x512xf32> to vector<8x128xf32>
    %257 = math.tanh %256 : vector<8x128xf32>
    %258 = vector.extract_strided_slice %243 {offsets = [0, 384], sizes = [8, 128], strides = [1, 1]} : vector<8x512xf32> to vector<8x128xf32>
    %259 = arith.negf %258 : vector<8x128xf32>
    %260 = math.exp %259 : vector<8x128xf32>
    %cst_91 = arith.constant 1.000000e+00 : f32
    %261 = vector.broadcast %cst_91 : f32 to vector<8x128xf32>
    %262 = arith.addf %261, %260 : vector<8x128xf32>
    %263 = arith.divf %261, %262 : vector<8x128xf32>
    %264 = arith.mulf %255, %236 : vector<8x128xf32>
    %265 = arith.mulf %249, %257 : vector<8x128xf32>
    %266 = arith.addf %264, %265 : vector<8x128xf32>
    %267 = math.tanh %266 : vector<8x128xf32>
    %268 = arith.mulf %263, %267 : vector<8x128xf32>
    %c5_i32 = arith.constant 5 : i32
    %269 = arith.index_cast %c5_i32 : i32 to index
    %c0_92 = arith.constant 0 : index
    %c0_93 = arith.constant 0 : index
    %270 = vector.load %arg7[%269, %c0_92, %c0_93] : memref<8x8x512xf32, #tpu.memory_space<vmem>>, vector<1x8x512xf32>
    %271 = vector.shape_cast %270 : vector<1x8x512xf32> to vector<8x512xf32>
    %cst_94 = arith.constant dense<0.000000e+00> : vector<8x512xf32>
    %272 = tpu.matmul %268, %116, %cst_94 {dimension_numbers = #tpu.dot_dimension_numbers<[1], [0], [0], [1], [0, 0, 1, 1], [], []>} : vector<8x128xf32>, vector<128x512xf32>, vector<8x512xf32> -> vector<8x512xf32>
    %273 = arith.addf %271, %272 : vector<8x512xf32>
    %274 = vector.extract_strided_slice %273 {offsets = [0, 0], sizes = [8, 128], strides = [1, 1]} : vector<8x512xf32> to vector<8x128xf32>
    %275 = arith.negf %274 : vector<8x128xf32>
    %276 = math.exp %275 : vector<8x128xf32>
    %cst_95 = arith.constant 1.000000e+00 : f32
    %277 = vector.broadcast %cst_95 : f32 to vector<8x128xf32>
    %278 = arith.addf %277, %276 : vector<8x128xf32>
    %279 = arith.divf %277, %278 : vector<8x128xf32>
    %280 = vector.extract_strided_slice %273 {offsets = [0, 128], sizes = [8, 128], strides = [1, 1]} : vector<8x512xf32> to vector<8x128xf32>
    %281 = arith.negf %280 : vector<8x128xf32>
    %282 = math.exp %281 : vector<8x128xf32>
    %cst_96 = arith.constant 1.000000e+00 : f32
    %283 = vector.broadcast %cst_96 : f32 to vector<8x128xf32>
    %284 = arith.addf %283, %282 : vector<8x128xf32>
    %285 = arith.divf %283, %284 : vector<8x128xf32>
    %286 = vector.extract_strided_slice %273 {offsets = [0, 256], sizes = [8, 128], strides = [1, 1]} : vector<8x512xf32> to vector<8x128xf32>
    %287 = math.tanh %286 : vector<8x128xf32>
    %288 = vector.extract_strided_slice %273 {offsets = [0, 384], sizes = [8, 128], strides = [1, 1]} : vector<8x512xf32> to vector<8x128xf32>
    %289 = arith.negf %288 : vector<8x128xf32>
    %290 = math.exp %289 : vector<8x128xf32>
    %cst_97 = arith.constant 1.000000e+00 : f32
    %291 = vector.broadcast %cst_97 : f32 to vector<8x128xf32>
    %292 = arith.addf %291, %290 : vector<8x128xf32>
    %293 = arith.divf %291, %292 : vector<8x128xf32>
    %294 = arith.mulf %285, %266 : vector<8x128xf32>
    %295 = arith.mulf %279, %287 : vector<8x128xf32>
    %296 = arith.addf %294, %295 : vector<8x128xf32>
    %297 = math.tanh %296 : vector<8x128xf32>
    %298 = arith.mulf %293, %297 : vector<8x128xf32>
    %c6_i32 = arith.constant 6 : i32
    %299 = arith.index_cast %c6_i32 : i32 to index
    %c0_98 = arith.constant 0 : index
    %c0_99 = arith.constant 0 : index
    %300 = vector.load %arg7[%299, %c0_98, %c0_99] : memref<8x8x512xf32, #tpu.memory_space<vmem>>, vector<1x8x512xf32>
    %301 = vector.shape_cast %300 : vector<1x8x512xf32> to vector<8x512xf32>
    %cst_100 = arith.constant dense<0.000000e+00> : vector<8x512xf32>
    %302 = tpu.matmul %298, %116, %cst_100 {dimension_numbers = #tpu.dot_dimension_numbers<[1], [0], [0], [1], [0, 0, 1, 1], [], []>} : vector<8x128xf32>, vector<128x512xf32>, vector<8x512xf32> -> vector<8x512xf32>
    %303 = arith.addf %301, %302 : vector<8x512xf32>
    %304 = vector.extract_strided_slice %303 {offsets = [0, 0], sizes = [8, 128], strides = [1, 1]} : vector<8x512xf32> to vector<8x128xf32>
    %305 = arith.negf %304 : vector<8x128xf32>
    %306 = math.exp %305 : vector<8x128xf32>
    %cst_101 = arith.constant 1.000000e+00 : f32
    %307 = vector.broadcast %cst_101 : f32 to vector<8x128xf32>
    %308 = arith.addf %307, %306 : vector<8x128xf32>
    %309 = arith.divf %307, %308 : vector<8x128xf32>
    %310 = vector.extract_strided_slice %303 {offsets = [0, 128], sizes = [8, 128], strides = [1, 1]} : vector<8x512xf32> to vector<8x128xf32>
    %311 = arith.negf %310 : vector<8x128xf32>
    %312 = math.exp %311 : vector<8x128xf32>
    %cst_102 = arith.constant 1.000000e+00 : f32
    %313 = vector.broadcast %cst_102 : f32 to vector<8x128xf32>
    %314 = arith.addf %313, %312 : vector<8x128xf32>
    %315 = arith.divf %313, %314 : vector<8x128xf32>
    %316 = vector.extract_strided_slice %303 {offsets = [0, 256], sizes = [8, 128], strides = [1, 1]} : vector<8x512xf32> to vector<8x128xf32>
    %317 = math.tanh %316 : vector<8x128xf32>
    %318 = vector.extract_strided_slice %303 {offsets = [0, 384], sizes = [8, 128], strides = [1, 1]} : vector<8x512xf32> to vector<8x128xf32>
    %319 = arith.negf %318 : vector<8x128xf32>
    %320 = math.exp %319 : vector<8x128xf32>
    %cst_103 = arith.constant 1.000000e+00 : f32
    %321 = vector.broadcast %cst_103 : f32 to vector<8x128xf32>
    %322 = arith.addf %321, %320 : vector<8x128xf32>
    %323 = arith.divf %321, %322 : vector<8x128xf32>
    %324 = arith.mulf %315, %296 : vector<8x128xf32>
    %325 = arith.mulf %309, %317 : vector<8x128xf32>
    %326 = arith.addf %324, %325 : vector<8x128xf32>
    %327 = math.tanh %326 : vector<8x128xf32>
    %328 = arith.mulf %323, %327 : vector<8x128xf32>
    %c7_i32_104 = arith.constant 7 : i32
    %329 = arith.index_cast %c7_i32_104 : i32 to index
    %c0_105 = arith.constant 0 : index
    %c0_106 = arith.constant 0 : index
    %330 = vector.load %arg7[%329, %c0_105, %c0_106] : memref<8x8x512xf32, #tpu.memory_space<vmem>>, vector<1x8x512xf32>
    %331 = vector.shape_cast %330 : vector<1x8x512xf32> to vector<8x512xf32>
    %cst_107 = arith.constant dense<0.000000e+00> : vector<8x512xf32>
    %332 = tpu.matmul %328, %116, %cst_107 {dimension_numbers = #tpu.dot_dimension_numbers<[1], [0], [0], [1], [0, 0, 1, 1], [], []>} : vector<8x128xf32>, vector<128x512xf32>, vector<8x512xf32> -> vector<8x512xf32>
    %333 = arith.addf %331, %332 : vector<8x512xf32>
    %334 = vector.extract_strided_slice %333 {offsets = [0, 0], sizes = [8, 128], strides = [1, 1]} : vector<8x512xf32> to vector<8x128xf32>
    %335 = arith.negf %334 : vector<8x128xf32>
    %336 = math.exp %335 : vector<8x128xf32>
    %cst_108 = arith.constant 1.000000e+00 : f32
    %337 = vector.broadcast %cst_108 : f32 to vector<8x128xf32>
    %338 = arith.addf %337, %336 : vector<8x128xf32>
    %339 = arith.divf %337, %338 : vector<8x128xf32>
    %340 = vector.extract_strided_slice %333 {offsets = [0, 128], sizes = [8, 128], strides = [1, 1]} : vector<8x512xf32> to vector<8x128xf32>
    %341 = arith.negf %340 : vector<8x128xf32>
    %342 = math.exp %341 : vector<8x128xf32>
    %cst_109 = arith.constant 1.000000e+00 : f32
    %343 = vector.broadcast %cst_109 : f32 to vector<8x128xf32>
    %344 = arith.addf %343, %342 : vector<8x128xf32>
    %345 = arith.divf %343, %344 : vector<8x128xf32>
    %346 = vector.extract_strided_slice %333 {offsets = [0, 256], sizes = [8, 128], strides = [1, 1]} : vector<8x512xf32> to vector<8x128xf32>
    %347 = math.tanh %346 : vector<8x128xf32>
    %348 = vector.extract_strided_slice %333 {offsets = [0, 384], sizes = [8, 128], strides = [1, 1]} : vector<8x512xf32> to vector<8x128xf32>
    %349 = arith.negf %348 : vector<8x128xf32>
    %350 = math.exp %349 : vector<8x128xf32>
    %cst_110 = arith.constant 1.000000e+00 : f32
    %351 = vector.broadcast %cst_110 : f32 to vector<8x128xf32>
    %352 = arith.addf %351, %350 : vector<8x128xf32>
    %353 = arith.divf %351, %352 : vector<8x128xf32>
    %354 = arith.mulf %345, %326 : vector<8x128xf32>
    %355 = arith.mulf %339, %347 : vector<8x128xf32>
    %356 = arith.addf %354, %355 : vector<8x128xf32>
    %357 = math.tanh %356 : vector<8x128xf32>
    %358 = arith.mulf %353, %357 : vector<8x128xf32>
    %c8_i32 = arith.constant 8 : i32
    %c0_111 = arith.constant 0 : index
    %c0_112 = arith.constant 0 : index
    %359 = vector.load %arg4[%c0_111, %c0_112] : memref<128x128xf32, #tpu.memory_space<vmem>>, vector<128x128xf32>
    %cst_113 = arith.constant dense<0.000000e+00> : vector<8x128xf32>
    %360 = tpu.matmul %358, %359, %cst_113 {dimension_numbers = #tpu.dot_dimension_numbers<[1], [0], [0], [1], [0, 0, 1, 1], [], []>} : vector<8x128xf32>, vector<128x128xf32>, vector<8x128xf32> -> vector<8x128xf32>
    %c0_114 = arith.constant 0 : index
    %c0_115 = arith.constant 0 : index
    %361 = vector.load %arg5[%c0_114, %c0_115] : memref<1x128xf32, #tpu.memory_space<vmem>>, vector<1x128xf32>
    %362 = vector.broadcast %361 : vector<1x128xf32> to vector<8x128xf32>
    %363 = arith.addf %360, %362 : vector<8x128xf32>
    %c0_116 = arith.constant 0 : index
    %c0_117 = arith.constant 0 : index
    %364 = vector.load %arg6[%c0_116, %c0_117] : memref<8x128xf32, #tpu.memory_space<vmem>>, vector<8x128xf32>
    tpu.vector_store %arg6[%c0_116, %c0_117], %363 {strides = array<i32>} : memref<8x128xf32, #tpu.memory_space<vmem>>, vector<8x128xf32>,
    return
  }
}

</mosaic_0001>

<llo_original>
// kernel: _lambda_.2
$region0: #{_lambda_.2}
  #allocation0 [shape = 'u32[]', space=smem, size = 0x4, offset = 0x4, fixed_abs, tag = 'smem constant byte address 0x4 - core index']
  #allocation1 [shape = 'u32[144,128]{1,0:T(1,128)}', space=vmem, size = 0x12000, scoped, tag = 'internal scratch']
  #allocation2 [shape = 'f32[8,8,512]{2,1,0:T(8,128)}', space=vmem, size = 0x20000, scoped, tag = 'scratch operand']
  #allocation3 [shape = 'f32[8,8,128]{2,1,0:T(8,128)}', space=vmem, size = 0x8000, scoped, tag = 'scratch operand']
  %s0 = inlined_call_operand.vmem [shape: f32[8,8,128], index: 0, kind: input, shape index: {}]
  %s1 = inlined_call_operand.hbm [shape: f32[128,512], index: 1, kind: input, shape index: {}]
  %s2 = inlined_call_operand.vmem [shape: f32[1,512], index: 2, kind: input, shape index: {}]
  %s3 = inlined_call_operand.hbm [shape: f32[128,512], index: 3, kind: input, shape index: {}]
  %s4 = inlined_call_operand.vmem [shape: f32[8,8,128], index: 4, kind: output, shape index: {}]
  %s5 = sld [smem:[#allocation0]]
  $region34: #{_lambda_.2} parent=0
    _
  %s7 = ssub.s32 1, %s5
  %s8 = scalar_select 0, %s7, %s5
  $region1: #{_lambda_.2} parent=0
    #allocation4 [shape = 'u8[262144]{0}', space=vmem, size = 0x40000, scoped, tag = 'input window, operand 1, single buffered']
    #allocation5 [shape = 's32[1]{0}', space=sflag, size = 0x4, scoped, tag = 'scoped memory for _lambda_.2']
    #allocation6 [shape = 'u8[262144]{0}', space=vmem, size = 0x40000, scoped, tag = 'input window, operand 3, single buffered']
    #allocation7 [shape = 's32[1]{0}', space=sflag, size = 0x4, scoped, tag = 'scoped memory for _lambda_.2']
    %9 = vsyncpa [#allocation5], 0
    %10 = vsyncpa [#allocation7], 0
    // Predicated region
    $region2: #{_lambda_.2} parent=1 // pred_check
      _
    $region3: #{_lambda_.2} parent=1 // pred_check_branch
      %12 = sbr.rel (0) target = $region5
    $region4: #{_lambda_.2} parent=1 // pred_region
      _
    $region5: #{_lambda_.2} parent=1 // pred_fallthru
      _
    // Predicated region
    $region6: #{_lambda_.2} parent=1 // pred_check
      _
    $region7: #{_lambda_.2} parent=1 // pred_check_branch
      %14 = sbr.rel (0) target = $region9
    $region8: #{_lambda_.2} parent=1 // pred_region
      %s16 = ssub.s32 8192, 8192
      %17 = vsyncadd [#allocation5], %s16
      %s18 = sshll.u32 [#allocation4], 4
      %s19 = int_to_ptr.vmem [resolvable:$true] %s18
      %24 = dma.hbm_to_vmem [thread:$0]  %s1, 8192, %s19, [#allocation5], 512, 512, 32
    $region9: #{_lambda_.2} parent=1 // pred_fallthru
      _
    // Predicated region
    $region10: #{_lambda_.2} parent=1 // pred_check
      _
    $region11: #{_lambda_.2} parent=1 // pred_check_branch
      %26 = sbr.rel (0) target = $region13
    $region12: #{_lambda_.2} parent=1 // pred_region
      _
    $region13: #{_lambda_.2} parent=1 // pred_fallthru
      _
    // Predicated region
    $region14: #{_lambda_.2} parent=1 // pred_check
      _
    $region15: #{_lambda_.2} parent=1 // pred_check_branch
      %28 = sbr.rel (0) target = $region17
    $region16: #{_lambda_.2} parent=1 // pred_region
      %s30 = ssub.s32 8192, 8192
      %31 = vsyncadd [#allocation7], %s30
      %s32 = sshll.u32 [#allocation6], 4
      %s33 = int_to_ptr.vmem [resolvable:$true] %s32
      %38 = dma.hbm_to_vmem [thread:$0]  %s3, 8192, %s33, [#allocation7], 512, 512, 32
    $region17: #{_lambda_.2} parent=1 // pred_fallthru
      _
    // Predicated region
    $region18: #{_lambda_.2} parent=1 // pred_check
      _
    $region19: #{_lambda_.2} parent=1 // pred_check_branch
      %40 = sbr.rel (0) target = $region21
    $region20: #{_lambda_.2} parent=1 // pred_region
      %41 = dma.done [#allocation5], 8192
    $region21: #{_lambda_.2} parent=1 // pred_fallthru
      _
    // Predicated region
    $region22: #{_lambda_.2} parent=1 // pred_check
      _
    $region23: #{_lambda_.2} parent=1 // pred_check_branch
      %43 = sbr.rel (0) target = $region25
    $region24: #{_lambda_.2} parent=1 // pred_region
      %44 = dma.done [#allocation7], 8192
    $region25: #{_lambda_.2} parent=1 // pred_fallthru
      _
    %v45 = vld [vmem:[%s0] sm:$0xff]
    %v46 = vld [vmem:[%s0 + $0x8] sm:$0xff]
    %v47 = vld [vmem:[%s0 + $0x10] sm:$0xff]
    %v48 = vld [vmem:[%s0 + $0x18] sm:$0xff]
    %v49 = vld [vmem:[%s0 + $0x20] sm:$0xff]
    %v50 = vld [vmem:[%s0 + $0x28] sm:$0xff]
    %v51 = vld [vmem:[%s0 + $0x30] sm:$0xff]
    %v52 = vld [vmem:[%s0 + $0x38] sm:$0xff]
    %v53 = vld [vmem:[#allocation4] sm:$0xff]
    %v54 = vld [vmem:[#allocation4 + $0x8] sm:$0xff]
    %v55 = vld [vmem:[#allocation4 + $0x10] sm:$0xff]
    %v56 = vld [vmem:[#allocation4 + $0x18] sm:$0xff]
    %v57 = vld [vmem:[#allocation4 + $0x20] sm:$0xff]
    %v58 = vld [vmem:[#allocation4 + $0x28] sm:$0xff]
    %v59 = vld [vmem:[#allocation4 + $0x30] sm:$0xff]
    %v60 = vld [vmem:[#allocation4 + $0x38] sm:$0xff]
    %v61 = vld [vmem:[#allocation4 + $0x40] sm:$0xff]
    %v62 = vld [vmem:[#allocation4 + $0x48] sm:$0xff]
    %v63 = vld [vmem:[#allocation4 + $0x50] sm:$0xff]
    %v64 = vld [vmem:[#allocation4 + $0x58] sm:$0xff]
    %v65 = vld [vmem:[#allocation4 + $0x60] sm:$0xff]
    %v66 = vld [vmem:[#allocation4 + $0x68] sm:$0xff]
    %v67 = vld [vmem:[#allocation4 + $0x70] sm:$0xff]
    %v68 = vld [vmem:[#allocation4 + $0x78] sm:$0xff]
    %v69 = vld [vmem:[#allocation4 + $0x80] sm:$0xff]
    %v70 = vld [vmem:[#allocation4 + $0x88] sm:$0xff]
    %v71 = vld [vmem:[#allocation4 + $0x90] sm:$0xff]
    %v72 = vld [vmem:[#allocation4 + $0x98] sm:$0xff]
    %v73 = vld [vmem:[#allocation4 + $0xa0] sm:$0xff]
    %v74 = vld [vmem:[#allocation4 + $0xa8] sm:$0xff]
    %v75 = vld [vmem:[#allocation4 + $0xb0] sm:$0xff]
    %v76 = vld [vmem:[#allocation4 + $0xb8] sm:$0xff]
    %v77 = vld [vmem:[#allocation4 + $0xc0] sm:$0xff]
    %v78 = vld [vmem:[#allocation4 + $0xc8] sm:$0xff]
    %v79 = vld [vmem:[#allocation4 + $0xd0] sm:$0xff]
    %v80 = vld [vmem:[#allocation4 + $0xd8] sm:$0xff]
    %v81 = vld [vmem:[#allocation4 + $0xe0] sm:$0xff]
    %v82 = vld [vmem:[#allocation4 + $0xe8] sm:$0xff]
    %v83 = vld [vmem:[#allocation4 + $0xf0] sm:$0xff]
    %v84 = vld [vmem:[#allocation4 + $0xf8] sm:$0xff]
    %v85 = vld [vmem:[#allocation4 + $0x100] sm:$0xff]
    %v86 = vld [vmem:[#allocation4 + $0x108] sm:$0xff]
    %v87 = vld [vmem:[#allocation4 + $0x110] sm:$0xff]
    %v88 = vld [vmem:[#allocation4 + $0x118] sm:$0xff]
    %v89 = vld [vmem:[#allocation4 + $0x120] sm:$0xff]
    %v90 = vld [vmem:[#allocation4 + $0x128] sm:$0xff]
    %v91 = vld [vmem:[#allocation4 + $0x130] sm:$0xff]
    %v92 = vld [vmem:[#allocation4 + $0x138] sm:$0xff]
    %v93 = vld [vmem:[#allocation4 + $0x140] sm:$0xff]
    %v94 = vld [vmem:[#allocation4 + $0x148] sm:$0xff]
    %v95 = vld [vmem:[#allocation4 + $0x150] sm:$0xff]
    %v96 = vld [vmem:[#allocation4 + $0x158] sm:$0xff]
    %v97 = vld [vmem:[#allocation4 + $0x160] sm:$0xff]
    %v98 = vld [vmem:[#allocation4 + $0x168] sm:$0xff]
    %v99 = vld [vmem:[#allocation4 + $0x170] sm:$0xff]
    %v100 = vld [vmem:[#allocation4 + $0x178] sm:$0xff]
    %v101 = vld [vmem:[#allocation4 + $0x180] sm:$0xff]
    %v102 = vld [vmem:[#allocation4 + $0x188] sm:$0xff]
    %v103 = vld [vmem:[#allocation4 + $0x190] sm:$0xff]
    %v104 = vld [vmem:[#allocation4 + $0x198] sm:$0xff]
    %v105 = vld [vmem:[#allocation4 + $0x1a0] sm:$0xff]
    %v106 = vld [vmem:[#allocation4 + $0x1a8] sm:$0xff]
    %v107 = vld [vmem:[#allocation4 + $0x1b0] sm:$0xff]
    %v108 = vld [vmem:[#allocation4 + $0x1b8] sm:$0xff]
    %v109 = vld [vmem:[#allocation4 + $0x1c0] sm:$0xff]
    %v110 = vld [vmem:[#allocation4 + $0x1c8] sm:$0xff]
    %v111 = vld [vmem:[#allocation4 + $0x1d0] sm:$0xff]
    %v112 = vld [vmem:[#allocation4 + $0x1d8] sm:$0xff]
    %v113 = vld [vmem:[#allocation4 + $0x1e0] sm:$0xff]
    %v114 = vld [vmem:[#allocation4 + $0x1e8] sm:$0xff]
    %v115 = vld [vmem:[#allocation4 + $0x1f0] sm:$0xff]
    %v116 = vld [vmem:[#allocation4 + $0x1f8] sm:$0xff]
    %v117 = vld [vmem:[%s2] sm:$0xf]
    %v119 = vlaneseq
    %v120 = vshrl.u32 %v119, 7
    %v121 = vsub.s32 0, %v120
    %v122 = vrot.slane %v117, %v121
    %v123 = vlaneseq
    %v124 = vshrl.u32 %v123, 7
    %v125 = vsub.s32 1, %v124
    %v126 = vrot.slane %v117, %v125
    %v127 = vlaneseq
    %v128 = vshrl.u32 %v127, 7
    %v129 = vsub.s32 2, %v128
    %v130 = vrot.slane %v117, %v129
    %v131 = vlaneseq
    %v132 = vshrl.u32 %v131, 7
    %v133 = vsub.s32 3, %v132
    %v134 = vrot.slane %v117, %v133
    %139 = vmatprep.subr.mxu0 %v54
    %140 = vmatpush1.msra.mxu0 %v53
    %141 = vmatprep.subr.mxu0 %v58
    %142 = vmatpush1.msra.mxu0 %v57
    %143 = vmatprep.subr.mxu0 %v62
    %144 = vmatpush1.msra.mxu0 %v61
    %145 = vmatprep.subr.mxu0 %v66
    %146 = vmatpush1.msra.mxu0 %v65
    %147 = vmatprep.subr.mxu0 %v70
    %148 = vmatpush1.msra.mxu0 %v69
    %149 = vmatprep.subr.mxu0 %v74
    %150 = vmatpush1.msra.mxu0 %v73
    %151 = vmatprep.subr.mxu0 %v78
    %152 = vmatpush1.msra.mxu0 %v77
    %153 = vmatprep.subr.mxu0 %v82
    %154 = vmatpush1.msra.mxu0 %v81
    %155 = vmatprep.subr.mxu0 %v86
    %156 = vmatpush1.msra.mxu0 %v85
    %157 = vmatprep.subr.mxu0 %v90
    %158 = vmatpush1.msra.mxu0 %v89
    %159 = vmatprep.subr.mxu0 %v94
    %160 = vmatpush1.msra.mxu0 %v93
    %161 = vmatprep.subr.mxu0 %v98
    %162 = vmatpush1.msra.mxu0 %v97
    %163 = vmatprep.subr.mxu0 %v102
    %164 = vmatpush1.msra.mxu0 %v101
    %165 = vmatprep.subr.mxu0 %v106
    %166 = vmatpush1.msra.mxu0 %v105
    %167 = vmatprep.subr.mxu0 %v110
    %168 = vmatpush1.msra.mxu0 %v109
    %169 = vmatprep.subr.mxu0 %v114
    %170 = vmatpush1.msra.mxu0 %v113
    %171 = vmatprep.subr.mxu0 0.0
    %172 = vmatpush1.msra.mxu0 0.0
    %173 = vmatprep.subr.mxu0 0.0
    %174 = vmatpush1.msra.mxu0 0.0
    %175 = vmatprep.subr.mxu0 0.0
    %176 = vmatpush1.msra.mxu0 0.0
    %177 = vmatprep.subr.mxu0 0.0
    %178 = vmatpush1.msra.mxu0 0.0
    %179 = vmatprep.subr.mxu0 0.0
    %180 = vmatpush1.msra.mxu0 0.0
    %181 = vmatprep.subr.mxu0 0.0
    %182 = vmatpush1.msra.mxu0 0.0
    %183 = vmatprep.subr.mxu0 0.0
    %184 = vmatpush1.msra.mxu0 0.0
    %185 = vmatprep.subr.mxu0 0.0
    %186 = vmatpush1.msra.mxu0 0.0
    %187 = vmatprep.subr.mxu0 0.0
    %188 = vmatpush1.msra.mxu0 0.0
    %189 = vmatprep.subr.mxu0 0.0
    %190 = vmatpush1.msra.mxu0 0.0
    %191 = vmatprep.subr.mxu0 0.0
    %192 = vmatpush1.msra.mxu0 0.0
    %193 = vmatprep.subr.mxu0 0.0
    %194 = vmatpush1.msra.mxu0 0.0
    %195 = vmatprep.subr.mxu0 0.0
    %196 = vmatpush1.msra.mxu0 0.0
    %197 = vmatprep.subr.mxu0 0.0
    %198 = vmatpush1.msra.mxu0 0.0
    %199 = vmatprep.subr.mxu0 0.0
    %200 = vmatpush1.msra.mxu0 0.0
    %201 = vmatprep.subr.mxu0 0.0
    %202 = vmatpush1.msra.mxu0 0.0
    %203 = vmatprep.mubr.f32.mxu0 0.0
    %204 = vmatmul.mubr.f32.gmra.mrb[0].mxu0 %v45
    %v205 = vpop.f32.mrb[0].mxu0
    %v206 = vadd.f32 %v122, %v205
    %v207 = vpop.f32.mrb[0].mxu0
    %v208 = vadd.f32 %v126, %v207
    %209 = vmatprep.mubr.f32.mxu0 0.0
    %210 = vmatmul.mubr.f32.gmra.mrb[0].mxu0 %v46
    %v211 = vpop.f32.mrb[0].mxu0
    %v212 = vadd.f32 %v122, %v211
    %v213 = vpop.f32.mrb[0].mxu0
    %v214 = vadd.f32 %v126, %v213
    %215 = vmatprep.mubr.f32.mxu0 0.0
    %216 = vmatmul.mubr.f32.gmra.mrb[0].mxu0 %v47
    %v217 = vpop.f32.mrb[0].mxu0
    %v218 = vadd.f32 %v122, %v217
    %v219 = vpop.f32.mrb[0].mxu0
    %v220 = vadd.f32 %v126, %v219
    %221 = vmatprep.mubr.f32.mxu0 0.0
    %222 = vmatmul.mubr.f32.gmra.mrb[0].mxu0 %v48
    %v223 = vpop.f32.mrb[0].mxu0
    %v224 = vadd.f32 %v122, %v223
    %v225 = vpop.f32.mrb[0].mxu0
    %v226 = vadd.f32 %v126, %v225
    %227 = vmatprep.mubr.f32.mxu0 0.0
    %228 = vmatmul.mubr.f32.gmra.mrb[0].mxu0 %v49
    %v229 = vpop.f32.mrb[0].mxu0
    %v230 = vadd.f32 %v122, %v229
    %v231 = vpop.f32.mrb[0].mxu0
    %v232 = vadd.f32 %v126, %v231
    %233 = vmatprep.mubr.f32.mxu0 0.0
    %234 = vmatmul.mubr.f32.gmra.mrb[0].mxu0 %v50
    %v235 = vpop.f32.mrb[0].mxu0
    %v236 = vadd.f32 %v122, %v235
    %v237 = vpop.f32.mrb[0].mxu0
    %v238 = vadd.f32 %v126, %v237
    %239 = vmatprep.mubr.f32.mxu0 0.0
    %240 = vmatmul.mubr.f32.gmra.mrb[0].mxu0 %v51
    %v241 = vpop.f32.mrb[0].mxu0
    %v242 = vadd.f32 %v122, %v241
    %v243 = vpop.f32.mrb[0].mxu0
    %v244 = vadd.f32 %v126, %v243
    %245 = vmatprep.mubr.f32.mxu0 0.0
    %246 = vmatmul.mubr.f32.gmra.mrb[0].mxu0 %v52
    %v247 = vpop.f32.mrb[0].mxu0
    %v248 = vadd.f32 %v122, %v247
    %v249 = vpop.f32.mrb[0].mxu0
    %v250 = vadd.f32 %v126, %v249
    %251 = vdwg.mxu0
    %252 = vmatprep.subr.mxu0 %v56
    %253 = vmatpush1.msra.mxu0 %v55
    %254 = vmatprep.subr.mxu0 %v60
    %255 = vmatpush1.msra.mxu0 %v59
    %256 = vmatprep.subr.mxu0 %v64
    %257 = vmatpush1.msra.mxu0 %v63
    %258 = vmatprep.subr.mxu0 %v68
    %259 = vmatpush1.msra.mxu0 %v67
    %260 = vmatprep.subr.mxu0 %v72
    %261 = vmatpush1.msra.mxu0 %v71
    %262 = vmatprep.subr.mxu0 %v76
    %263 = vmatpush1.msra.mxu0 %v75
    %264 = vmatprep.subr.mxu0 %v80
    %265 = vmatpush1.msra.mxu0 %v79
    %266 = vmatprep.subr.mxu0 %v84
    %267 = vmatpush1.msra.mxu0 %v83
    %268 = vmatprep.subr.mxu0 %v88
    %269 = vmatpush1.msra.mxu0 %v87
    %270 = vmatprep.subr.mxu0 %v92
    %271 = vmatpush1.msra.mxu0 %v91
    %272 = vmatprep.subr.mxu0 %v96
    %273 = vmatpush1.msra.mxu0 %v95
    %274 = vmatprep.subr.mxu0 %v100
    %275 = vmatpush1.msra.mxu0 %v99
    %276 = vmatprep.subr.mxu0 %v104
    %277 = vmatpush1.msra.mxu0 %v103
    %278 = vmatprep.subr.mxu0 %v108
    %279 = vmatpush1.msra.mxu0 %v107
    %280 = vmatprep.subr.mxu0 %v112
    %281 = vmatpush1.msra.mxu0 %v111
    %282 = vmatprep.subr.mxu0 %v116
    %283 = vmatpush1.msra.mxu0 %v115
    %284 = vmatprep.subr.mxu0 0.0
    %285 = vmatpush1.msra.mxu0 0.0
    %286 = vmatprep.subr.mxu0 0.0
    %287 = vmatpush1.msra.mxu0 0.0
    %288 = vmatprep.subr.mxu0 0.0
    %289 = vmatpush1.msra.mxu0 0.0
    %290 = vmatprep.subr.mxu0 0.0
    %291 = vmatpush1.msra.mxu0 0.0
    %292 = vmatprep.subr.mxu0 0.0
    %293 = vmatpush1.msra.mxu0 0.0
    %294 = vmatprep.subr.mxu0 0.0
    %295 = vmatpush1.msra.mxu0 0.0
    %296 = vmatprep.subr.mxu0 0.0
    %297 = vmatpush1.msra.mxu0 0.0
    %298 = vmatprep.subr.mxu0 0.0
    %299 = vmatpush1.msra.mxu0 0.0
    %300 = vmatprep.subr.mxu0 0.0
    %301 = vmatpush1.msra.mxu0 0.0
    %302 = vmatprep.subr.mxu0 0.0
    %303 = vmatpush1.msra.mxu0 0.0
    %304 = vmatprep.subr.mxu0 0.0
    %305 = vmatpush1.msra.mxu0 0.0
    %306 = vmatprep.subr.mxu0 0.0
    %307 = vmatpush1.msra.mxu0 0.0
    %308 = vmatprep.subr.mxu0 0.0
    %309 = vmatpush1.msra.mxu0 0.0
    %310 = vmatprep.subr.mxu0 0.0
    %311 = vmatpush1.msra.mxu0 0.0
    %312 = vmatprep.subr.mxu0 0.0
    %313 = vmatpush1.msra.mxu0 0.0
    %314 = vmatprep.subr.mxu0 0.0
    %315 = vmatpush1.msra.mxu0 0.0
    %316 = vmatprep.mubr.f32.mxu0 0.0
    %317 = vmatmul.mubr.f32.gmra.mrb[0].mxu0 %v45
    %v318 = vpop.f32.mrb[0].mxu0
    %v319 = vadd.f32 %v130, %v318
    %v320 = vpop.f32.mrb[0].mxu0
    %v321 = vadd.f32 %v134, %v320
    %322 = vmatprep.mubr.f32.mxu0 0.0
    %323 = vmatmul.mubr.f32.gmra.mrb[0].mxu0 %v46
    %v324 = vpop.f32.mrb[0].mxu0
    %v325 = vadd.f32 %v130, %v324
    %v326 = vpop.f32.mrb[0].mxu0
    %v327 = vadd.f32 %v134, %v326
    %328 = vmatprep.mubr.f32.mxu0 0.0
    %329 = vmatmul.mubr.f32.gmra.mrb[0].mxu0 %v47
    %v330 = vpop.f32.mrb[0].mxu0
    %v331 = vadd.f32 %v130, %v330
    %v332 = vpop.f32.mrb[0].mxu0
    %v333 = vadd.f32 %v134, %v332
    %334 = vmatprep.mubr.f32.mxu0 0.0
    %335 = vmatmul.mubr.f32.gmra.mrb[0].mxu0 %v48
    %v336 = vpop.f32.mrb[0].mxu0
    %v337 = vadd.f32 %v130, %v336
    %v338 = vpop.f32.mrb[0].mxu0
    %v339 = vadd.f32 %v134, %v338
    %340 = vmatprep.mubr.f32.mxu0 0.0
    %341 = vmatmul.mubr.f32.gmra.mrb[0].mxu0 %v49
    %v342 = vpop.f32.mrb[0].mxu0
    %v343 = vadd.f32 %v130, %v342
    %v344 = vpop.f32.mrb[0].mxu0
    %v345 = vadd.f32 %v134, %v344
    %346 = vmatprep.mubr.f32.mxu0 0.0
    %347 = vmatmul.mubr.f32.gmra.mrb[0].mxu0 %v50
    %v348 = vpop.f32.mrb[0].mxu0
    %v349 = vadd.f32 %v130, %v348
    %v350 = vpop.f32.mrb[0].mxu0
    %v351 = vadd.f32 %v134, %v350
    %352 = vmatprep.mubr.f32.mxu0 0.0
    %353 = vmatmul.mubr.f32.gmra.mrb[0].mxu0 %v51
    %v354 = vpop.f32.mrb[0].mxu0
    %v355 = vadd.f32 %v130, %v354
    %v356 = vpop.f32.mrb[0].mxu0
    %v357 = vadd.f32 %v134, %v356
    %358 = vmatprep.mubr.f32.mxu0 0.0
    %359 = vmatmul.mubr.f32.gmra.mrb[0].mxu0 %v52
    %v360 = vpop.f32.mrb[0].mxu0
    %v361 = vadd.f32 %v130, %v360
    %v362 = vpop.f32.mrb[0].mxu0
    %v363 = vadd.f32 %v134, %v362
    %364 = vdwg.mxu0
    %365 = vst [vmem:[#allocation2] sm:$0xff] %v206
    %366 = vst [vmem:[#allocation2 + $0x8] sm:$0xff] %v208
    %367 = vst [vmem:[#allocation2 + $0x10] sm:$0xff] %v319
    %368 = vst [vmem:[#allocation2 + $0x18] sm:$0xff] %v321
    %369 = vst [vmem:[#allocation2 + $0x20] sm:$0xff] %v212
    %370 = vst [vmem:[#allocation2 + $0x28] sm:$0xff] %v214
    %371 = vst [vmem:[#allocation2 + $0x30] sm:$0xff] %v325
    %372 = vst [vmem:[#allocation2 + $0x38] sm:$0xff] %v327
    %373 = vst [vmem:[#allocation2 + $0x40] sm:$0xff] %v218
    %374 = vst [vmem:[#allocation2 + $0x48] sm:$0xff] %v220
    %375 = vst [vmem:[#allocation2 + $0x50] sm:$0xff] %v331
    %376 = vst [vmem:[#allocation2 + $0x58] sm:$0xff] %v333
    %377 = vst [vmem:[#allocation2 + $0x60] sm:$0xff] %v224
    %378 = vst [vmem:[#allocation2 + $0x68] sm:$0xff] %v226
    %379 = vst [vmem:[#allocation2 + $0x70] sm:$0xff] %v337
    %380 = vst [vmem:[#allocation2 + $0x78] sm:$0xff] %v339
    %381 = vst [vmem:[#allocation2 + $0x80] sm:$0xff] %v230
    %382 = vst [vmem:[#allocation2 + $0x88] sm:$0xff] %v232
    %383 = vst [vmem:[#allocation2 + $0x90] sm:$0xff] %v343
    %384 = vst [vmem:[#allocation2 + $0x98] sm:$0xff] %v345
    %385 = vst [vmem:[#allocation2 + $0xa0] sm:$0xff] %v236
    %386 = vst [vmem:[#allocation2 + $0xa8] sm:$0xff] %v238
    %387 = vst [vmem:[#allocation2 + $0xb0] sm:$0xff] %v349
    %388 = vst [vmem:[#allocation2 + $0xb8] sm:$0xff] %v351
    %389 = vst [vmem:[#allocation2 + $0xc0] sm:$0xff] %v242
    %390 = vst [vmem:[#allocation2 + $0xc8] sm:$0xff] %v244
    %391 = vst [vmem:[#allocation2 + $0xd0] sm:$0xff] %v355
    %392 = vst [vmem:[#allocation2 + $0xd8] sm:$0xff] %v357
    %393 = vst [vmem:[#allocation2 + $0xe0] sm:$0xff] %v248
    %394 = vst [vmem:[#allocation2 + $0xe8] sm:$0xff] %v250
    %395 = vst [vmem:[#allocation2 + $0xf0] sm:$0xff] %v361
    %396 = vst [vmem:[#allocation2 + $0xf8] sm:$0xff] %v363
    %v397 = vlaneseq
    %v398 = vand.u32 %v397, 127
    %v399 = vadd.s32 %v398, 128
    %v400 = vadd.s32 %v398, 256
    %v401 = vadd.s32 %v398, 384
    %vm402 = vcmp.lt.s32.totalorder %v398, 0
    %v403 = vsub.s32 0, %v398
    %v404 = vsel %vm402, %v403, %v398
    %v405 = vshrl.u32 %v404, 7
    %v406 = vand.u32 %v404, 127
    %v407 = vsub.s32 0, %v406
    %v408 = vsel %vm402, %v407, %v406
    %vm409 = vcmp.lt.s32.totalorder %v399, 0
    %v410 = vsub.s32 0, %v399
    %v411 = vsel %vm409, %v410, %v399
    %v412 = vshrl.u32 %v411, 7
    %v413 = vand.u32 %v411, 127
    %v414 = vsub.s32 0, %v413
    %v415 = vsel %vm409, %v414, %v413
    %vm416 = vcmp.lt.s32.totalorder %v400, 0
    %v417 = vsub.s32 0, %v400
    %v418 = vsel %vm416, %v417, %v400
    %v419 = vshrl.u32 %v418, 7
    %v420 = vand.u32 %v418, 127
    %v421 = vsub.s32 0, %v420
    %v422 = vsel %vm416, %v421, %v420
    %vm423 = vcmp.lt.s32.totalorder %v401, 0
    %v424 = vsub.s32 0, %v401
    %v425 = vsel %vm423, %v424, %v401
    %v426 = vshrl.u32 %v425, 7
    %v427 = vand.u32 %v425, 127
    %v428 = vsub.s32 0, %v427
    %v429 = vsel %vm423, %v428, %v427
    %vm430 = vcmp.ne.s32.totalorder %v408, 0
    %vm431 = vcmp.ne.s32.totalorder %v415, 0
    %vm432 = vcmp.ne.s32.totalorder %v422, 0
    %vm433 = vcmp.ne.s32.totalorder %v429, 0
    %vm434 = vcmp.lt.s32.totalorder %v408, 0
    %vm435 = vcmp.lt.s32.totalorder %v415, 0
    %vm436 = vcmp.lt.s32.totalorder %v422, 0
    %vm437 = vcmp.lt.s32.totalorder %v429, 0
    %vm438 = vmand %vm434, %vm430
    %vm439 = vmand %vm435, %vm431
    %vm440 = vmand %vm436, %vm432
    %vm441 = vmand %vm437, %vm433
    %v442 = vadd.s32 %v408, 128
    %v443 = vadd.s32 %v415, 128
    %v444 = vadd.s32 %v422, 128
    %v445 = vadd.s32 %v429, 128
    %v446 = vsel %vm438, %v442, %v408
    %v447 = vsel %vm439, %v443, %v415
    %v448 = vsel %vm440, %v444, %v422
    %v449 = vsel %vm441, %v445, %v429
    %vm450 = vcmp.lt.s32.totalorder %v446, 64
    %vm451 = vcmp.lt.s32.totalorder %v447, 64
    %vm452 = vcmp.lt.s32.totalorder %v448, 64
    %vm453 = vcmp.lt.s32.totalorder %v449, 64
    %v454 = vld [vmem:[#allocation2] sm:$0xff]
    %v455 = vld [vmem:[#allocation2 + $0x8] sm:$0xff]
    %v456 = vld [vmem:[#allocation2 + $0x10] sm:$0xff]
    %v457 = vld [vmem:[#allocation2 + $0x18] sm:$0xff]
    %s458 = scalar_lea.vmem [#allocation2], 224
    %v459 = vld [vmem:[%s458] sm:$0xff]
    %v460 = vld [vmem:[%s458 + $0x8] sm:$0xff]
    %v461 = vld [vmem:[%s458 + $0x10] sm:$0xff]
    %v462 = vld [vmem:[%s458 + $0x18] sm:$0xff]
    %v463 = vsel %vm450, 1, 0
    %v464 = vsel %vm451, 1, 0
    %v465 = vsel %vm452, 1, 0
    %v466 = vsel %vm453, 1, 0
    %vm467 = vcmp.eq.s32.totalorder %v463, 1
    %vm468 = vcmp.eq.s32.totalorder %v464, 1
    %vm469 = vcmp.eq.s32.totalorder %v465, 1
    %vm470 = vcmp.eq.s32.totalorder %v466, 1
    %v471 = vsel %vm467, %v454, %v459
    %v472 = vsel %vm468, %v455, %v460
    %v473 = vsel %vm469, %v456, %v461
    %v474 = vsel %vm470, %v457, %v462
    %475 = vst [vmem:[#allocation2] sm:$0xff] %v471
    %476 = vst [vmem:[#allocation2 + $0x8] sm:$0xff] %v472
    %477 = vst [vmem:[#allocation2 + $0x10] sm:$0xff] %v473
    %478 = vst [vmem:[#allocation2 + $0x18] sm:$0xff] %v474
    %v479 = vsel %vm467, %v459, %v454
    %v480 = vsel %vm468, %v460, %v455
    %v481 = vsel %vm469, %v461, %v456
    %v482 = vsel %vm470, %v462, %v457
    %483 = vst [vmem:[%s458] sm:$0xff] %v479
    %484 = vst [vmem:[%s458 + $0x8] sm:$0xff] %v480
    %485 = vst [vmem:[%s458 + $0x10] sm:$0xff] %v481
    %486 = vst [vmem:[%s458 + $0x18] sm:$0xff] %v482
    %s487 = scalar_lea.vmem [#allocation2], 32
    %v488 = vld [vmem:[%s487] sm:$0xff]
    %v489 = vld [vmem:[%s487 + $0x8] sm:$0xff]
    %v490 = vld [vmem:[%s487 + $0x10] sm:$0xff]
    %v491 = vld [vmem:[%s487 + $0x18] sm:$0xff]
    %s492 = scalar_lea.vmem [#allocation2], 192
    %v493 = vld [vmem:[%s492] sm:$0xff]
    %v494 = vld [vmem:[%s492 + $0x8] sm:$0xff]
    %v495 = vld [vmem:[%s492 + $0x10] sm:$0xff]
    %v496 = vld [vmem:[%s492 + $0x18] sm:$0xff]
    %v497 = vsel %vm467, %v488, %v493
    %v498 = vsel %vm468, %v489, %v494
    %v499 = vsel %vm469, %v490, %v495
    %v500 = vsel %vm470, %v491, %v496
    %501 = vst [vmem:[%s487] sm:$0xff] %v497
    %502 = vst [vmem:[%s487 + $0x8] sm:$0xff] %v498
    %503 = vst [vmem:[%s487 + $0x10] sm:$0xff] %v499
    %504 = vst [vmem:[%s487 + $0x18] sm:$0xff] %v500
    %v505 = vsel %vm467, %v493, %v488
    %v506 = vsel %vm468, %v494, %v489
    %v507 = vsel %vm469, %v495, %v490
    %v508 = vsel %vm470, %v496, %v491
    %509 = vst [vmem:[%s492] sm:$0xff] %v505
    %510 = vst [vmem:[%s492 + $0x8] sm:$0xff] %v506
    %511 = vst [vmem:[%s492 + $0x10] sm:$0xff] %v507
    %512 = vst [vmem:[%s492 + $0x18] sm:$0xff] %v508
    %s513 = scalar_lea.vmem [#allocation2], 64
    %v514 = vld [vmem:[%s513] sm:$0xff]
    %v515 = vld [vmem:[%s513 + $0x8] sm:$0xff]
    %v516 = vld [vmem:[%s513 + $0x10] sm:$0xff]
    %v517 = vld [vmem:[%s513 + $0x18] sm:$0xff]
    %s518 = scalar_lea.vmem [#allocation2], 160
    %v519 = vld [vmem:[%s518] sm:$0xff]
    %v520 = vld [vmem:[%s518 + $0x8] sm:$0xff]
    %v521 = vld [vmem:[%s518 + $0x10] sm:$0xff]
    %v522 = vld [vmem:[%s518 + $0x18] sm:$0xff]
    %v523 = vsel %vm467, %v514, %v519
    %v524 = vsel %vm468, %v515, %v520
    %v525 = vsel %vm469, %v516, %v521
    %v526 = vsel %vm470, %v517, %v522
    %527 = vst [vmem:[%s513] sm:$0xff] %v523
    %528 = vst [vmem:[%s513 + $0x8] sm:$0xff] %v524
    %529 = vst [vmem:[%s513 + $0x10] sm:$0xff] %v525
    %530 = vst [vmem:[%s513 + $0x18] sm:$0xff] %v526
    %v531 = vsel %vm467, %v519, %v514
    %v532 = vsel %vm468, %v520, %v515
    %v533 = vsel %vm469, %v521, %v516
    %v534 = vsel %vm470, %v522, %v517
    %535 = vst [vmem:[%s518] sm:$0xff] %v531
    %536 = vst [vmem:[%s518 + $0x8] sm:$0xff] %v532
    %537 = vst [vmem:[%s518 + $0x10] sm:$0xff] %v533
    %538 = vst [vmem:[%s518 + $0x18] sm:$0xff] %v534
    %s539 = scalar_lea.vmem [#allocation2], 96
    %v540 = vld [vmem:[%s539] sm:$0xff]
    %v541 = vld [vmem:[%s539 + $0x8] sm:$0xff]
    %v542 = vld [vmem:[%s539 + $0x10] sm:$0xff]
    %v543 = vld [vmem:[%s539 + $0x18] sm:$0xff]
    %s544 = scalar_lea.vmem [#allocation2], 128
    %v545 = vld [vmem:[%s544] sm:$0xff]
    %v546 = vld [vmem:[%s544 + $0x8] sm:$0xff]
    %v547 = vld [vmem:[%s544 + $0x10] sm:$0xff]
    %v548 = vld [vmem:[%s544 + $0x18] sm:$0xff]
    %v549 = vsel %vm467, %v540, %v545
    %v550 = vsel %vm468, %v541, %v546
    %v551 = vsel %vm469, %v542, %v547
    %v552 = vsel %vm470, %v543, %v548
    %553 = vst [vmem:[%s539] sm:$0xff] %v549
    %554 = vst [vmem:[%s539 + $0x8] sm:$0xff] %v550
    %555 = vst [vmem:[%s539 + $0x10] sm:$0xff] %v551
    %556 = vst [vmem:[%s539 + $0x18] sm:$0xff] %v552
    %v557 = vsel %vm467, %v545, %v540
    %v558 = vsel %vm468, %v546, %v541
    %v559 = vsel %vm469, %v547, %v542
    %v560 = vsel %vm470, %v548, %v543
    %561 = vst [vmem:[%s544] sm:$0xff] %v557
    %562 = vst [vmem:[%s544 + $0x8] sm:$0xff] %v558
    %563 = vst [vmem:[%s544 + $0x10] sm:$0xff] %v559
    %564 = vst [vmem:[%s544 + $0x18] sm:$0xff] %v560
    %v565 = vld [vmem:[#allocation6] sm:$0xff]
    %v566 = vld [vmem:[#allocation6 + $0x8] sm:$0xff]
    %v567 = vld [vmem:[#allocation6 + $0x10] sm:$0xff]
    %v568 = vld [vmem:[#allocation6 + $0x18] sm:$0xff]
    %v569 = vld [vmem:[#allocation6 + $0x20] sm:$0xff]
    %v570 = vld [vmem:[#allocation6 + $0x28] sm:$0xff]
    %v571 = vld [vmem:[#allocation6 + $0x30] sm:$0xff]
    %v572 = vld [vmem:[#allocation6 + $0x38] sm:$0xff]
    %v573 = vld [vmem:[#allocation6 + $0x40] sm:$0xff]
    %v574 = vld [vmem:[#allocation6 + $0x48] sm:$0xff]
    %v575 = vld [vmem:[#allocation6 + $0x50] sm:$0xff]
    %v576 = vld [vmem:[#allocation6 + $0x58] sm:$0xff]
    %v577 = vld [vmem:[#allocation6 + $0x60] sm:$0xff]
    %v578 = vld [vmem:[#allocation6 + $0x68] sm:$0xff]
    %v579 = vld [vmem:[#allocation6 + $0x70] sm:$0xff]
    %v580 = vld [vmem:[#allocation6 + $0x78] sm:$0xff]
    %v581 = vld [vmem:[#allocation6 + $0x80] sm:$0xff]
    %v582 = vld [vmem:[#allocation6 + $0x88] sm:$0xff]
    %v583 = vld [vmem:[#allocation6 + $0x90] sm:$0xff]
    %v584 = vld [vmem:[#allocation6 + $0x98] sm:$0xff]
    %v585 = vld [vmem:[#allocation6 + $0xa0] sm:$0xff]
    %v586 = vld [vmem:[#allocation6 + $0xa8] sm:$0xff]
    %v587 = vld [vmem:[#allocation6 + $0xb0] sm:$0xff]
    %v588 = vld [vmem:[#allocation6 + $0xb8] sm:$0xff]
    %v589 = vld [vmem:[#allocation6 + $0xc0] sm:$0xff]
    %v590 = vld [vmem:[#allocation6 + $0xc8] sm:$0xff]
    %v591 = vld [vmem:[#allocation6 + $0xd0] sm:$0xff]
    %v592 = vld [vmem:[#allocation6 + $0xd8] sm:$0xff]
    %v593 = vld [vmem:[#allocation6 + $0xe0] sm:$0xff]
    %v594 = vld [vmem:[#allocation6 + $0xe8] sm:$0xff]
    %v595 = vld [vmem:[#allocation6 + $0xf0] sm:$0xff]
    %v596 = vld [vmem:[#allocation6 + $0xf8] sm:$0xff]
    %v597 = vld [vmem:[#allocation6 + $0x100] sm:$0xff]
    %v598 = vld [vmem:[#allocation6 + $0x108] sm:$0xff]
    %v599 = vld [vmem:[#allocation6 + $0x110] sm:$0xff]
    %v600 = vld [vmem:[#allocation6 + $0x118] sm:$0xff]
    %v601 = vld [vmem:[#allocation6 + $0x120] sm:$0xff]
    %v602 = vld [vmem:[#allocation6 + $0x128] sm:$0xff]
    %v603 = vld [vmem:[#allocation6 + $0x130] sm:$0xff]
    %v604 = vld [vmem:[#allocation6 + $0x138] sm:$0xff]
    %v605 = vld [vmem:[#allocation6 + $0x140] sm:$0xff]
    %v606 = vld [vmem:[#allocation6 + $0x148] sm:$0xff]
    %v607 = vld [vmem:[#allocation6 + $0x150] sm:$0xff]
    %v608 = vld [vmem:[#allocation6 + $0x158] sm:$0xff]
    %v609 = vld [vmem:[#allocation6 + $0x160] sm:$0xff]
    %v610 = vld [vmem:[#allocation6 + $0x168] sm:$0xff]
    %v611 = vld [vmem:[#allocation6 + $0x170] sm:$0xff]
    %v612 = vld [vmem:[#allocation6 + $0x178] sm:$0xff]
    %v613 = vld [vmem:[#allocation6 + $0x180] sm:$0xff]
    %v614 = vld [vmem:[#allocation6 + $0x188] sm:$0xff]
    %v615 = vld [vmem:[#allocation6 + $0x190] sm:$0xff]
    %v616 = vld [vmem:[#allocation6 + $0x198] sm:$0xff]
    %v617 = vld [vmem:[#allocation6 + $0x1a0] sm:$0xff]
    %v618 = vld [vmem:[#allocation6 + $0x1a8] sm:$0xff]
    %v619 = vld [vmem:[#allocation6 + $0x1b0] sm:$0xff]
    %v620 = vld [vmem:[#allocation6 + $0x1b8] sm:$0xff]
    %v621 = vld [vmem:[#allocation6 + $0x1c0] sm:$0xff]
    %v622 = vld [vmem:[#allocation6 + $0x1c8] sm:$0xff]
    %v623 = vld [vmem:[#allocation6 + $0x1d0] sm:$0xff]
    %v624 = vld [vmem:[#allocation6 + $0x1d8] sm:$0xff]
    %v625 = vld [vmem:[#allocation6 + $0x1e0] sm:$0xff]
    %v626 = vld [vmem:[#allocation6 + $0x1e8] sm:$0xff]
    %v627 = vld [vmem:[#allocation6 + $0x1f0] sm:$0xff]
    %v628 = vld [vmem:[#allocation6 + $0x1f8] sm:$0xff]
    %v629 = vld [vmem:[#allocation2] sm:$0xff]
    %v630 = vld [vmem:[#allocation2 + $0x8] sm:$0xff]
    %v631 = vld [vmem:[#allocation2 + $0x10] sm:$0xff]
    %v632 = vld [vmem:[#allocation2 + $0x18] sm:$0xff]
    %633 = vmatprep.subr.mxu0 %v566
    %634 = vmatpush1.msra.mxu0 %v565
    %635 = vmatprep.subr.mxu0 %v570
    %636 = vmatpush1.msra.mxu0 %v569
    %637 = vmatprep.subr.mxu0 %v574
    %638 = vmatpush1.msra.mxu0 %v573
    %639 = vmatprep.subr.mxu0 %v578
    %640 = vmatpush1.msra.mxu0 %v577
    %641 = vmatprep.subr.mxu0 %v582
    %642 = vmatpush1.msra.mxu0 %v581
    %643 = vmatprep.subr.mxu0 %v586
    %644 = vmatpush1.msra.mxu0 %v585
    %645 = vmatprep.subr.mxu0 %v590
    %646 = vmatpush1.msra.mxu0 %v589
    %647 = vmatprep.subr.mxu0 %v594
    %648 = vmatpush1.msra.mxu0 %v593
    %649 = vmatprep.subr.mxu0 %v598
    %650 = vmatpush1.msra.mxu0 %v597
    %651 = vmatprep.subr.mxu0 %v602
    %652 = vmatpush1.msra.mxu0 %v601
    %653 = vmatprep.subr.mxu0 %v606
    %654 = vmatpush1.msra.mxu0 %v605
    %655 = vmatprep.subr.mxu0 %v610
    %656 = vmatpush1.msra.mxu0 %v609
    %657 = vmatprep.subr.mxu0 %v614
    %658 = vmatpush1.msra.mxu0 %v613
    %659 = vmatprep.subr.mxu0 %v618
    %660 = vmatpush1.msra.mxu0 %v617
    %661 = vmatprep.subr.mxu0 %v622
    %662 = vmatpush1.msra.mxu0 %v621
    %663 = vmatprep.subr.mxu0 %v626
    %664 = vmatpush1.msra.mxu0 %v625
    %665 = vmatprep.subr.mxu0 0.0
    %666 = vmatpush1.msra.mxu0 0.0
    %667 = vmatprep.subr.mxu0 0.0
    %668 = vmatpush1.msra.mxu0 0.0
    %669 = vmatprep.subr.mxu0 0.0
    %670 = vmatpush1.msra.mxu0 0.0
    %671 = vmatprep.subr.mxu0 0.0
    %672 = vmatpush1.msra.mxu0 0.0
    %673 = vmatprep.subr.mxu0 0.0
    %674 = vmatpush1.msra.mxu0 0.0
    %675 = vmatprep.subr.mxu0 0.0
    %676 = vmatpush1.msra.mxu0 0.0
    %677 = vmatprep.subr.mxu0 0.0
    %678 = vmatpush1.msra.mxu0 0.0
    %679 = vmatprep.subr.mxu0 0.0
    %680 = vmatpush1.msra.mxu0 0.0
    %681 = vmatprep.subr.mxu0 0.0
    %682 = vmatpush1.msra.mxu0 0.0
    %683 = vmatprep.subr.mxu0 0.0
    %684 = vmatpush1.msra.mxu0 0.0
    %685 = vmatprep.subr.mxu0 0.0
    %686 = vmatpush1.msra.mxu0 0.0
    %687 = vmatprep.subr.mxu0 0.0
    %688 = vmatpush1.msra.mxu0 0.0
    %689 = vmatprep.subr.mxu0 0.0
    %690 = vmatpush1.msra.mxu0 0.0
    %691 = vmatprep.subr.mxu0 0.0
    %692 = vmatpush1.msra.mxu0 0.0
    %693 = vmatprep.subr.mxu0 0.0
    %694 = vmatpush1.msra.mxu0 0.0
    %695 = vmatprep.subr.mxu0 0.0
    %696 = vmatpush1.msra.mxu0 0.0
    %697 = vmatprep.mubr.f32.mxu0 0.0
    %698 = vmatmul.mubr.f32.gmra.mrb[0].mxu0 0.0
    %v699 = vpop.f32.mrb[0].mxu0
    %v700 = vadd.f32 0.0, %v699
    %v701 = vpop.f32.mrb[0].mxu0
    %v702 = vadd.f32 0.0, %v701
    %703 = vdwg.mxu0
    %704 = vmatprep.subr.mxu0 %v568
    %705 = vmatpush1.msra.mxu0 %v567
    %706 = vmatprep.subr.mxu0 %v572
    %707 = vmatpush1.msra.mxu0 %v571
    %708 = vmatprep.subr.mxu0 %v576
    %709 = vmatpush1.msra.mxu0 %v575
    %710 = vmatprep.subr.mxu0 %v580
    %711 = vmatpush1.msra.mxu0 %v579
    %712 = vmatprep.subr.mxu0 %v584
    %713 = vmatpush1.msra.mxu0 %v583
    %714 = vmatprep.subr.mxu0 %v588
    %715 = vmatpush1.msra.mxu0 %v587
    %716 = vmatprep.subr.mxu0 %v592
    %717 = vmatpush1.msra.mxu0 %v591
    %718 = vmatprep.subr.mxu0 %v596
    %719 = vmatpush1.msra.mxu0 %v595
    %720 = vmatprep.subr.mxu0 %v600
    %721 = vmatpush1.msra.mxu0 %v599
    %722 = vmatprep.subr.mxu0 %v604
    %723 = vmatpush1.msra.mxu0 %v603
    %724 = vmatprep.subr.mxu0 %v608
    %725 = vmatpush1.msra.mxu0 %v607
    %726 = vmatprep.subr.mxu0 %v612
    %727 = vmatpush1.msra.mxu0 %v611
    %728 = vmatprep.subr.mxu0 %v616
    %729 = vmatpush1.msra.mxu0 %v615
    %730 = vmatprep.subr.mxu0 %v620
    %731 = vmatpush1.msra.mxu0 %v619
    %732 = vmatprep.subr.mxu0 %v624
    %733 = vmatpush1.msra.mxu0 %v623
    %734 = vmatprep.subr.mxu0 %v628
    %735 = vmatpush1.msra.mxu0 %v627
    %736 = vmatprep.subr.mxu0 0.0
    %737 = vmatpush1.msra.mxu0 0.0
    %738 = vmatprep.subr.mxu0 0.0
    %739 = vmatpush1.msra.mxu0 0.0
    %740 = vmatprep.subr.mxu0 0.0
    %741 = vmatpush1.msra.mxu0 0.0
    %742 = vmatprep.subr.mxu0 0.0
    %743 = vmatpush1.msra.mxu0 0.0
    %744 = vmatprep.subr.mxu0 0.0
    %745 = vmatpush1.msra.mxu0 0.0
    %746 = vmatprep.subr.mxu0 0.0
    %747 = vmatpush1.msra.mxu0 0.0
    %748 = vmatprep.subr.mxu0 0.0
    %749 = vmatpush1.msra.mxu0 0.0
    %750 = vmatprep.subr.mxu0 0.0
    %751 = vmatpush1.msra.mxu0 0.0
    %752 = vmatprep.subr.mxu0 0.0
    %753 = vmatpush1.msra.mxu0 0.0
    %754 = vmatprep.subr.mxu0 0.0
    %755 = vmatpush1.msra.mxu0 0.0
    %756 = vmatprep.subr.mxu0 0.0
    %757 = vmatpush1.msra.mxu0 0.0
    %758 = vmatprep.subr.mxu0 0.0
    %759 = vmatpush1.msra.mxu0 0.0
    %760 = vmatprep.subr.mxu0 0.0
    %761 = vmatpush1.msra.mxu0 0.0
    %762 = vmatprep.subr.mxu0 0.0
    %763 = vmatpush1.msra.mxu0 0.0
    %764 = vmatprep.subr.mxu0 0.0
    %765 = vmatpush1.msra.mxu0 0.0
    %766 = vmatprep.subr.mxu0 0.0
    %767 = vmatpush1.msra.mxu0 0.0
    %768 = vmatprep.mubr.f32.mxu0 0.0
    %769 = vmatmul.mubr.f32.gmra.mrb[0].mxu0 0.0
    %v770 = vpop.f32.mrb[0].mxu0
    %v771 = vadd.f32 0.0, %v770
    %v772 = vpop.f32.mrb[0].mxu0
    %v773 = vadd.f32 0.0, %v772
    %774 = vdwg.mxu0
    %v775 = vadd.f32 %v629, %v700
    %v776 = vadd.f32 %v630, %v702
    %v777 = vadd.f32 %v631, %v771
    %v778 = vadd.f32 %v632, %v773
    %v779 = vxor.u32 %v775, 2147483648
    %v780 = vmul.f32 %v779, 1.442695
    %v781 = vpow.pop %v780
    %v782 = vadd.f32 %v781, 1.0
    %v783 = vrcp.pop %v782
    %v784 = vmul.f32 1.0, %v783
    %v785 = vxor.u32 %v776, 2147483648
    %v786 = vmul.f32 %v785, 1.442695
    %v787 = vpow.pop %v786
    %v788 = vadd.f32 %v787, 1.0
    %v789 = vrcp.pop %v788
    %v790 = vmul.f32 1.0, %v789
    %v791 = vtanh.pop %v777
    %v792 = vxor.u32 %v778, 2147483648
    %v793 = vmul.f32 %v792, 1.442695
    %v794 = vpow.pop %v793
    %v795 = vadd.f32 %v794, 1.0
    %v796 = vrcp.pop %v795
    %v797 = vmul.f32 1.0, %v796
    %v798 = vmul.f32 %v790, 0.0
    %v799 = vmul.f32 %v784, %v791
    %v800 = vadd.f32 %v798, %v799
    %v801 = vtanh.pop %v800
    %v802 = vmul.f32 %v797, %v801
    %803 = vst [vmem:[#allocation3] sm:$0xff] %v802
    %v804 = vld [vmem:[%s487] sm:$0xff]
    %v805 = vld [vmem:[%s487 + $0x8] sm:$0xff]
    %v806 = vld [vmem:[%s487 + $0x10] sm:$0xff]
    %v807 = vld [vmem:[%s487 + $0x18] sm:$0xff]
    %808 = vmatprep.subr.mxu0 %v566
    %809 = vmatpush1.msra.mxu0 %v565
    %810 = vmatprep.subr.mxu0 %v570
    %811 = vmatpush1.msra.mxu0 %v569
    %812 = vmatprep.subr.mxu0 %v574
    %813 = vmatpush1.msra.mxu0 %v573
    %814 = vmatprep.subr.mxu0 %v578
    %815 = vmatpush1.msra.mxu0 %v577
    %816 = vmatprep.subr.mxu0 %v582
    %817 = vmatpush1.msra.mxu0 %v581
    %818 = vmatprep.subr.mxu0 %v586
    %819 = vmatpush1.msra.mxu0 %v585
    %820 = vmatprep.subr.mxu0 %v590
    %821 = vmatpush1.msra.mxu0 %v589
    %822 = vmatprep.subr.mxu0 %v594
    %823 = vmatpush1.msra.mxu0 %v593
    %824 = vmatprep.subr.mxu0 %v598
    %825 = vmatpush1.msra.mxu0 %v597
    %826 = vmatprep.subr.mxu0 %v602
    %827 = vmatpush1.msra.mxu0 %v601
    %828 = vmatprep.subr.mxu0 %v606
    %829 = vmatpush1.msra.mxu0 %v605
    %830 = vmatprep.subr.mxu0 %v610
    %831 = vmatpush1.msra.mxu0 %v609
    %832 = vmatprep.subr.mxu0 %v614
    %833 = vmatpush1.msra.mxu0 %v613
    %834 = vmatprep.subr.mxu0 %v618
    %835 = vmatpush1.msra.mxu0 %v617
    %836 = vmatprep.subr.mxu0 %v622
    %837 = vmatpush1.msra.mxu0 %v621
    %838 = vmatprep.subr.mxu0 %v626
    %839 = vmatpush1.msra.mxu0 %v625
    %840 = vmatprep.subr.mxu0 0.0
    %841 = vmatpush1.msra.mxu0 0.0
    %842 = vmatprep.subr.mxu0 0.0
    %843 = vmatpush1.msra.mxu0 0.0
    %844 = vmatprep.subr.mxu0 0.0
    %845 = vmatpush1.msra.mxu0 0.0
    %846 = vmatprep.subr.mxu0 0.0
    %847 = vmatpush1.msra.mxu0 0.0
    %848 = vmatprep.subr.mxu0 0.0
    %849 = vmatpush1.msra.mxu0 0.0
    %850 = vmatprep.subr.mxu0 0.0
    %851 = vmatpush1.msra.mxu0 0.0
    %852 = vmatprep.subr.mxu0 0.0
    %853 = vmatpush1.msra.mxu0 0.0
    %854 = vmatprep.subr.mxu0 0.0
    %855 = vmatpush1.msra.mxu0 0.0
    %856 = vmatprep.subr.mxu0 0.0
    %857 = vmatpush1.msra.mxu0 0.0
    %858 = vmatprep.subr.mxu0 0.0
    %859 = vmatpush1.msra.mxu0 0.0
    %860 = vmatprep.subr.mxu0 0.0
    %861 = vmatpush1.msra.mxu0 0.0
    %862 = vmatprep.subr.mxu0 0.0
    %863 = vmatpush1.msra.mxu0 0.0
    %864 = vmatprep.subr.mxu0 0.0
    %865 = vmatpush1.msra.mxu0 0.0
    %866 = vmatprep.subr.mxu0 0.0
    %867 = vmatpush1.msra.mxu0 0.0
    %868 = vmatprep.subr.mxu0 0.0
    %869 = vmatpush1.msra.mxu0 0.0
    %870 = vmatprep.subr.mxu0 0.0
    %871 = vmatpush1.msra.mxu0 0.0
    %872 = vmatprep.mubr.f32.mxu0 0.0
    %873 = vmatmul.mubr.f32.gmra.mrb[0].mxu0 %v802
    %v874 = vpop.f32.mrb[0].mxu0
    %v875 = vadd.f32 0.0, %v874
    %v876 = vpop.f32.mrb[0].mxu0
    %v877 = vadd.f32 0.0, %v876
    %878 = vdwg.mxu0
    %879 = vmatprep.subr.mxu0 %v568
    %880 = vmatpush1.msra.mxu0 %v567
    %881 = vmatprep.subr.mxu0 %v572
    %882 = vmatpush1.msra.mxu0 %v571
    %883 = vmatprep.subr.mxu0 %v576
    %884 = vmatpush1.msra.mxu0 %v575
    %885 = vmatprep.subr.mxu0 %v580
    %886 = vmatpush1.msra.mxu0 %v579
    %887 = vmatprep.subr.mxu0 %v584
    %888 = vmatpush1.msra.mxu0 %v583
    %889 = vmatprep.subr.mxu0 %v588
    %890 = vmatpush1.msra.mxu0 %v587
    %891 = vmatprep.subr.mxu0 %v592
    %892 = vmatpush1.msra.mxu0 %v591
    %893 = vmatprep.subr.mxu0 %v596
    %894 = vmatpush1.msra.mxu0 %v595
    %895 = vmatprep.subr.mxu0 %v600
    %896 = vmatpush1.msra.mxu0 %v599
    %897 = vmatprep.subr.mxu0 %v604
    %898 = vmatpush1.msra.mxu0 %v603
    %899 = vmatprep.subr.mxu0 %v608
    %900 = vmatpush1.msra.mxu0 %v607
    %901 = vmatprep.subr.mxu0 %v612
    %902 = vmatpush1.msra.mxu0 %v611
    %903 = vmatprep.subr.mxu0 %v616
    %904 = vmatpush1.msra.mxu0 %v615
    %905 = vmatprep.subr.mxu0 %v620
    %906 = vmatpush1.msra.mxu0 %v619
    %907 = vmatprep.subr.mxu0 %v624
    %908 = vmatpush1.msra.mxu0 %v623
    %909 = vmatprep.subr.mxu0 %v628
    %910 = vmatpush1.msra.mxu0 %v627
    %911 = vmatprep.subr.mxu0 0.0
    %912 = vmatpush1.msra.mxu0 0.0
    %913 = vmatprep.subr.mxu0 0.0
    %914 = vmatpush1.msra.mxu0 0.0
    %915 = vmatprep.subr.mxu0 0.0
    %916 = vmatpush1.msra.mxu0 0.0
    %917 = vmatprep.subr.mxu0 0.0
    %918 = vmatpush1.msra.mxu0 0.0
    %919 = vmatprep.subr.mxu0 0.0
    %920 = vmatpush1.msra.mxu0 0.0
    %921 = vmatprep.subr.mxu0 0.0
    %922 = vmatpush1.msra.mxu0 0.0
    %923 = vmatprep.subr.mxu0 0.0
    %924 = vmatpush1.msra.mxu0 0.0
    %925 = vmatprep.subr.mxu0 0.0
    %926 = vmatpush1.msra.mxu0 0.0
    %927 = vmatprep.subr.mxu0 0.0
    %928 = vmatpush1.msra.mxu0 0.0
    %929 = vmatprep.subr.mxu0 0.0
    %930 = vmatpush1.msra.mxu0 0.0
    %931 = vmatprep.subr.mxu0 0.0
    %932 = vmatpush1.msra.mxu0 0.0
    %933 = vmatprep.subr.mxu0 0.0
    %934 = vmatpush1.msra.mxu0 0.0
    %935 = vmatprep.subr.mxu0 0.0
    %936 = vmatpush1.msra.mxu0 0.0
    %937 = vmatprep.subr.mxu0 0.0
    %938 = vmatpush1.msra.mxu0 0.0
    %939 = vmatprep.subr.mxu0 0.0
    %940 = vmatpush1.msra.mxu0 0.0
    %941 = vmatprep.subr.mxu0 0.0
    %942 = vmatpush1.msra.mxu0 0.0
    %943 = vmatprep.mubr.f32.mxu0 0.0
    %944 = vmatmul.mubr.f32.gmra.mrb[0].mxu0 %v802
    %v945 = vpop.f32.mrb[0].mxu0
    %v946 = vadd.f32 0.0, %v945
    %v947 = vpop.f32.mrb[0].mxu0
    %v948 = vadd.f32 0.0, %v947
    %949 = vdwg.mxu0
    %v950 = vadd.f32 %v804, %v875
    %v951 = vadd.f32 %v805, %v877
    %v952 = vadd.f32 %v806, %v946
    %v953 = vadd.f32 %v807, %v948
    %v954 = vxor.u32 %v950, 2147483648
    %v955 = vmul.f32 %v954, 1.442695
    %v956 = vpow.pop %v955
    %v957 = vadd.f32 %v956, 1.0
    %v958 = vrcp.pop %v957
    %v959 = vmul.f32 1.0, %v958
    %v960 = vxor.u32 %v951, 2147483648
    %v961 = vmul.f32 %v960, 1.442695
    %v962 = vpow.pop %v961
    %v963 = vadd.f32 %v962, 1.0
    %v964 = vrcp.pop %v963
    %v965 = vmul.f32 1.0, %v964
    %v966 = vtanh.pop %v952
    %v967 = vxor.u32 %v953, 2147483648
    %v968 = vmul.f32 %v967, 1.442695
    %v969 = vpow.pop %v968
    %v970 = vadd.f32 %v969, 1.0
    %v971 = vrcp.pop %v970
    %v972 = vmul.f32 1.0, %v971
    %v973 = vmul.f32 %v965, %v800
    %v974 = vmul.f32 %v959, %v966
    %v975 = vadd.f32 %v973, %v974
    %v976 = vtanh.pop %v975
    %v977 = vmul.f32 %v972, %v976
    %s978 = scalar_lea.vmem [#allocation3], 8
    %979 = vst [vmem:[%s978] sm:$0xff] %v977
    %v980 = vld [vmem:[%s513] sm:$0xff]
    %v981 = vld [vmem:[%s513 + $0x8] sm:$0xff]
    %v982 = vld [vmem:[%s513 + $0x10] sm:$0xff]
    %v983 = vld [vmem:[%s513 + $0x18] sm:$0xff]
    %984 = vmatprep.subr.mxu0 %v566
    %985 = vmatpush1.msra.mxu0 %v565
    %986 = vmatprep.subr.mxu0 %v570
    %987 = vmatpush1.msra.mxu0 %v569
    %988 = vmatprep.subr.mxu0 %v574
    %989 = vmatpush1.msra.mxu0 %v573
    %990 = vmatprep.subr.mxu0 %v578
    %991 = vmatpush1.msra.mxu0 %v577
    %992 = vmatprep.subr.mxu0 %v582
    %993 = vmatpush1.msra.mxu0 %v581
    %994 = vmatprep.subr.mxu0 %v586
    %995 = vmatpush1.msra.mxu0 %v585
    %996 = vmatprep.subr.mxu0 %v590
    %997 = vmatpush1.msra.mxu0 %v589
    %998 = vmatprep.subr.mxu0 %v594
    %999 = vmatpush1.msra.mxu0 %v593
    %1000 = vmatprep.subr.mxu0 %v598
    %1001 = vmatpush1.msra.mxu0 %v597
    %1002 = vmatprep.subr.mxu0 %v602
    %1003 = vmatpush1.msra.mxu0 %v601
    %1004 = vmatprep.subr.mxu0 %v606
    %1005 = vmatpush1.msra.mxu0 %v605
    %1006 = vmatprep.subr.mxu0 %v610
    %1007 = vmatpush1.msra.mxu0 %v609
    %1008 = vmatprep.subr.mxu0 %v614
    %1009 = vmatpush1.msra.mxu0 %v613
    %1010 = vmatprep.subr.mxu0 %v618
    %1011 = vmatpush1.msra.mxu0 %v617
    %1012 = vmatprep.subr.mxu0 %v622
    %1013 = vmatpush1.msra.mxu0 %v621
    %1014 = vmatprep.subr.mxu0 %v626
    %1015 = vmatpush1.msra.mxu0 %v625
    %1016 = vmatprep.subr.mxu0 0.0
    %1017 = vmatpush1.msra.mxu0 0.0
    %1018 = vmatprep.subr.mxu0 0.0
    %1019 = vmatpush1.msra.mxu0 0.0
    %1020 = vmatprep.subr.mxu0 0.0
    %1021 = vmatpush1.msra.mxu0 0.0
    %1022 = vmatprep.subr.mxu0 0.0
    %1023 = vmatpush1.msra.mxu0 0.0
    %1024 = vmatprep.subr.mxu0 0.0
    %1025 = vmatpush1.msra.mxu0 0.0
    %1026 = vmatprep.subr.mxu0 0.0
    %1027 = vmatpush1.msra.mxu0 0.0
    %1028 = vmatprep.subr.mxu0 0.0
    %1029 = vmatpush1.msra.mxu0 0.0
    %1030 = vmatprep.subr.mxu0 0.0
    %1031 = vmatpush1.msra.mxu0 0.0
    %1032 = vmatprep.subr.mxu0 0.0
    %1033 = vmatpush1.msra.mxu0 0.0
    %1034 = vmatprep.subr.mxu0 0.0
    %1035 = vmatpush1.msra.mxu0 0.0
    %1036 = vmatprep.subr.mxu0 0.0
    %1037 = vmatpush1.msra.mxu0 0.0
    %1038 = vmatprep.subr.mxu0 0.0
    %1039 = vmatpush1.msra.mxu0 0.0
    %1040 = vmatprep.subr.mxu0 0.0
    %1041 = vmatpush1.msra.mxu0 0.0
    %1042 = vmatprep.subr.mxu0 0.0
    %1043 = vmatpush1.msra.mxu0 0.0
    %1044 = vmatprep.subr.mxu0 0.0
    %1045 = vmatpush1.msra.mxu0 0.0
    %1046 = vmatprep.subr.mxu0 0.0
    %1047 = vmatpush1.msra.mxu0 0.0
    %1048 = vmatprep.mubr.f32.mxu0 0.0
    %1049 = vmatmul.mubr.f32.gmra.mrb[0].mxu0 %v977
    %v1050 = vpop.f32.mrb[0].mxu0
    %v1051 = vadd.f32 0.0, %v1050
    %v1052 = vpop.f32.mrb[0].mxu0
    %v1053 = vadd.f32 0.0, %v1052
    %1054 = vdwg.mxu0
    %1055 = vmatprep.subr.mxu0 %v568
    %1056 = vmatpush1.msra.mxu0 %v567
    %1057 = vmatprep.subr.mxu0 %v572
    %1058 = vmatpush1.msra.mxu0 %v571
    %1059 = vmatprep.subr.mxu0 %v576
    %1060 = vmatpush1.msra.mxu0 %v575
    %1061 = vmatprep.subr.mxu0 %v580
    %1062 = vmatpush1.msra.mxu0 %v579
    %1063 = vmatprep.subr.mxu0 %v584
    %1064 = vmatpush1.msra.mxu0 %v583
    %1065 = vmatprep.subr.mxu0 %v588
    %1066 = vmatpush1.msra.mxu0 %v587
    %1067 = vmatprep.subr.mxu0 %v592
    %1068 = vmatpush1.msra.mxu0 %v591
    %1069 = vmatprep.subr.mxu0 %v596
    %1070 = vmatpush1.msra.mxu0 %v595
    %1071 = vmatprep.subr.mxu0 %v600
    %1072 = vmatpush1.msra.mxu0 %v599
    %1073 = vmatprep.subr.mxu0 %v604
    %1074 = vmatpush1.msra.mxu0 %v603
    %1075 = vmatprep.subr.mxu0 %v608
    %1076 = vmatpush1.msra.mxu0 %v607
    %1077 = vmatprep.subr.mxu0 %v612
    %1078 = vmatpush1.msra.mxu0 %v611
    %1079 = vmatprep.subr.mxu0 %v616
    %1080 = vmatpush1.msra.mxu0 %v615
    %1081 = vmatprep.subr.mxu0 %v620
    %1082 = vmatpush1.msra.mxu0 %v619
    %1083 = vmatprep.subr.mxu0 %v624
    %1084 = vmatpush1.msra.mxu0 %v623
    %1085 = vmatprep.subr.mxu0 %v628
    %1086 = vmatpush1.msra.mxu0 %v627
    %1087 = vmatprep.subr.mxu0 0.0
    %1088 = vmatpush1.msra.mxu0 0.0
    %1089 = vmatprep.subr.mxu0 0.0
    %1090 = vmatpush1.msra.mxu0 0.0
    %1091 = vmatprep.subr.mxu0 0.0
    %1092 = vmatpush1.msra.mxu0 0.0
    %1093 = vmatprep.subr.mxu0 0.0
    %1094 = vmatpush1.msra.mxu0 0.0
    %1095 = vmatprep.subr.mxu0 0.0
    %1096 = vmatpush1.msra.mxu0 0.0
    %1097 = vmatprep.subr.mxu0 0.0
    %1098 = vmatpush1.msra.mxu0 0.0
    %1099 = vmatprep.subr.mxu0 0.0
    %1100 = vmatpush1.msra.mxu0 0.0
    %1101 = vmatprep.subr.mxu0 0.0
    %1102 = vmatpush1.msra.mxu0 0.0
    %1103 = vmatprep.subr.mxu0 0.0
    %1104 = vmatpush1.msra.mxu0 0.0
    %1105 = vmatprep.subr.mxu0 0.0
    %1106 = vmatpush1.msra.mxu0 0.0
    %1107 = vmatprep.subr.mxu0 0.0
    %1108 = vmatpush1.msra.mxu0 0.0
    %1109 = vmatprep.subr.mxu0 0.0
    %1110 = vmatpush1.msra.mxu0 0.0
    %1111 = vmatprep.subr.mxu0 0.0
    %1112 = vmatpush1.msra.mxu0 0.0
    %1113 = vmatprep.subr.mxu0 0.0
    %1114 = vmatpush1.msra.mxu0 0.0
    %1115 = vmatprep.subr.mxu0 0.0
    %1116 = vmatpush1.msra.mxu0 0.0
    %1117 = vmatprep.subr.mxu0 0.0
    %1118 = vmatpush1.msra.mxu0 0.0
    %1119 = vmatprep.mubr.f32.mxu0 0.0
    %1120 = vmatmul.mubr.f32.gmra.mrb[0].mxu0 %v977
    %v1121 = vpop.f32.mrb[0].mxu0
    %v1122 = vadd.f32 0.0, %v1121
    %v1123 = vpop.f32.mrb[0].mxu0
    %v1124 = vadd.f32 0.0, %v1123
    %1125 = vdwg.mxu0
    %v1126 = vadd.f32 %v980, %v1051
    %v1127 = vadd.f32 %v981, %v1053
    %v1128 = vadd.f32 %v982, %v1122
    %v1129 = vadd.f32 %v983, %v1124
    %v1130 = vxor.u32 %v1126, 2147483648
    %v1131 = vmul.f32 %v1130, 1.442695
    %v1132 = vpow.pop %v1131
    %v1133 = vadd.f32 %v1132, 1.0
    %v1134 = vrcp.pop %v1133
    %v1135 = vmul.f32 1.0, %v1134
    %v1136 = vxor.u32 %v1127, 2147483648
    %v1137 = vmul.f32 %v1136, 1.442695
    %v1138 = vpow.pop %v1137
    %v1139 = vadd.f32 %v1138, 1.0
    %v1140 = vrcp.pop %v1139
    %v1141 = vmul.f32 1.0, %v1140
    %v1142 = vtanh.pop %v1128
    %v1143 = vxor.u32 %v1129, 2147483648
    %v1144 = vmul.f32 %v1143, 1.442695
    %v1145 = vpow.pop %v1144
    %v1146 = vadd.f32 %v1145, 1.0
    %v1147 = vrcp.pop %v1146
    %v1148 = vmul.f32 1.0, %v1147
    %v1149 = vmul.f32 %v1141, %v975
    %v1150 = vmul.f32 %v1135, %v1142
    %v1151 = vadd.f32 %v1149, %v1150
    %v1152 = vtanh.pop %v1151
    %v1153 = vmul.f32 %v1148, %v1152
    %s1154 = scalar_lea.vmem [#allocation3], 16
    %1155 = vst [vmem:[%s1154] sm:$0xff] %v1153
    %v1156 = vld [vmem:[%s539] sm:$0xff]
    %v1157 = vld [vmem:[%s539 + $0x8] sm:$0xff]
    %v1158 = vld [vmem:[%s539 + $0x10] sm:$0xff]
    %v1159 = vld [vmem:[%s539 + $0x18] sm:$0xff]
    %1160 = vmatprep.subr.mxu0 %v566
    %1161 = vmatpush1.msra.mxu0 %v565
    %1162 = vmatprep.subr.mxu0 %v570
    %1163 = vmatpush1.msra.mxu0 %v569
    %1164 = vmatprep.subr.mxu0 %v574
    %1165 = vmatpush1.msra.mxu0 %v573
    %1166 = vmatprep.subr.mxu0 %v578
    %1167 = vmatpush1.msra.mxu0 %v577
    %1168 = vmatprep.subr.mxu0 %v582
    %1169 = vmatpush1.msra.mxu0 %v581
    %1170 = vmatprep.subr.mxu0 %v586
    %1171 = vmatpush1.msra.mxu0 %v585
    %1172 = vmatprep.subr.mxu0 %v590
    %1173 = vmatpush1.msra.mxu0 %v589
    %1174 = vmatprep.subr.mxu0 %v594
    %1175 = vmatpush1.msra.mxu0 %v593
    %1176 = vmatprep.subr.mxu0 %v598
    %1177 = vmatpush1.msra.mxu0 %v597
    %1178 = vmatprep.subr.mxu0 %v602
    %1179 = vmatpush1.msra.mxu0 %v601
    %1180 = vmatprep.subr.mxu0 %v606
    %1181 = vmatpush1.msra.mxu0 %v605
    %1182 = vmatprep.subr.mxu0 %v610
    %1183 = vmatpush1.msra.mxu0 %v609
    %1184 = vmatprep.subr.mxu0 %v614
    %1185 = vmatpush1.msra.mxu0 %v613
    %1186 = vmatprep.subr.mxu0 %v618
    %1187 = vmatpush1.msra.mxu0 %v617
    %1188 = vmatprep.subr.mxu0 %v622
    %1189 = vmatpush1.msra.mxu0 %v621
    %1190 = vmatprep.subr.mxu0 %v626
    %1191 = vmatpush1.msra.mxu0 %v625
    %1192 = vmatprep.subr.mxu0 0.0
    %1193 = vmatpush1.msra.mxu0 0.0
    %1194 = vmatprep.subr.mxu0 0.0
    %1195 = vmatpush1.msra.mxu0 0.0
    %1196 = vmatprep.subr.mxu0 0.0
    %1197 = vmatpush1.msra.mxu0 0.0
    %1198 = vmatprep.subr.mxu0 0.0
    %1199 = vmatpush1.msra.mxu0 0.0
    %1200 = vmatprep.subr.mxu0 0.0
    %1201 = vmatpush1.msra.mxu0 0.0
    %1202 = vmatprep.subr.mxu0 0.0
    %1203 = vmatpush1.msra.mxu0 0.0
    %1204 = vmatprep.subr.mxu0 0.0
    %1205 = vmatpush1.msra.mxu0 0.0
    %1206 = vmatprep.subr.mxu0 0.0
    %1207 = vmatpush1.msra.mxu0 0.0
    %1208 = vmatprep.subr.mxu0 0.0
    %1209 = vmatpush1.msra.mxu0 0.0
    %1210 = vmatprep.subr.mxu0 0.0
    %1211 = vmatpush1.msra.mxu0 0.0
    %1212 = vmatprep.subr.mxu0 0.0
    %1213 = vmatpush1.msra.mxu0 0.0
    %1214 = vmatprep.subr.mxu0 0.0
    %1215 = vmatpush1.msra.mxu0 0.0
    %1216 = vmatprep.subr.mxu0 0.0
    %1217 = vmatpush1.msra.mxu0 0.0
    %1218 = vmatprep.subr.mxu0 0.0
    %1219 = vmatpush1.msra.mxu0 0.0
    %1220 = vmatprep.subr.mxu0 0.0
    %1221 = vmatpush1.msra.mxu0 0.0
    %1222 = vmatprep.subr.mxu0 0.0
    %1223 = vmatpush1.msra.mxu0 0.0
    %1224 = vmatprep.mubr.f32.mxu0 0.0
    %1225 = vmatmul.mubr.f32.gmra.mrb[0].mxu0 %v1153
    %v1226 = vpop.f32.mrb[0].mxu0
    %v1227 = vadd.f32 0.0, %v1226
    %v1228 = vpop.f32.mrb[0].mxu0
    %v1229 = vadd.f32 0.0, %v1228
    %1230 = vdwg.mxu0
    %1231 = vmatprep.subr.mxu0 %v568
    %1232 = vmatpush1.msra.mxu0 %v567
    %1233 = vmatprep.subr.mxu0 %v572
    %1234 = vmatpush1.msra.mxu0 %v571
    %1235 = vmatprep.subr.mxu0 %v576
    %1236 = vmatpush1.msra.mxu0 %v575
    %1237 = vmatprep.subr.mxu0 %v580
    %1238 = vmatpush1.msra.mxu0 %v579
    %1239 = vmatprep.subr.mxu0 %v584
    %1240 = vmatpush1.msra.mxu0 %v583
    %1241 = vmatprep.subr.mxu0 %v588
    %1242 = vmatpush1.msra.mxu0 %v587
    %1243 = vmatprep.subr.mxu0 %v592
    %1244 = vmatpush1.msra.mxu0 %v591
    %1245 = vmatprep.subr.mxu0 %v596
    %1246 = vmatpush1.msra.mxu0 %v595
    %1247 = vmatprep.subr.mxu0 %v600
    %1248 = vmatpush1.msra.mxu0 %v599
    %1249 = vmatprep.subr.mxu0 %v604
    %1250 = vmatpush1.msra.mxu0 %v603
    %1251 = vmatprep.subr.mxu0 %v608
    %1252 = vmatpush1.msra.mxu0 %v607
    %1253 = vmatprep.subr.mxu0 %v612
    %1254 = vmatpush1.msra.mxu0 %v611
    %1255 = vmatprep.subr.mxu0 %v616
    %1256 = vmatpush1.msra.mxu0 %v615
    %1257 = vmatprep.subr.mxu0 %v620
    %1258 = vmatpush1.msra.mxu0 %v619
    %1259 = vmatprep.subr.mxu0 %v624
    %1260 = vmatpush1.msra.mxu0 %v623
    %1261 = vmatprep.subr.mxu0 %v628
    %1262 = vmatpush1.msra.mxu0 %v627
    %1263 = vmatprep.subr.mxu0 0.0
    %1264 = vmatpush1.msra.mxu0 0.0
    %1265 = vmatprep.subr.mxu0 0.0
    %1266 = vmatpush1.msra.mxu0 0.0
    %1267 = vmatprep.subr.mxu0 0.0
    %1268 = vmatpush1.msra.mxu0 0.0
    %1269 = vmatprep.subr.mxu0 0.0
    %1270 = vmatpush1.msra.mxu0 0.0
    %1271 = vmatprep.subr.mxu0 0.0
    %1272 = vmatpush1.msra.mxu0 0.0
    %1273 = vmatprep.subr.mxu0 0.0
    %1274 = vmatpush1.msra.mxu0 0.0
    %1275 = vmatprep.subr.mxu0 0.0
    %1276 = vmatpush1.msra.mxu0 0.0
    %1277 = vmatprep.subr.mxu0 0.0
    %1278 = vmatpush1.msra.mxu0 0.0
    %1279 = vmatprep.subr.mxu0 0.0
    %1280 = vmatpush1.msra.mxu0 0.0
    %1281 = vmatprep.subr.mxu0 0.0
    %1282 = vmatpush1.msra.mxu0 0.0
    %1283 = vmatprep.subr.mxu0 0.0
    %1284 = vmatpush1.msra.mxu0 0.0
    %1285 = vmatprep.subr.mxu0 0.0
    %1286 = vmatpush1.msra.mxu0 0.0
    %1287 = vmatprep.subr.mxu0 0.0
    %1288 = vmatpush1.msra.mxu0 0.0
    %1289 = vmatprep.subr.mxu0 0.0
    %1290 = vmatpush1.msra.mxu0 0.0
    %1291 = vmatprep.subr.mxu0 0.0
    %1292 = vmatpush1.msra.mxu0 0.0
    %1293 = vmatprep.subr.mxu0 0.0
    %1294 = vmatpush1.msra.mxu0 0.0
    %1295 = vmatprep.mubr.f32.mxu0 0.0
    %1296 = vmatmul.mubr.f32.gmra.mrb[0].mxu0 %v1153
    %v1297 = vpop.f32.mrb[0].mxu0
    %v1298 = vadd.f32 0.0, %v1297
    %v1299 = vpop.f32.mrb[0].mxu0
    %v1300 = vadd.f32 0.0, %v1299
    %1301 = vdwg.mxu0
    %v1302 = vadd.f32 %v1156, %v1227
    %v1303 = vadd.f32 %v1157, %v1229
    %v1304 = vadd.f32 %v1158, %v1298
    %v1305 = vadd.f32 %v1159, %v1300
    %v1306 = vxor.u32 %v1302, 2147483648
    %v1307 = vmul.f32 %v1306, 1.442695
    %v1308 = vpow.pop %v1307
    %v1309 = vadd.f32 %v1308, 1.0
    %v1310 = vrcp.pop %v1309
    %v1311 = vmul.f32 1.0, %v1310
    %v1312 = vxor.u32 %v1303, 2147483648
    %v1313 = vmul.f32 %v1312, 1.442695
    %v1314 = vpow.pop %v1313
    %v1315 = vadd.f32 %v1314, 1.0
    %v1316 = vrcp.pop %v1315
    %v1317 = vmul.f32 1.0, %v1316
    %v1318 = vtanh.pop %v1304
    %v1319 = vxor.u32 %v1305, 2147483648
    %v1320 = vmul.f32 %v1319, 1.442695
    %v1321 = vpow.pop %v1320
    %v1322 = vadd.f32 %v1321, 1.0
    %v1323 = vrcp.pop %v1322
    %v1324 = vmul.f32 1.0, %v1323
    %v1325 = vmul.f32 %v1317, %v1151
    %v1326 = vmul.f32 %v1311, %v1318
    %v1327 = vadd.f32 %v1325, %v1326
    %v1328 = vtanh.pop %v1327
    %v1329 = vmul.f32 %v1324, %v1328
    %s1330 = scalar_lea.vmem [#allocation3], 24
    %1331 = vst [vmem:[%s1330] sm:$0xff] %v1329
    %v1332 = vld [vmem:[%s544] sm:$0xff]
    %v1333 = vld [vmem:[%s544 + $0x8] sm:$0xff]
    %v1334 = vld [vmem:[%s544 + $0x10] sm:$0xff]
    %v1335 = vld [vmem:[%s544 + $0x18] sm:$0xff]
    %1336 = vmatprep.subr.mxu0 %v566
    %1337 = vmatpush1.msra.mxu0 %v565
    %1338 = vmatprep.subr.mxu0 %v570
    %1339 = vmatpush1.msra.mxu0 %v569
    %1340 = vmatprep.subr.mxu0 %v574
    %1341 = vmatpush1.msra.mxu0 %v573
    %1342 = vmatprep.subr.mxu0 %v578
    %1343 = vmatpush1.msra.mxu0 %v577
    %1344 = vmatprep.subr.mxu0 %v582
    %1345 = vmatpush1.msra.mxu0 %v581
    %1346 = vmatprep.subr.mxu0 %v586
    %1347 = vmatpush1.msra.mxu0 %v585
    %1348 = vmatprep.subr.mxu0 %v590
    %1349 = vmatpush1.msra.mxu0 %v589
    %1350 = vmatprep.subr.mxu0 %v594
    %1351 = vmatpush1.msra.mxu0 %v593
    %1352 = vmatprep.subr.mxu0 %v598
    %1353 = vmatpush1.msra.mxu0 %v597
    %1354 = vmatprep.subr.mxu0 %v602
    %1355 = vmatpush1.msra.mxu0 %v601
    %1356 = vmatprep.subr.mxu0 %v606
    %1357 = vmatpush1.msra.mxu0 %v605
    %1358 = vmatprep.subr.mxu0 %v610
    %1359 = vmatpush1.msra.mxu0 %v609
    %1360 = vmatprep.subr.mxu0 %v614
    %1361 = vmatpush1.msra.mxu0 %v613
    %1362 = vmatprep.subr.mxu0 %v618
    %1363 = vmatpush1.msra.mxu0 %v617
    %1364 = vmatprep.subr.mxu0 %v622
    %1365 = vmatpush1.msra.mxu0 %v621
    %1366 = vmatprep.subr.mxu0 %v626
    %1367 = vmatpush1.msra.mxu0 %v625
    %1368 = vmatprep.subr.mxu0 0.0
    %1369 = vmatpush1.msra.mxu0 0.0
    %1370 = vmatprep.subr.mxu0 0.0
    %1371 = vmatpush1.msra.mxu0 0.0
    %1372 = vmatprep.subr.mxu0 0.0
    %1373 = vmatpush1.msra.mxu0 0.0
    %1374 = vmatprep.subr.mxu0 0.0
    %1375 = vmatpush1.msra.mxu0 0.0
    %1376 = vmatprep.subr.mxu0 0.0
    %1377 = vmatpush1.msra.mxu0 0.0
    %1378 = vmatprep.subr.mxu0 0.0
    %1379 = vmatpush1.msra.mxu0 0.0
    %1380 = vmatprep.subr.mxu0 0.0
    %1381 = vmatpush1.msra.mxu0 0.0
    %1382 = vmatprep.subr.mxu0 0.0
    %1383 = vmatpush1.msra.mxu0 0.0
    %1384 = vmatprep.subr.mxu0 0.0
    %1385 = vmatpush1.msra.mxu0 0.0
    %1386 = vmatprep.subr.mxu0 0.0
    %1387 = vmatpush1.msra.mxu0 0.0
    %1388 = vmatprep.subr.mxu0 0.0
    %1389 = vmatpush1.msra.mxu0 0.0
    %1390 = vmatprep.subr.mxu0 0.0
    %1391 = vmatpush1.msra.mxu0 0.0
    %1392 = vmatprep.subr.mxu0 0.0
    %1393 = vmatpush1.msra.mxu0 0.0
    %1394 = vmatprep.subr.mxu0 0.0
    %1395 = vmatpush1.msra.mxu0 0.0
    %1396 = vmatprep.subr.mxu0 0.0
    %1397 = vmatpush1.msra.mxu0 0.0
    %1398 = vmatprep.subr.mxu0 0.0
    %1399 = vmatpush1.msra.mxu0 0.0
    %1400 = vmatprep.mubr.f32.mxu0 0.0
    %1401 = vmatmul.mubr.f32.gmra.mrb[0].mxu0 %v1329
    %v1402 = vpop.f32.mrb[0].mxu0
    %v1403 = vadd.f32 0.0, %v1402
    %v1404 = vpop.f32.mrb[0].mxu0
    %v1405 = vadd.f32 0.0, %v1404
    %1406 = vdwg.mxu0
    %1407 = vmatprep.subr.mxu0 %v568
    %1408 = vmatpush1.msra.mxu0 %v567
    %1409 = vmatprep.subr.mxu0 %v572
    %1410 = vmatpush1.msra.mxu0 %v571
    %1411 = vmatprep.subr.mxu0 %v576
    %1412 = vmatpush1.msra.mxu0 %v575
    %1413 = vmatprep.subr.mxu0 %v580
    %1414 = vmatpush1.msra.mxu0 %v579
    %1415 = vmatprep.subr.mxu0 %v584
    %1416 = vmatpush1.msra.mxu0 %v583
    %1417 = vmatprep.subr.mxu0 %v588
    %1418 = vmatpush1.msra.mxu0 %v587
    %1419 = vmatprep.subr.mxu0 %v592
    %1420 = vmatpush1.msra.mxu0 %v591
    %1421 = vmatprep.subr.mxu0 %v596
    %1422 = vmatpush1.msra.mxu0 %v595
    %1423 = vmatprep.subr.mxu0 %v600
    %1424 = vmatpush1.msra.mxu0 %v599
    %1425 = vmatprep.subr.mxu0 %v604
    %1426 = vmatpush1.msra.mxu0 %v603
    %1427 = vmatprep.subr.mxu0 %v608
    %1428 = vmatpush1.msra.mxu0 %v607
    %1429 = vmatprep.subr.mxu0 %v612
    %1430 = vmatpush1.msra.mxu0 %v611
    %1431 = vmatprep.subr.mxu0 %v616
    %1432 = vmatpush1.msra.mxu0 %v615
    %1433 = vmatprep.subr.mxu0 %v620
    %1434 = vmatpush1.msra.mxu0 %v619
    %1435 = vmatprep.subr.mxu0 %v624
    %1436 = vmatpush1.msra.mxu0 %v623
    %1437 = vmatprep.subr.mxu0 %v628
    %1438 = vmatpush1.msra.mxu0 %v627
    %1439 = vmatprep.subr.mxu0 0.0
    %1440 = vmatpush1.msra.mxu0 0.0
    %1441 = vmatprep.subr.mxu0 0.0
    %1442 = vmatpush1.msra.mxu0 0.0
    %1443 = vmatprep.subr.mxu0 0.0
    %1444 = vmatpush1.msra.mxu0 0.0
    %1445 = vmatprep.subr.mxu0 0.0
    %1446 = vmatpush1.msra.mxu0 0.0
    %1447 = vmatprep.subr.mxu0 0.0
    %1448 = vmatpush1.msra.mxu0 0.0
    %1449 = vmatprep.subr.mxu0 0.0
    %1450 = vmatpush1.msra.mxu0 0.0
    %1451 = vmatprep.subr.mxu0 0.0
    %1452 = vmatpush1.msra.mxu0 0.0
    %1453 = vmatprep.subr.mxu0 0.0
    %1454 = vmatpush1.msra.mxu0 0.0
    %1455 = vmatprep.subr.mxu0 0.0
    %1456 = vmatpush1.msra.mxu0 0.0
    %1457 = vmatprep.subr.mxu0 0.0
    %1458 = vmatpush1.msra.mxu0 0.0
    %1459 = vmatprep.subr.mxu0 0.0
    %1460 = vmatpush1.msra.mxu0 0.0
    %1461 = vmatprep.subr.mxu0 0.0
    %1462 = vmatpush1.msra.mxu0 0.0
    %1463 = vmatprep.subr.mxu0 0.0
    %1464 = vmatpush1.msra.mxu0 0.0
    %1465 = vmatprep.subr.mxu0 0.0
    %1466 = vmatpush1.msra.mxu0 0.0
    %1467 = vmatprep.subr.mxu0 0.0
    %1468 = vmatpush1.msra.mxu0 0.0
    %1469 = vmatprep.subr.mxu0 0.0
    %1470 = vmatpush1.msra.mxu0 0.0
    %1471 = vmatprep.mubr.f32.mxu0 0.0
    %1472 = vmatmul.mubr.f32.gmra.mrb[0].mxu0 %v1329
    %v1473 = vpop.f32.mrb[0].mxu0
    %v1474 = vadd.f32 0.0, %v1473
    %v1475 = vpop.f32.mrb[0].mxu0
    %v1476 = vadd.f32 0.0, %v1475
    %1477 = vdwg.mxu0
    %v1478 = vadd.f32 %v1332, %v1403
    %v1479 = vadd.f32 %v1333, %v1405
    %v1480 = vadd.f32 %v1334, %v1474
    %v1481 = vadd.f32 %v1335, %v1476
    %v1482 = vxor.u32 %v1478, 2147483648
    %v1483 = vmul.f32 %v1482, 1.442695
    %v1484 = vpow.pop %v1483
    %v1485 = vadd.f32 %v1484, 1.0
    %v1486 = vrcp.pop %v1485
    %v1487 = vmul.f32 1.0, %v1486
    %v1488 = vxor.u32 %v1479, 2147483648
    %v1489 = vmul.f32 %v1488, 1.442695
    %v1490 = vpow.pop %v1489
    %v1491 = vadd.f32 %v1490, 1.0
    %v1492 = vrcp.pop %v1491
    %v1493 = vmul.f32 1.0, %v1492
    %v1494 = vtanh.pop %v1480
    %v1495 = vxor.u32 %v1481, 2147483648
    %v1496 = vmul.f32 %v1495, 1.442695
    %v1497 = vpow.pop %v1496
    %v1498 = vadd.f32 %v1497, 1.0
    %v1499 = vrcp.pop %v1498
    %v1500 = vmul.f32 1.0, %v1499
    %v1501 = vmul.f32 %v1493, %v1327
    %v1502 = vmul.f32 %v1487, %v1494
    %v1503 = vadd.f32 %v1501, %v1502
    %v1504 = vtanh.pop %v1503
    %v1505 = vmul.f32 %v1500, %v1504
    %s1506 = scalar_lea.vmem [#allocation3], 32
    %1507 = vst [vmem:[%s1506] sm:$0xff] %v1505
    %v1508 = vld [vmem:[%s518] sm:$0xff]
    %v1509 = vld [vmem:[%s518 + $0x8] sm:$0xff]
    %v1510 = vld [vmem:[%s518 + $0x10] sm:$0xff]
    %v1511 = vld [vmem:[%s518 + $0x18] sm:$0xff]
    %1512 = vmatprep.subr.mxu0 %v566
    %1513 = vmatpush1.msra.mxu0 %v565
    %1514 = vmatprep.subr.mxu0 %v570
    %1515 = vmatpush1.msra.mxu0 %v569
    %1516 = vmatprep.subr.mxu0 %v574
    %1517 = vmatpush1.msra.mxu0 %v573
    %1518 = vmatprep.subr.mxu0 %v578
    %1519 = vmatpush1.msra.mxu0 %v577
    %1520 = vmatprep.subr.mxu0 %v582
    %1521 = vmatpush1.msra.mxu0 %v581
    %1522 = vmatprep.subr.mxu0 %v586
    %1523 = vmatpush1.msra.mxu0 %v585
    %1524 = vmatprep.subr.mxu0 %v590
    %1525 = vmatpush1.msra.mxu0 %v589
    %1526 = vmatprep.subr.mxu0 %v594
    %1527 = vmatpush1.msra.mxu0 %v593
    %1528 = vmatprep.subr.mxu0 %v598
    %1529 = vmatpush1.msra.mxu0 %v597
    %1530 = vmatprep.subr.mxu0 %v602
    %1531 = vmatpush1.msra.mxu0 %v601
    %1532 = vmatprep.subr.mxu0 %v606
    %1533 = vmatpush1.msra.mxu0 %v605
    %1534 = vmatprep.subr.mxu0 %v610
    %1535 = vmatpush1.msra.mxu0 %v609
    %1536 = vmatprep.subr.mxu0 %v614
    %1537 = vmatpush1.msra.mxu0 %v613
    %1538 = vmatprep.subr.mxu0 %v618
    %1539 = vmatpush1.msra.mxu0 %v617
    %1540 = vmatprep.subr.mxu0 %v622
    %1541 = vmatpush1.msra.mxu0 %v621
    %1542 = vmatprep.subr.mxu0 %v626
    %1543 = vmatpush1.msra.mxu0 %v625
    %1544 = vmatprep.subr.mxu0 0.0
    %1545 = vmatpush1.msra.mxu0 0.0
    %1546 = vmatprep.subr.mxu0 0.0
    %1547 = vmatpush1.msra.mxu0 0.0
    %1548 = vmatprep.subr.mxu0 0.0
    %1549 = vmatpush1.msra.mxu0 0.0
    %1550 = vmatprep.subr.mxu0 0.0
    %1551 = vmatpush1.msra.mxu0 0.0
    %1552 = vmatprep.subr.mxu0 0.0
    %1553 = vmatpush1.msra.mxu0 0.0
    %1554 = vmatprep.subr.mxu0 0.0
    %1555 = vmatpush1.msra.mxu0 0.0
    %1556 = vmatprep.subr.mxu0 0.0
    %1557 = vmatpush1.msra.mxu0 0.0
    %1558 = vmatprep.subr.mxu0 0.0
    %1559 = vmatpush1.msra.mxu0 0.0
    %1560 = vmatprep.subr.mxu0 0.0
    %1561 = vmatpush1.msra.mxu0 0.0
    %1562 = vmatprep.subr.mxu0 0.0
    %1563 = vmatpush1.msra.mxu0 0.0
    %1564 = vmatprep.subr.mxu0 0.0
    %1565 = vmatpush1.msra.mxu0 0.0
    %1566 = vmatprep.subr.mxu0 0.0
    %1567 = vmatpush1.msra.mxu0 0.0
    %1568 = vmatprep.subr.mxu0 0.0
    %1569 = vmatpush1.msra.mxu0 0.0
    %1570 = vmatprep.subr.mxu0 0.0
    %1571 = vmatpush1.msra.mxu0 0.0
    %1572 = vmatprep.subr.mxu0 0.0
    %1573 = vmatpush1.msra.mxu0 0.0
    %1574 = vmatprep.subr.mxu0 0.0
    %1575 = vmatpush1.msra.mxu0 0.0
    %1576 = vmatprep.mubr.f32.mxu0 0.0
    %1577 = vmatmul.mubr.f32.gmra.mrb[0].mxu0 %v1505
    %v1578 = vpop.f32.mrb[0].mxu0
    %v1579 = vadd.f32 0.0, %v1578
    %v1580 = vpop.f32.mrb[0].mxu0
    %v1581 = vadd.f32 0.0, %v1580
    %1582 = vdwg.mxu0
    %1583 = vmatprep.subr.mxu0 %v568
    %1584 = vmatpush1.msra.mxu0 %v567
    %1585 = vmatprep.subr.mxu0 %v572
    %1586 = vmatpush1.msra.mxu0 %v571
    %1587 = vmatprep.subr.mxu0 %v576
    %1588 = vmatpush1.msra.mxu0 %v575
    %1589 = vmatprep.subr.mxu0 %v580
    %1590 = vmatpush1.msra.mxu0 %v579
    %1591 = vmatprep.subr.mxu0 %v584
    %1592 = vmatpush1.msra.mxu0 %v583
    %1593 = vmatprep.subr.mxu0 %v588
    %1594 = vmatpush1.msra.mxu0 %v587
    %1595 = vmatprep.subr.mxu0 %v592
    %1596 = vmatpush1.msra.mxu0 %v591
    %1597 = vmatprep.subr.mxu0 %v596
    %1598 = vmatpush1.msra.mxu0 %v595
    %1599 = vmatprep.subr.mxu0 %v600
    %1600 = vmatpush1.msra.mxu0 %v599
    %1601 = vmatprep.subr.mxu0 %v604
    %1602 = vmatpush1.msra.mxu0 %v603
    %1603 = vmatprep.subr.mxu0 %v608
    %1604 = vmatpush1.msra.mxu0 %v607
    %1605 = vmatprep.subr.mxu0 %v612
    %1606 = vmatpush1.msra.mxu0 %v611
    %1607 = vmatprep.subr.mxu0 %v616
    %1608 = vmatpush1.msra.mxu0 %v615
    %1609 = vmatprep.subr.mxu0 %v620
    %1610 = vmatpush1.msra.mxu0 %v619
    %1611 = vmatprep.subr.mxu0 %v624
    %1612 = vmatpush1.msra.mxu0 %v623
    %1613 = vmatprep.subr.mxu0 %v628
    %1614 = vmatpush1.msra.mxu0 %v627
    %1615 = vmatprep.subr.mxu0 0.0
    %1616 = vmatpush1.msra.mxu0 0.0
    %1617 = vmatprep.subr.mxu0 0.0
    %1618 = vmatpush1.msra.mxu0 0.0
    %1619 = vmatprep.subr.mxu0 0.0
    %1620 = vmatpush1.msra.mxu0 0.0
    %1621 = vmatprep.subr.mxu0 0.0
    %1622 = vmatpush1.msra.mxu0 0.0
    %1623 = vmatprep.subr.mxu0 0.0
    %1624 = vmatpush1.msra.mxu0 0.0
    %1625 = vmatprep.subr.mxu0 0.0
    %1626 = vmatpush1.msra.mxu0 0.0
    %1627 = vmatprep.subr.mxu0 0.0
    %1628 = vmatpush1.msra.mxu0 0.0
    %1629 = vmatprep.subr.mxu0 0.0
    %1630 = vmatpush1.msra.mxu0 0.0
    %1631 = vmatprep.subr.mxu0 0.0
    %1632 = vmatpush1.msra.mxu0 0.0
    %1633 = vmatprep.subr.mxu0 0.0
    %1634 = vmatpush1.msra.mxu0 0.0
    %1635 = vmatprep.subr.mxu0 0.0
    %1636 = vmatpush1.msra.mxu0 0.0
    %1637 = vmatprep.subr.mxu0 0.0
    %1638 = vmatpush1.msra.mxu0 0.0
    %1639 = vmatprep.subr.mxu0 0.0
    %1640 = vmatpush1.msra.mxu0 0.0
    %1641 = vmatprep.subr.mxu0 0.0
    %1642 = vmatpush1.msra.mxu0 0.0
    %1643 = vmatprep.subr.mxu0 0.0
    %1644 = vmatpush1.msra.mxu0 0.0
    %1645 = vmatprep.subr.mxu0 0.0
    %1646 = vmatpush1.msra.mxu0 0.0
    %1647 = vmatprep.mubr.f32.mxu0 0.0
    %1648 = vmatmul.mubr.f32.gmra.mrb[0].mxu0 %v1505
    %v1649 = vpop.f32.mrb[0].mxu0
    %v1650 = vadd.f32 0.0, %v1649
    %v1651 = vpop.f32.mrb[0].mxu0
    %v1652 = vadd.f32 0.0, %v1651
    %1653 = vdwg.mxu0
    %v1654 = vadd.f32 %v1508, %v1579
    %v1655 = vadd.f32 %v1509, %v1581
    %v1656 = vadd.f32 %v1510, %v1650
    %v1657 = vadd.f32 %v1511, %v1652
    %v1658 = vxor.u32 %v1654, 2147483648
    %v1659 = vmul.f32 %v1658, 1.442695
    %v1660 = vpow.pop %v1659
    %v1661 = vadd.f32 %v1660, 1.0
    %v1662 = vrcp.pop %v1661
    %v1663 = vmul.f32 1.0, %v1662
    %v1664 = vxor.u32 %v1655, 2147483648
    %v1665 = vmul.f32 %v1664, 1.442695
    %v1666 = vpow.pop %v1665
    %v1667 = vadd.f32 %v1666, 1.0
    %v1668 = vrcp.pop %v1667
    %v1669 = vmul.f32 1.0, %v1668
    %v1670 = vtanh.pop %v1656
    %v1671 = vxor.u32 %v1657, 2147483648
    %v1672 = vmul.f32 %v1671, 1.442695
    %v1673 = vpow.pop %v1672
    %v1674 = vadd.f32 %v1673, 1.0
    %v1675 = vrcp.pop %v1674
    %v1676 = vmul.f32 1.0, %v1675
    %v1677 = vmul.f32 %v1669, %v1503
    %v1678 = vmul.f32 %v1663, %v1670
    %v1679 = vadd.f32 %v1677, %v1678
    %v1680 = vtanh.pop %v1679
    %v1681 = vmul.f32 %v1676, %v1680
    %s1682 = scalar_lea.vmem [#allocation3], 40
    %1683 = vst [vmem:[%s1682] sm:$0xff] %v1681
    %v1684 = vld [vmem:[%s492] sm:$0xff]
    %v1685 = vld [vmem:[%s492 + $0x8] sm:$0xff]
    %v1686 = vld [vmem:[%s492 + $0x10] sm:$0xff]
    %v1687 = vld [vmem:[%s492 + $0x18] sm:$0xff]
    %1688 = vmatprep.subr.mxu0 %v566
    %1689 = vmatpush1.msra.mxu0 %v565
    %1690 = vmatprep.subr.mxu0 %v570
    %1691 = vmatpush1.msra.mxu0 %v569
    %1692 = vmatprep.subr.mxu0 %v574
    %1693 = vmatpush1.msra.mxu0 %v573
    %1694 = vmatprep.subr.mxu0 %v578
    %1695 = vmatpush1.msra.mxu0 %v577
    %1696 = vmatprep.subr.mxu0 %v582
    %1697 = vmatpush1.msra.mxu0 %v581
    %1698 = vmatprep.subr.mxu0 %v586
    %1699 = vmatpush1.msra.mxu0 %v585
    %1700 = vmatprep.subr.mxu0 %v590
    %1701 = vmatpush1.msra.mxu0 %v589
    %1702 = vmatprep.subr.mxu0 %v594
    %1703 = vmatpush1.msra.mxu0 %v593
    %1704 = vmatprep.subr.mxu0 %v598
    %1705 = vmatpush1.msra.mxu0 %v597
    %1706 = vmatprep.subr.mxu0 %v602
    %1707 = vmatpush1.msra.mxu0 %v601
    %1708 = vmatprep.subr.mxu0 %v606
    %1709 = vmatpush1.msra.mxu0 %v605
    %1710 = vmatprep.subr.mxu0 %v610
    %1711 = vmatpush1.msra.mxu0 %v609
    %1712 = vmatprep.subr.mxu0 %v614
    %1713 = vmatpush1.msra.mxu0 %v613
    %1714 = vmatprep.subr.mxu0 %v618
    %1715 = vmatpush1.msra.mxu0 %v617
    %1716 = vmatprep.subr.mxu0 %v622
    %1717 = vmatpush1.msra.mxu0 %v621
    %1718 = vmatprep.subr.mxu0 %v626
    %1719 = vmatpush1.msra.mxu0 %v625
    %1720 = vmatprep.subr.mxu0 0.0
    %1721 = vmatpush1.msra.mxu0 0.0
    %1722 = vmatprep.subr.mxu0 0.0
    %1723 = vmatpush1.msra.mxu0 0.0
    %1724 = vmatprep.subr.mxu0 0.0
    %1725 = vmatpush1.msra.mxu0 0.0
    %1726 = vmatprep.subr.mxu0 0.0
    %1727 = vmatpush1.msra.mxu0 0.0
    %1728 = vmatprep.subr.mxu0 0.0
    %1729 = vmatpush1.msra.mxu0 0.0
    %1730 = vmatprep.subr.mxu0 0.0
    %1731 = vmatpush1.msra.mxu0 0.0
    %1732 = vmatprep.subr.mxu0 0.0
    %1733 = vmatpush1.msra.mxu0 0.0
    %1734 = vmatprep.subr.mxu0 0.0
    %1735 = vmatpush1.msra.mxu0 0.0
    %1736 = vmatprep.subr.mxu0 0.0
    %1737 = vmatpush1.msra.mxu0 0.0
    %1738 = vmatprep.subr.mxu0 0.0
    %1739 = vmatpush1.msra.mxu0 0.0
    %1740 = vmatprep.subr.mxu0 0.0
    %1741 = vmatpush1.msra.mxu0 0.0
    %1742 = vmatprep.subr.mxu0 0.0
    %1743 = vmatpush1.msra.mxu0 0.0
    %1744 = vmatprep.subr.mxu0 0.0
    %1745 = vmatpush1.msra.mxu0 0.0
    %1746 = vmatprep.subr.mxu0 0.0
    %1747 = vmatpush1.msra.mxu0 0.0
    %1748 = vmatprep.subr.mxu0 0.0
    %1749 = vmatpush1.msra.mxu0 0.0
    %1750 = vmatprep.subr.mxu0 0.0
    %1751 = vmatpush1.msra.mxu0 0.0
    %1752 = vmatprep.mubr.f32.mxu0 0.0
    %1753 = vmatmul.mubr.f32.gmra.mrb[0].mxu0 %v1681
    %v1754 = vpop.f32.mrb[0].mxu0
    %v1755 = vadd.f32 0.0, %v1754
    %v1756 = vpop.f32.mrb[0].mxu0
    %v1757 = vadd.f32 0.0, %v1756
    %1758 = vdwg.mxu0
    %1759 = vmatprep.subr.mxu0 %v568
    %1760 = vmatpush1.msra.mxu0 %v567
    %1761 = vmatprep.subr.mxu0 %v572
    %1762 = vmatpush1.msra.mxu0 %v571
    %1763 = vmatprep.subr.mxu0 %v576
    %1764 = vmatpush1.msra.mxu0 %v575
    %1765 = vmatprep.subr.mxu0 %v580
    %1766 = vmatpush1.msra.mxu0 %v579
    %1767 = vmatprep.subr.mxu0 %v584
    %1768 = vmatpush1.msra.mxu0 %v583
    %1769 = vmatprep.subr.mxu0 %v588
    %1770 = vmatpush1.msra.mxu0 %v587
    %1771 = vmatprep.subr.mxu0 %v592
    %1772 = vmatpush1.msra.mxu0 %v591
    %1773 = vmatprep.subr.mxu0 %v596
    %1774 = vmatpush1.msra.mxu0 %v595
    %1775 = vmatprep.subr.mxu0 %v600
    %1776 = vmatpush1.msra.mxu0 %v599
    %1777 = vmatprep.subr.mxu0 %v604
    %1778 = vmatpush1.msra.mxu0 %v603
    %1779 = vmatprep.subr.mxu0 %v608
    %1780 = vmatpush1.msra.mxu0 %v607
    %1781 = vmatprep.subr.mxu0 %v612
    %1782 = vmatpush1.msra.mxu0 %v611
    %1783 = vmatprep.subr.mxu0 %v616
    %1784 = vmatpush1.msra.mxu0 %v615
    %1785 = vmatprep.subr.mxu0 %v620
    %1786 = vmatpush1.msra.mxu0 %v619
    %1787 = vmatprep.subr.mxu0 %v624
    %1788 = vmatpush1.msra.mxu0 %v623
    %1789 = vmatprep.subr.mxu0 %v628
    %1790 = vmatpush1.msra.mxu0 %v627
    %1791 = vmatprep.subr.mxu0 0.0
    %1792 = vmatpush1.msra.mxu0 0.0
    %1793 = vmatprep.subr.mxu0 0.0
    %1794 = vmatpush1.msra.mxu0 0.0
    %1795 = vmatprep.subr.mxu0 0.0
    %1796 = vmatpush1.msra.mxu0 0.0
    %1797 = vmatprep.subr.mxu0 0.0
    %1798 = vmatpush1.msra.mxu0 0.0
    %1799 = vmatprep.subr.mxu0 0.0
    %1800 = vmatpush1.msra.mxu0 0.0
    %1801 = vmatprep.subr.mxu0 0.0
    %1802 = vmatpush1.msra.mxu0 0.0
    %1803 = vmatprep.subr.mxu0 0.0
    %1804 = vmatpush1.msra.mxu0 0.0
    %1805 = vmatprep.subr.mxu0 0.0
    %1806 = vmatpush1.msra.mxu0 0.0
    %1807 = vmatprep.subr.mxu0 0.0
    %1808 = vmatpush1.msra.mxu0 0.0
    %1809 = vmatprep.subr.mxu0 0.0
    %1810 = vmatpush1.msra.mxu0 0.0
    %1811 = vmatprep.subr.mxu0 0.0
    %1812 = vmatpush1.msra.mxu0 0.0
    %1813 = vmatprep.subr.mxu0 0.0
    %1814 = vmatpush1.msra.mxu0 0.0
    %1815 = vmatprep.subr.mxu0 0.0
    %1816 = vmatpush1.msra.mxu0 0.0
    %1817 = vmatprep.subr.mxu0 0.0
    %1818 = vmatpush1.msra.mxu0 0.0
    %1819 = vmatprep.subr.mxu0 0.0
    %1820 = vmatpush1.msra.mxu0 0.0
    %1821 = vmatprep.subr.mxu0 0.0
    %1822 = vmatpush1.msra.mxu0 0.0
    %1823 = vmatprep.mubr.f32.mxu0 0.0
    %1824 = vmatmul.mubr.f32.gmra.mrb[0].mxu0 %v1681
    %v1825 = vpop.f32.mrb[0].mxu0
    %v1826 = vadd.f32 0.0, %v1825
    %v1827 = vpop.f32.mrb[0].mxu0
    %v1828 = vadd.f32 0.0, %v1827
    %1829 = vdwg.mxu0
    %v1830 = vadd.f32 %v1684, %v1755
    %v1831 = vadd.f32 %v1685, %v1757
    %v1832 = vadd.f32 %v1686, %v1826
    %v1833 = vadd.f32 %v1687, %v1828
    %v1834 = vxor.u32 %v1830, 2147483648
    %v1835 = vmul.f32 %v1834, 1.442695
    %v1836 = vpow.pop %v1835
    %v1837 = vadd.f32 %v1836, 1.0
    %v1838 = vrcp.pop %v1837
    %v1839 = vmul.f32 1.0, %v1838
    %v1840 = vxor.u32 %v1831, 2147483648
    %v1841 = vmul.f32 %v1840, 1.442695
    %v1842 = vpow.pop %v1841
    %v1843 = vadd.f32 %v1842, 1.0
    %v1844 = vrcp.pop %v1843
    %v1845 = vmul.f32 1.0, %v1844
    %v1846 = vtanh.pop %v1832
    %v1847 = vxor.u32 %v1833, 2147483648
    %v1848 = vmul.f32 %v1847, 1.442695
    %v1849 = vpow.pop %v1848
    %v1850 = vadd.f32 %v1849, 1.0
    %v1851 = vrcp.pop %v1850
    %v1852 = vmul.f32 1.0, %v1851
    %v1853 = vmul.f32 %v1845, %v1679
    %v1854 = vmul.f32 %v1839, %v1846
    %v1855 = vadd.f32 %v1853, %v1854
    %v1856 = vtanh.pop %v1855
    %v1857 = vmul.f32 %v1852, %v1856
    %s1858 = scalar_lea.vmem [#allocation3], 48
    %1859 = vst [vmem:[%s1858] sm:$0xff] %v1857
    %v1860 = vld [vmem:[%s458] sm:$0xff]
    %v1861 = vld [vmem:[%s458 + $0x8] sm:$0xff]
    %v1862 = vld [vmem:[%s458 + $0x10] sm:$0xff]
    %v1863 = vld [vmem:[%s458 + $0x18] sm:$0xff]
    %1864 = vmatprep.subr.mxu0 %v566
    %1865 = vmatpush1.msra.mxu0 %v565
    %1866 = vmatprep.subr.mxu0 %v570
    %1867 = vmatpush1.msra.mxu0 %v569
    %1868 = vmatprep.subr.mxu0 %v574
    %1869 = vmatpush1.msra.mxu0 %v573
    %1870 = vmatprep.subr.mxu0 %v578
    %1871 = vmatpush1.msra.mxu0 %v577
    %1872 = vmatprep.subr.mxu0 %v582
    %1873 = vmatpush1.msra.mxu0 %v581
    %1874 = vmatprep.subr.mxu0 %v586
    %1875 = vmatpush1.msra.mxu0 %v585
    %1876 = vmatprep.subr.mxu0 %v590
    %1877 = vmatpush1.msra.mxu0 %v589
    %1878 = vmatprep.subr.mxu0 %v594
    %1879 = vmatpush1.msra.mxu0 %v593
    %1880 = vmatprep.subr.mxu0 %v598
    %1881 = vmatpush1.msra.mxu0 %v597
    %1882 = vmatprep.subr.mxu0 %v602
    %1883 = vmatpush1.msra.mxu0 %v601
    %1884 = vmatprep.subr.mxu0 %v606
    %1885 = vmatpush1.msra.mxu0 %v605
    %1886 = vmatprep.subr.mxu0 %v610
    %1887 = vmatpush1.msra.mxu0 %v609
    %1888 = vmatprep.subr.mxu0 %v614
    %1889 = vmatpush1.msra.mxu0 %v613
    %1890 = vmatprep.subr.mxu0 %v618
    %1891 = vmatpush1.msra.mxu0 %v617
    %1892 = vmatprep.subr.mxu0 %v622
    %1893 = vmatpush1.msra.mxu0 %v621
    %1894 = vmatprep.subr.mxu0 %v626
    %1895 = vmatpush1.msra.mxu0 %v625
    %1896 = vmatprep.subr.mxu0 0.0
    %1897 = vmatpush1.msra.mxu0 0.0
    %1898 = vmatprep.subr.mxu0 0.0
    %1899 = vmatpush1.msra.mxu0 0.0
    %1900 = vmatprep.subr.mxu0 0.0
    %1901 = vmatpush1.msra.mxu0 0.0
    %1902 = vmatprep.subr.mxu0 0.0
    %1903 = vmatpush1.msra.mxu0 0.0
    %1904 = vmatprep.subr.mxu0 0.0
    %1905 = vmatpush1.msra.mxu0 0.0
    %1906 = vmatprep.subr.mxu0 0.0
    %1907 = vmatpush1.msra.mxu0 0.0
    %1908 = vmatprep.subr.mxu0 0.0
    %1909 = vmatpush1.msra.mxu0 0.0
    %1910 = vmatprep.subr.mxu0 0.0
    %1911 = vmatpush1.msra.mxu0 0.0
    %1912 = vmatprep.subr.mxu0 0.0
    %1913 = vmatpush1.msra.mxu0 0.0
    %1914 = vmatprep.subr.mxu0 0.0
    %1915 = vmatpush1.msra.mxu0 0.0
    %1916 = vmatprep.subr.mxu0 0.0
    %1917 = vmatpush1.msra.mxu0 0.0
    %1918 = vmatprep.subr.mxu0 0.0
    %1919 = vmatpush1.msra.mxu0 0.0
    %1920 = vmatprep.subr.mxu0 0.0
    %1921 = vmatpush1.msra.mxu0 0.0
    %1922 = vmatprep.subr.mxu0 0.0
    %1923 = vmatpush1.msra.mxu0 0.0
    %1924 = vmatprep.subr.mxu0 0.0
    %1925 = vmatpush1.msra.mxu0 0.0
    %1926 = vmatprep.subr.mxu0 0.0
    %1927 = vmatpush1.msra.mxu0 0.0
    %1928 = vmatprep.mubr.f32.mxu0 0.0
    %1929 = vmatmul.mubr.f32.gmra.mrb[0].mxu0 %v1857
    %v1930 = vpop.f32.mrb[0].mxu0
    %v1931 = vadd.f32 0.0, %v1930
    %v1932 = vpop.f32.mrb[0].mxu0
    %v1933 = vadd.f32 0.0, %v1932
    %1934 = vdwg.mxu0
    %1935 = vmatprep.subr.mxu0 %v568
    %1936 = vmatpush1.msra.mxu0 %v567
    %1937 = vmatprep.subr.mxu0 %v572
    %1938 = vmatpush1.msra.mxu0 %v571
    %1939 = vmatprep.subr.mxu0 %v576
    %1940 = vmatpush1.msra.mxu0 %v575
    %1941 = vmatprep.subr.mxu0 %v580
    %1942 = vmatpush1.msra.mxu0 %v579
    %1943 = vmatprep.subr.mxu0 %v584
    %1944 = vmatpush1.msra.mxu0 %v583
    %1945 = vmatprep.subr.mxu0 %v588
    %1946 = vmatpush1.msra.mxu0 %v587
    %1947 = vmatprep.subr.mxu0 %v592
    %1948 = vmatpush1.msra.mxu0 %v591
    %1949 = vmatprep.subr.mxu0 %v596
    %1950 = vmatpush1.msra.mxu0 %v595
    %1951 = vmatprep.subr.mxu0 %v600
    %1952 = vmatpush1.msra.mxu0 %v599
    %1953 = vmatprep.subr.mxu0 %v604
    %1954 = vmatpush1.msra.mxu0 %v603
    %1955 = vmatprep.subr.mxu0 %v608
    %1956 = vmatpush1.msra.mxu0 %v607
    %1957 = vmatprep.subr.mxu0 %v612
    %1958 = vmatpush1.msra.mxu0 %v611
    %1959 = vmatprep.subr.mxu0 %v616
    %1960 = vmatpush1.msra.mxu0 %v615
    %1961 = vmatprep.subr.mxu0 %v620
    %1962 = vmatpush1.msra.mxu0 %v619
    %1963 = vmatprep.subr.mxu0 %v624
    %1964 = vmatpush1.msra.mxu0 %v623
    %1965 = vmatprep.subr.mxu0 %v628
    %1966 = vmatpush1.msra.mxu0 %v627
    %1967 = vmatprep.subr.mxu0 0.0
    %1968 = vmatpush1.msra.mxu0 0.0
    %1969 = vmatprep.subr.mxu0 0.0
    %1970 = vmatpush1.msra.mxu0 0.0
    %1971 = vmatprep.subr.mxu0 0.0
    %1972 = vmatpush1.msra.mxu0 0.0
    %1973 = vmatprep.subr.mxu0 0.0
    %1974 = vmatpush1.msra.mxu0 0.0
    %1975 = vmatprep.subr.mxu0 0.0
    %1976 = vmatpush1.msra.mxu0 0.0
    %1977 = vmatprep.subr.mxu0 0.0
    %1978 = vmatpush1.msra.mxu0 0.0
    %1979 = vmatprep.subr.mxu0 0.0
    %1980 = vmatpush1.msra.mxu0 0.0
    %1981 = vmatprep.subr.mxu0 0.0
    %1982 = vmatpush1.msra.mxu0 0.0
    %1983 = vmatprep.subr.mxu0 0.0
    %1984 = vmatpush1.msra.mxu0 0.0
    %1985 = vmatprep.subr.mxu0 0.0
    %1986 = vmatpush1.msra.mxu0 0.0
    %1987 = vmatprep.subr.mxu0 0.0
    %1988 = vmatpush1.msra.mxu0 0.0
    %1989 = vmatprep.subr.mxu0 0.0
    %1990 = vmatpush1.msra.mxu0 0.0
    %1991 = vmatprep.subr.mxu0 0.0
    %1992 = vmatpush1.msra.mxu0 0.0
    %1993 = vmatprep.subr.mxu0 0.0
    %1994 = vmatpush1.msra.mxu0 0.0
    %1995 = vmatprep.subr.mxu0 0.0
    %1996 = vmatpush1.msra.mxu0 0.0
    %1997 = vmatprep.subr.mxu0 0.0
    %1998 = vmatpush1.msra.mxu0 0.0
    %1999 = vmatprep.mubr.f32.mxu0 0.0
    %2000 = vmatmul.mubr.f32.gmra.mrb[0].mxu0 %v1857
    %v2001 = vpop.f32.mrb[0].mxu0
    %v2002 = vadd.f32 0.0, %v2001
    %v2003 = vpop.f32.mrb[0].mxu0
    %v2004 = vadd.f32 0.0, %v2003
    %2005 = vdwg.mxu0
    %v2006 = vadd.f32 %v1860, %v1931
    %v2007 = vadd.f32 %v1861, %v1933
    %v2008 = vadd.f32 %v1862, %v2002
    %v2009 = vadd.f32 %v1863, %v2004
    %v2010 = vxor.u32 %v2006, 2147483648
    %v2011 = vmul.f32 %v2010, 1.442695
    %v2012 = vpow.pop %v2011
    %v2013 = vadd.f32 %v2012, 1.0
    %v2014 = vrcp.pop %v2013
    %v2015 = vmul.f32 1.0, %v2014
    %v2016 = vxor.u32 %v2007, 2147483648
    %v2017 = vmul.f32 %v2016, 1.442695
    %v2018 = vpow.pop %v2017
    %v2019 = vadd.f32 %v2018, 1.0
    %v2020 = vrcp.pop %v2019
    %v2021 = vmul.f32 1.0, %v2020
    %v2022 = vtanh.pop %v2008
    %v2023 = vxor.u32 %v2009, 2147483648
    %v2024 = vmul.f32 %v2023, 1.442695
    %v2025 = vpow.pop %v2024
    %v2026 = vadd.f32 %v2025, 1.0
    %v2027 = vrcp.pop %v2026
    %v2028 = vmul.f32 1.0, %v2027
    %v2029 = vmul.f32 %v2021, %v1855
    %v2030 = vmul.f32 %v2015, %v2022
    %v2031 = vadd.f32 %v2029, %v2030
    %v2032 = vtanh.pop %v2031
    %v2033 = vmul.f32 %v2028, %v2032
    %s2034 = scalar_lea.vmem [#allocation3], 56
    %2035 = vst [vmem:[%s2034] sm:$0xff] %v2033
    %vm2036 = vcmp.lt.s32.totalorder %v398, 64
    %v2037 = vld [vmem:[#allocation3] sm:$0xff]
    %v2038 = vld [vmem:[%s2034] sm:$0xff]
    %v2039 = vsel %vm2036, 1, 0
    %vm2040 = vcmp.eq.s32.totalorder %v2039, 1
    %v2041 = vsel %vm2040, %v2037, %v2038
    %2042 = vst [vmem:[%s4] sm:$0xff] %v2041
    %v2043 = vsel %vm2040, %v2038, %v2037
    %s2044 = scalar_lea.vmem %s4, 56
    %2045 = vst [vmem:[%s2044] sm:$0xff] %v2043
    %v2046 = vld [vmem:[%s978] sm:$0xff]
    %v2047 = vld [vmem:[%s1858] sm:$0xff]
    %v2048 = vsel %vm2040, %v2046, %v2047
    %s2049 = scalar_lea.vmem %s4, 8
    %2050 = vst [vmem:[%s2049] sm:$0xff] %v2048
    %v2051 = vsel %vm2040, %v2047, %v2046
    %s2052 = scalar_lea.vmem %s4, 48
    %2053 = vst [vmem:[%s2052] sm:$0xff] %v2051
    %v2054 = vld [vmem:[%s1154] sm:$0xff]
    %v2055 = vld [vmem:[%s1682] sm:$0xff]
    %v2056 = vsel %vm2040, %v2054, %v2055
    %s2057 = scalar_lea.vmem %s4, 16
    %2058 = vst [vmem:[%s2057] sm:$0xff] %v2056
    %v2059 = vsel %vm2040, %v2055, %v2054
    %s2060 = scalar_lea.vmem %s4, 40
    %2061 = vst [vmem:[%s2060] sm:$0xff] %v2059
    %v2062 = vld [vmem:[%s1330] sm:$0xff]
    %v2063 = vld [vmem:[%s1506] sm:$0xff]
    %v2064 = vsel %vm2040, %v2062, %v2063
    %s2065 = scalar_lea.vmem %s4, 24
    %2066 = vst [vmem:[%s2065] sm:$0xff] %v2064
    %v2067 = vsel %vm2040, %v2063, %v2062
    %s2068 = scalar_lea.vmem %s4, 32
    %2069 = vst [vmem:[%s2068] sm:$0xff] %v2067
    // Predicated region
    $region26: #{_lambda_.2} parent=1 // pred_check
      _
    $region27: #{_lambda_.2} parent=1 // pred_check_branch
      %2071 = sbr.rel (0) target = $region29
    $region28: #{_lambda_.2} parent=1 // pred_region
      _
    $region29: #{_lambda_.2} parent=1 // pred_fallthru
      _
    // Predicated region
    $region30: #{_lambda_.2} parent=1 // pred_check
      _
    $region31: #{_lambda_.2} parent=1 // pred_check_branch
      %2073 = sbr.rel (0) target = $region33
    $region32: #{_lambda_.2} parent=1 // pred_region
      _
    $region33: #{_lambda_.2} parent=1 // pred_fallthru
      _
    %2074 = vsyncpa [#allocation5], 1
    %2075 = vsyncpa [#allocation7], 1

// kernel: _lambda_.3
$region0: #{_lambda_.3}
  #allocation0 [shape = 'u32[]', space=smem, size = 0x4, offset = 0x4, fixed_abs, tag = 'smem constant byte address 0x4 - core index']
  #allocation1 [shape = 'u32[144,128]{1,0:T(1,128)}', space=vmem, size = 0x12000, scoped, tag = 'internal scratch']
  #allocation2 [shape = 'f32[8,8,512]{2,1,0:T(8,128)}', space=vmem, size = 0x20000, scoped, tag = 'scratch operand']
  %s0 = inlined_call_operand.vmem [shape: f32[8,8,128], index: 0, kind: input, shape index: {}]
  %s1 = inlined_call_operand.vmem [shape: f32[128,512], index: 1, kind: input, shape index: {}]
  %s2 = inlined_call_operand.vmem [shape: f32[1,512], index: 2, kind: input, shape index: {}]
  %s3 = inlined_call_operand.vmem [shape: f32[128,512], index: 3, kind: input, shape index: {}]
  %s4 = inlined_call_operand.vmem [shape: f32[128,128], index: 4, kind: input, shape index: {}]
  %s5 = inlined_call_operand.vmem [shape: f32[1,128], index: 5, kind: input, shape index: {}]
  %s6 = inlined_call_operand.vmem [shape: f32[8,128], index: 6, kind: output, shape index: {}]
  %s7 = sld [smem:[#allocation0]]
  $region34: #{_lambda_.3} parent=0
    _
  %s9 = ssub.s32 1, %s7
  %s10 = scalar_select 0, %s9, %s7
  // Predicated region
  $region2: #{_lambda_.3} parent=0 // pred_check
    _
  $region3: #{_lambda_.3} parent=0 // pred_check_branch
    %12 = sbr.rel (0) target = $region5
  $region4: #{_lambda_.3} parent=0 // pred_region
    _
  $region5: #{_lambda_.3} parent=0 // pred_fallthru
    _
  // Predicated region
  $region6: #{_lambda_.3} parent=0 // pred_check
    _
  $region7: #{_lambda_.3} parent=0 // pred_check_branch
    %14 = sbr.rel (0) target = $region9
  $region8: #{_lambda_.3} parent=0 // pred_region
    _
  $region9: #{_lambda_.3} parent=0 // pred_fallthru
    _
  // Predicated region
  $region10: #{_lambda_.3} parent=0 // pred_check
    _
  $region11: #{_lambda_.3} parent=0 // pred_check_branch
    %16 = sbr.rel (0) target = $region13
  $region12: #{_lambda_.3} parent=0 // pred_region
    _
  $region13: #{_lambda_.3} parent=0 // pred_fallthru
    _
  // Predicated region
  $region14: #{_lambda_.3} parent=0 // pred_check
    _
  $region15: #{_lambda_.3} parent=0 // pred_check_branch
    %18 = sbr.rel (0) target = $region17
  $region16: #{_lambda_.3} parent=0 // pred_region
    _
  $region17: #{_lambda_.3} parent=0 // pred_fallthru
    _
  // Predicated region
  $region18: #{_lambda_.3} parent=0 // pred_check
    _
  $region19: #{_lambda_.3} parent=0 // pred_check_branch
    %20 = sbr.rel (0) target = $region21
  $region20: #{_lambda_.3} parent=0 // pred_region
    _
  $region21: #{_lambda_.3} parent=0 // pred_fallthru
    _
  // Predicated region
  $region22: #{_lambda_.3} parent=0 // pred_check
    _
  $region23: #{_lambda_.3} parent=0 // pred_check_branch
    %22 = sbr.rel (0) target = $region25
  $region24: #{_lambda_.3} parent=0 // pred_region
    _
  $region25: #{_lambda_.3} parent=0 // pred_fallthru
    _
  %v23 = vld [vmem:[%s0] sm:$0xff]
  %v24 = vld [vmem:[%s0 + $0x8] sm:$0xff]
  %v25 = vld [vmem:[%s0 + $0x10] sm:$0xff]
  %v26 = vld [vmem:[%s0 + $0x18] sm:$0xff]
  %v27 = vld [vmem:[%s0 + $0x20] sm:$0xff]
  %v28 = vld [vmem:[%s0 + $0x28] sm:$0xff]
  %v29 = vld [vmem:[%s0 + $0x30] sm:$0xff]
  %v30 = vld [vmem:[%s0 + $0x38] sm:$0xff]
  %v31 = vld [vmem:[%s1] sm:$0xff]
  %v32 = vld [vmem:[%s1 + $0x8] sm:$0xff]
  %v33 = vld [vmem:[%s1 + $0x10] sm:$0xff]
  %v34 = vld [vmem:[%s1 + $0x18] sm:$0xff]
  %v35 = vld [vmem:[%s1 + $0x20] sm:$0xff]
  %v36 = vld [vmem:[%s1 + $0x28] sm:$0xff]
  %v37 = vld [vmem:[%s1 + $0x30] sm:$0xff]
  %v38 = vld [vmem:[%s1 + $0x38] sm:$0xff]
  %v39 = vld [vmem:[%s1 + $0x40] sm:$0xff]
  %v40 = vld [vmem:[%s1 + $0x48] sm:$0xff]
  %v41 = vld [vmem:[%s1 + $0x50] sm:$0xff]
  %v42 = vld [vmem:[%s1 + $0x58] sm:$0xff]
  %v43 = vld [vmem:[%s1 + $0x60] sm:$0xff]
  %v44 = vld [vmem:[%s1 + $0x68] sm:$0xff]
  %v45 = vld [vmem:[%s1 + $0x70] sm:$0xff]
  %v46 = vld [vmem:[%s1 + $0x78] sm:$0xff]
  %v47 = vld [vmem:[%s1 + $0x80] sm:$0xff]
  %v48 = vld [vmem:[%s1 + $0x88] sm:$0xff]
  %v49 = vld [vmem:[%s1 + $0x90] sm:$0xff]
  %v50 = vld [vmem:[%s1 + $0x98] sm:$0xff]
  %v51 = vld [vmem:[%s1 + $0xa0] sm:$0xff]
  %v52 = vld [vmem:[%s1 + $0xa8] sm:$0xff]
  %v53 = vld [vmem:[%s1 + $0xb0] sm:$0xff]
  %v54 = vld [vmem:[%s1 + $0xb8] sm:$0xff]
  %v55 = vld [vmem:[%s1 + $0xc0] sm:$0xff]
  %v56 = vld [vmem:[%s1 + $0xc8] sm:$0xff]
  %v57 = vld [vmem:[%s1 + $0xd0] sm:$0xff]
  %v58 = vld [vmem:[%s1 + $0xd8] sm:$0xff]
  %v59 = vld [vmem:[%s1 + $0xe0] sm:$0xff]
  %v60 = vld [vmem:[%s1 + $0xe8] sm:$0xff]
  %v61 = vld [vmem:[%s1 + $0xf0] sm:$0xff]
  %v62 = vld [vmem:[%s1 + $0xf8] sm:$0xff]
  %v63 = vld [vmem:[%s1 + $0x100] sm:$0xff]
  %v64 = vld [vmem:[%s1 + $0x108] sm:$0xff]
  %v65 = vld [vmem:[%s1 + $0x110] sm:$0xff]
  %v66 = vld [vmem:[%s1 + $0x118] sm:$0xff]
  %v67 = vld [vmem:[%s1 + $0x120] sm:$0xff]
  %v68 = vld [vmem:[%s1 + $0x128] sm:$0xff]
  %v69 = vld [vmem:[%s1 + $0x130] sm:$0xff]
  %v70 = vld [vmem:[%s1 + $0x138] sm:$0xff]
  %v71 = vld [vmem:[%s1 + $0x140] sm:$0xff]
  %v72 = vld [vmem:[%s1 + $0x148] sm:$0xff]
  %v73 = vld [vmem:[%s1 + $0x150] sm:$0xff]
  %v74 = vld [vmem:[%s1 + $0x158] sm:$0xff]
  %v75 = vld [vmem:[%s1 + $0x160] sm:$0xff]
  %v76 = vld [vmem:[%s1 + $0x168] sm:$0xff]
  %v77 = vld [vmem:[%s1 + $0x170] sm:$0xff]
  %v78 = vld [vmem:[%s1 + $0x178] sm:$0xff]
  %v79 = vld [vmem:[%s1 + $0x180] sm:$0xff]
  %v80 = vld [vmem:[%s1 + $0x188] sm:$0xff]
  %v81 = vld [vmem:[%s1 + $0x190] sm:$0xff]
  %v82 = vld [vmem:[%s1 + $0x198] sm:$0xff]
  %v83 = vld [vmem:[%s1 + $0x1a0] sm:$0xff]
  %v84 = vld [vmem:[%s1 + $0x1a8] sm:$0xff]
  %v85 = vld [vmem:[%s1 + $0x1b0] sm:$0xff]
  %v86 = vld [vmem:[%s1 + $0x1b8] sm:$0xff]
  %v87 = vld [vmem:[%s1 + $0x1c0] sm:$0xff]
  %v88 = vld [vmem:[%s1 + $0x1c8] sm:$0xff]
  %v89 = vld [vmem:[%s1 + $0x1d0] sm:$0xff]
  %v90 = vld [vmem:[%s1 + $0x1d8] sm:$0xff]
  %v91 = vld [vmem:[%s1 + $0x1e0] sm:$0xff]
  %v92 = vld [vmem:[%s1 + $0x1e8] sm:$0xff]
  %v93 = vld [vmem:[%s1 + $0x1f0] sm:$0xff]
  %v94 = vld [vmem:[%s1 + $0x1f8] sm:$0xff]
  %v95 = vld [vmem:[%s2] sm:$0xf]
  %v97 = vlaneseq
  %v98 = vshrl.u32 %v97, 7
  %v99 = vsub.s32 0, %v98
  %v100 = vrot.slane %v95, %v99
  %v101 = vlaneseq
  %v102 = vshrl.u32 %v101, 7
  %v103 = vsub.s32 1, %v102
  %v104 = vrot.slane %v95, %v103
  %v105 = vlaneseq
  %v106 = vshrl.u32 %v105, 7
  %v107 = vsub.s32 2, %v106
  %v108 = vrot.slane %v95, %v107
  %v109 = vlaneseq
  %v110 = vshrl.u32 %v109, 7
  %v111 = vsub.s32 3, %v110
  %v112 = vrot.slane %v95, %v111
  %117 = vmatprep.subr.mxu0 %v32
  %118 = vmatpush1.msra.mxu0 %v31
  %119 = vmatprep.subr.mxu0 %v36
  %120 = vmatpush1.msra.mxu0 %v35
  %121 = vmatprep.subr.mxu0 %v40
  %122 = vmatpush1.msra.mxu0 %v39
  %123 = vmatprep.subr.mxu0 %v44
  %124 = vmatpush1.msra.mxu0 %v43
  %125 = vmatprep.subr.mxu0 %v48
  %126 = vmatpush1.msra.mxu0 %v47
  %127 = vmatprep.subr.mxu0 %v52
  %128 = vmatpush1.msra.mxu0 %v51
  %129 = vmatprep.subr.mxu0 %v56
  %130 = vmatpush1.msra.mxu0 %v55
  %131 = vmatprep.subr.mxu0 %v60
  %132 = vmatpush1.msra.mxu0 %v59
  %133 = vmatprep.subr.mxu0 %v64
  %134 = vmatpush1.msra.mxu0 %v63
  %135 = vmatprep.subr.mxu0 %v68
  %136 = vmatpush1.msra.mxu0 %v67
  %137 = vmatprep.subr.mxu0 %v72
  %138 = vmatpush1.msra.mxu0 %v71
  %139 = vmatprep.subr.mxu0 %v76
  %140 = vmatpush1.msra.mxu0 %v75
  %141 = vmatprep.subr.mxu0 %v80
  %142 = vmatpush1.msra.mxu0 %v79
  %143 = vmatprep.subr.mxu0 %v84
  %144 = vmatpush1.msra.mxu0 %v83
  %145 = vmatprep.subr.mxu0 %v88
  %146 = vmatpush1.msra.mxu0 %v87
  %147 = vmatprep.subr.mxu0 %v92
  %148 = vmatpush1.msra.mxu0 %v91
  %149 = vmatprep.subr.mxu0 0.0
  %150 = vmatpush1.msra.mxu0 0.0
  %151 = vmatprep.subr.mxu0 0.0
  %152 = vmatpush1.msra.mxu0 0.0
  %153 = vmatprep.subr.mxu0 0.0
  %154 = vmatpush1.msra.mxu0 0.0
  %155 = vmatprep.subr.mxu0 0.0
  %156 = vmatpush1.msra.mxu0 0.0
  %157 = vmatprep.subr.mxu0 0.0
  %158 = vmatpush1.msra.mxu0 0.0
  %159 = vmatprep.subr.mxu0 0.0
  %160 = vmatpush1.msra.mxu0 0.0
  %161 = vmatprep.subr.mxu0 0.0
  %162 = vmatpush1.msra.mxu0 0.0
  %163 = vmatprep.subr.mxu0 0.0
  %164 = vmatpush1.msra.mxu0 0.0
  %165 = vmatprep.subr.mxu0 0.0
  %166 = vmatpush1.msra.mxu0 0.0
  %167 = vmatprep.subr.mxu0 0.0
  %168 = vmatpush1.msra.mxu0 0.0
  %169 = vmatprep.subr.mxu0 0.0
  %170 = vmatpush1.msra.mxu0 0.0
  %171 = vmatprep.subr.mxu0 0.0
  %172 = vmatpush1.msra.mxu0 0.0
  %173 = vmatprep.subr.mxu0 0.0
  %174 = vmatpush1.msra.mxu0 0.0
  %175 = vmatprep.subr.mxu0 0.0
  %176 = vmatpush1.msra.mxu0 0.0
  %177 = vmatprep.subr.mxu0 0.0
  %178 = vmatpush1.msra.mxu0 0.0
  %179 = vmatprep.subr.mxu0 0.0
  %180 = vmatpush1.msra.mxu0 0.0
  %181 = vmatprep.mubr.f32.mxu0 0.0
  %182 = vmatmul.mubr.f32.gmra.mrb[0].mxu0 %v23
  %v183 = vpop.f32.mrb[0].mxu0
  %v184 = vadd.f32 %v100, %v183
  %v185 = vpop.f32.mrb[0].mxu0
  %v186 = vadd.f32 %v104, %v185
  %187 = vmatprep.mubr.f32.mxu0 0.0
  %188 = vmatmul.mubr.f32.gmra.mrb[0].mxu0 %v24
  %v189 = vpop.f32.mrb[0].mxu0
  %v190 = vadd.f32 %v100, %v189
  %v191 = vpop.f32.mrb[0].mxu0
  %v192 = vadd.f32 %v104, %v191
  %193 = vmatprep.mubr.f32.mxu0 0.0
  %194 = vmatmul.mubr.f32.gmra.mrb[0].mxu0 %v25
  %v195 = vpop.f32.mrb[0].mxu0
  %v196 = vadd.f32 %v100, %v195
  %v197 = vpop.f32.mrb[0].mxu0
  %v198 = vadd.f32 %v104, %v197
  %199 = vmatprep.mubr.f32.mxu0 0.0
  %200 = vmatmul.mubr.f32.gmra.mrb[0].mxu0 %v26
  %v201 = vpop.f32.mrb[0].mxu0
  %v202 = vadd.f32 %v100, %v201
  %v203 = vpop.f32.mrb[0].mxu0
  %v204 = vadd.f32 %v104, %v203
  %205 = vmatprep.mubr.f32.mxu0 0.0
  %206 = vmatmul.mubr.f32.gmra.mrb[0].mxu0 %v27
  %v207 = vpop.f32.mrb[0].mxu0
  %v208 = vadd.f32 %v100, %v207
  %v209 = vpop.f32.mrb[0].mxu0
  %v210 = vadd.f32 %v104, %v209
  %211 = vmatprep.mubr.f32.mxu0 0.0
  %212 = vmatmul.mubr.f32.gmra.mrb[0].mxu0 %v28
  %v213 = vpop.f32.mrb[0].mxu0
  %v214 = vadd.f32 %v100, %v213
  %v215 = vpop.f32.mrb[0].mxu0
  %v216 = vadd.f32 %v104, %v215
  %217 = vmatprep.mubr.f32.mxu0 0.0
  %218 = vmatmul.mubr.f32.gmra.mrb[0].mxu0 %v29
  %v219 = vpop.f32.mrb[0].mxu0
  %v220 = vadd.f32 %v100, %v219
  %v221 = vpop.f32.mrb[0].mxu0
  %v222 = vadd.f32 %v104, %v221
  %223 = vmatprep.mubr.f32.mxu0 0.0
  %224 = vmatmul.mubr.f32.gmra.mrb[0].mxu0 %v30
  %v225 = vpop.f32.mrb[0].mxu0
  %v226 = vadd.f32 %v100, %v225
  %v227 = vpop.f32.mrb[0].mxu0
  %v228 = vadd.f32 %v104, %v227
  %229 = vdwg.mxu0
  %230 = vmatprep.subr.mxu0 %v34
  %231 = vmatpush1.msra.mxu0 %v33
  %232 = vmatprep.subr.mxu0 %v38
  %233 = vmatpush1.msra.mxu0 %v37
  %234 = vmatprep.subr.mxu0 %v42
  %235 = vmatpush1.msra.mxu0 %v41
  %236 = vmatprep.subr.mxu0 %v46
  %237 = vmatpush1.msra.mxu0 %v45
  %238 = vmatprep.subr.mxu0 %v50
  %239 = vmatpush1.msra.mxu0 %v49
  %240 = vmatprep.subr.mxu0 %v54
  %241 = vmatpush1.msra.mxu0 %v53
  %242 = vmatprep.subr.mxu0 %v58
  %243 = vmatpush1.msra.mxu0 %v57
  %244 = vmatprep.subr.mxu0 %v62
  %245 = vmatpush1.msra.mxu0 %v61
  %246 = vmatprep.subr.mxu0 %v66
  %247 = vmatpush1.msra.mxu0 %v65
  %248 = vmatprep.subr.mxu0 %v70
  %249 = vmatpush1.msra.mxu0 %v69
  %250 = vmatprep.subr.mxu0 %v74
  %251 = vmatpush1.msra.mxu0 %v73
  %252 = vmatprep.subr.mxu0 %v78
  %253 = vmatpush1.msra.mxu0 %v77
  %254 = vmatprep.subr.mxu0 %v82
  %255 = vmatpush1.msra.mxu0 %v81
  %256 = vmatprep.subr.mxu0 %v86
  %257 = vmatpush1.msra.mxu0 %v85
  %258 = vmatprep.subr.mxu0 %v90
  %259 = vmatpush1.msra.mxu0 %v89
  %260 = vmatprep.subr.mxu0 %v94
  %261 = vmatpush1.msra.mxu0 %v93
  %262 = vmatprep.subr.mxu0 0.0
  %263 = vmatpush1.msra.mxu0 0.0
  %264 = vmatprep.subr.mxu0 0.0
  %265 = vmatpush1.msra.mxu0 0.0
  %266 = vmatprep.subr.mxu0 0.0
  %267 = vmatpush1.msra.mxu0 0.0
  %268 = vmatprep.subr.mxu0 0.0
  %269 = vmatpush1.msra.mxu0 0.0
  %270 = vmatprep.subr.mxu0 0.0
  %271 = vmatpush1.msra.mxu0 0.0
  %272 = vmatprep.subr.mxu0 0.0
  %273 = vmatpush1.msra.mxu0 0.0
  %274 = vmatprep.subr.mxu0 0.0
  %275 = vmatpush1.msra.mxu0 0.0
  %276 = vmatprep.subr.mxu0 0.0
  %277 = vmatpush1.msra.mxu0 0.0
  %278 = vmatprep.subr.mxu0 0.0
  %279 = vmatpush1.msra.mxu0 0.0
  %280 = vmatprep.subr.mxu0 0.0
  %281 = vmatpush1.msra.mxu0 0.0
  %282 = vmatprep.subr.mxu0 0.0
  %283 = vmatpush1.msra.mxu0 0.0
  %284 = vmatprep.subr.mxu0 0.0
  %285 = vmatpush1.msra.mxu0 0.0
  %286 = vmatprep.subr.mxu0 0.0
  %287 = vmatpush1.msra.mxu0 0.0
  %288 = vmatprep.subr.mxu0 0.0
  %289 = vmatpush1.msra.mxu0 0.0
  %290 = vmatprep.subr.mxu0 0.0
  %291 = vmatpush1.msra.mxu0 0.0
  %292 = vmatprep.subr.mxu0 0.0
  %293 = vmatpush1.msra.mxu0 0.0
  %294 = vmatprep.mubr.f32.mxu0 0.0
  %295 = vmatmul.mubr.f32.gmra.mrb[0].mxu0 %v23
  %v296 = vpop.f32.mrb[0].mxu0
  %v297 = vadd.f32 %v108, %v296
  %v298 = vpop.f32.mrb[0].mxu0
  %v299 = vadd.f32 %v112, %v298
  %300 = vmatprep.mubr.f32.mxu0 0.0
  %301 = vmatmul.mubr.f32.gmra.mrb[0].mxu0 %v24
  %v302 = vpop.f32.mrb[0].mxu0
  %v303 = vadd.f32 %v108, %v302
  %v304 = vpop.f32.mrb[0].mxu0
  %v305 = vadd.f32 %v112, %v304
  %306 = vmatprep.mubr.f32.mxu0 0.0
  %307 = vmatmul.mubr.f32.gmra.mrb[0].mxu0 %v25
  %v308 = vpop.f32.mrb[0].mxu0
  %v309 = vadd.f32 %v108, %v308
  %v310 = vpop.f32.mrb[0].mxu0
  %v311 = vadd.f32 %v112, %v310
  %312 = vmatprep.mubr.f32.mxu0 0.0
  %313 = vmatmul.mubr.f32.gmra.mrb[0].mxu0 %v26
  %v314 = vpop.f32.mrb[0].mxu0
  %v315 = vadd.f32 %v108, %v314
  %v316 = vpop.f32.mrb[0].mxu0
  %v317 = vadd.f32 %v112, %v316
  %318 = vmatprep.mubr.f32.mxu0 0.0
  %319 = vmatmul.mubr.f32.gmra.mrb[0].mxu0 %v27
  %v320 = vpop.f32.mrb[0].mxu0
  %v321 = vadd.f32 %v108, %v320
  %v322 = vpop.f32.mrb[0].mxu0
  %v323 = vadd.f32 %v112, %v322
  %324 = vmatprep.mubr.f32.mxu0 0.0
  %325 = vmatmul.mubr.f32.gmra.mrb[0].mxu0 %v28
  %v326 = vpop.f32.mrb[0].mxu0
  %v327 = vadd.f32 %v108, %v326
  %v328 = vpop.f32.mrb[0].mxu0
  %v329 = vadd.f32 %v112, %v328
  %330 = vmatprep.mubr.f32.mxu0 0.0
  %331 = vmatmul.mubr.f32.gmra.mrb[0].mxu0 %v29
  %v332 = vpop.f32.mrb[0].mxu0
  %v333 = vadd.f32 %v108, %v332
  %v334 = vpop.f32.mrb[0].mxu0
  %v335 = vadd.f32 %v112, %v334
  %336 = vmatprep.mubr.f32.mxu0 0.0
  %337 = vmatmul.mubr.f32.gmra.mrb[0].mxu0 %v30
  %v338 = vpop.f32.mrb[0].mxu0
  %v339 = vadd.f32 %v108, %v338
  %v340 = vpop.f32.mrb[0].mxu0
  %v341 = vadd.f32 %v112, %v340
  %342 = vdwg.mxu0
  %343 = vst [vmem:[#allocation2] sm:$0xff] %v184
  %344 = vst [vmem:[#allocation2 + $0x8] sm:$0xff] %v186
  %345 = vst [vmem:[#allocation2 + $0x10] sm:$0xff] %v297
  %346 = vst [vmem:[#allocation2 + $0x18] sm:$0xff] %v299
  %347 = vst [vmem:[#allocation2 + $0x20] sm:$0xff] %v190
  %348 = vst [vmem:[#allocation2 + $0x28] sm:$0xff] %v192
  %349 = vst [vmem:[#allocation2 + $0x30] sm:$0xff] %v303
  %350 = vst [vmem:[#allocation2 + $0x38] sm:$0xff] %v305
  %351 = vst [vmem:[#allocation2 + $0x40] sm:$0xff] %v196
  %352 = vst [vmem:[#allocation2 + $0x48] sm:$0xff] %v198
  %353 = vst [vmem:[#allocation2 + $0x50] sm:$0xff] %v309
  %354 = vst [vmem:[#allocation2 + $0x58] sm:$0xff] %v311
  %355 = vst [vmem:[#allocation2 + $0x60] sm:$0xff] %v202
  %356 = vst [vmem:[#allocation2 + $0x68] sm:$0xff] %v204
  %357 = vst [vmem:[#allocation2 + $0x70] sm:$0xff] %v315
  %358 = vst [vmem:[#allocation2 + $0x78] sm:$0xff] %v317
  %359 = vst [vmem:[#allocation2 + $0x80] sm:$0xff] %v208
  %360 = vst [vmem:[#allocation2 + $0x88] sm:$0xff] %v210
  %361 = vst [vmem:[#allocation2 + $0x90] sm:$0xff] %v321
  %362 = vst [vmem:[#allocation2 + $0x98] sm:$0xff] %v323
  %363 = vst [vmem:[#allocation2 + $0xa0] sm:$0xff] %v214
  %364 = vst [vmem:[#allocation2 + $0xa8] sm:$0xff] %v216
  %365 = vst [vmem:[#allocation2 + $0xb0] sm:$0xff] %v327
  %366 = vst [vmem:[#allocation2 + $0xb8] sm:$0xff] %v329
  %367 = vst [vmem:[#allocation2 + $0xc0] sm:$0xff] %v220
  %368 = vst [vmem:[#allocation2 + $0xc8] sm:$0xff] %v222
  %369 = vst [vmem:[#allocation2 + $0xd0] sm:$0xff] %v333
  %370 = vst [vmem:[#allocation2 + $0xd8] sm:$0xff] %v335
  %371 = vst [vmem:[#allocation2 + $0xe0] sm:$0xff] %v226
  %372 = vst [vmem:[#allocation2 + $0xe8] sm:$0xff] %v228
  %373 = vst [vmem:[#allocation2 + $0xf0] sm:$0xff] %v339
  %374 = vst [vmem:[#allocation2 + $0xf8] sm:$0xff] %v341
  %v375 = vlaneseq
  %v376 = vand.u32 %v375, 127
  %v377 = vadd.s32 %v376, 128
  %v378 = vadd.s32 %v376, 256
  %v379 = vadd.s32 %v376, 384
  %vm380 = vcmp.lt.s32.totalorder %v376, 0
  %v381 = vsub.s32 0, %v376
  %v382 = vsel %vm380, %v381, %v376
  %v383 = vshrl.u32 %v382, 7
  %v384 = vand.u32 %v382, 127
  %v385 = vsub.s32 0, %v384
  %v386 = vsel %vm380, %v385, %v384
  %vm387 = vcmp.lt.s32.totalorder %v377, 0
  %v388 = vsub.s32 0, %v377
  %v389 = vsel %vm387, %v388, %v377
  %v390 = vshrl.u32 %v389, 7
  %v391 = vand.u32 %v389, 127
  %v392 = vsub.s32 0, %v391
  %v393 = vsel %vm387, %v392, %v391
  %vm394 = vcmp.lt.s32.totalorder %v378, 0
  %v395 = vsub.s32 0, %v378
  %v396 = vsel %vm394, %v395, %v378
  %v397 = vshrl.u32 %v396, 7
  %v398 = vand.u32 %v396, 127
  %v399 = vsub.s32 0, %v398
  %v400 = vsel %vm394, %v399, %v398
  %vm401 = vcmp.lt.s32.totalorder %v379, 0
  %v402 = vsub.s32 0, %v379
  %v403 = vsel %vm401, %v402, %v379
  %v404 = vshrl.u32 %v403, 7
  %v405 = vand.u32 %v403, 127
  %v406 = vsub.s32 0, %v405
  %v407 = vsel %vm401, %v406, %v405
  %vm408 = vcmp.ne.s32.totalorder %v386, 0
  %vm409 = vcmp.ne.s32.totalorder %v393, 0
  %vm410 = vcmp.ne.s32.totalorder %v400, 0
  %vm411 = vcmp.ne.s32.totalorder %v407, 0
  %vm412 = vcmp.lt.s32.totalorder %v386, 0
  %vm413 = vcmp.lt.s32.totalorder %v393, 0
  %vm414 = vcmp.lt.s32.totalorder %v400, 0
  %vm415 = vcmp.lt.s32.totalorder %v407, 0
  %vm416 = vmand %vm412, %vm408
  %vm417 = vmand %vm413, %vm409
  %vm418 = vmand %vm414, %vm410
  %vm419 = vmand %vm415, %vm411
  %v420 = vadd.s32 %v386, 128
  %v421 = vadd.s32 %v393, 128
  %v422 = vadd.s32 %v400, 128
  %v423 = vadd.s32 %v407, 128
  %v424 = vsel %vm416, %v420, %v386
  %v425 = vsel %vm417, %v421, %v393
  %v426 = vsel %vm418, %v422, %v400
  %v427 = vsel %vm419, %v423, %v407
  %vm428 = vcmp.lt.s32.totalorder %v424, 64
  %vm429 = vcmp.lt.s32.totalorder %v425, 64
  %vm430 = vcmp.lt.s32.totalorder %v426, 64
  %vm431 = vcmp.lt.s32.totalorder %v427, 64
  %v432 = vld [vmem:[#allocation2] sm:$0xff]
  %v433 = vld [vmem:[#allocation2 + $0x8] sm:$0xff]
  %v434 = vld [vmem:[#allocation2 + $0x10] sm:$0xff]
  %v435 = vld [vmem:[#allocation2 + $0x18] sm:$0xff]
  %s436 = scalar_lea.vmem [#allocation2], 224
  %v437 = vld [vmem:[%s436] sm:$0xff]
  %v438 = vld [vmem:[%s436 + $0x8] sm:$0xff]
  %v439 = vld [vmem:[%s436 + $0x10] sm:$0xff]
  %v440 = vld [vmem:[%s436 + $0x18] sm:$0xff]
  %v441 = vsel %vm428, 1, 0
  %v442 = vsel %vm429, 1, 0
  %v443 = vsel %vm430, 1, 0
  %v444 = vsel %vm431, 1, 0
  %vm445 = vcmp.eq.s32.totalorder %v441, 1
  %vm446 = vcmp.eq.s32.totalorder %v442, 1
  %vm447 = vcmp.eq.s32.totalorder %v443, 1
  %vm448 = vcmp.eq.s32.totalorder %v444, 1
  %v449 = vsel %vm445, %v432, %v437
  %v450 = vsel %vm446, %v433, %v438
  %v451 = vsel %vm447, %v434, %v439
  %v452 = vsel %vm448, %v435, %v440
  %453 = vst [vmem:[#allocation2] sm:$0xff] %v449
  %454 = vst [vmem:[#allocation2 + $0x8] sm:$0xff] %v450
  %455 = vst [vmem:[#allocation2 + $0x10] sm:$0xff] %v451
  %456 = vst [vmem:[#allocation2 + $0x18] sm:$0xff] %v452
  %v457 = vsel %vm445, %v437, %v432
  %v458 = vsel %vm446, %v438, %v433
  %v459 = vsel %vm447, %v439, %v434
  %v460 = vsel %vm448, %v440, %v435
  %461 = vst [vmem:[%s436] sm:$0xff] %v457
  %462 = vst [vmem:[%s436 + $0x8] sm:$0xff] %v458
  %463 = vst [vmem:[%s436 + $0x10] sm:$0xff] %v459
  %464 = vst [vmem:[%s436 + $0x18] sm:$0xff] %v460
  %s465 = scalar_lea.vmem [#allocation2], 32
  %v466 = vld [vmem:[%s465] sm:$0xff]
  %v467 = vld [vmem:[%s465 + $0x8] sm:$0xff]
  %v468 = vld [vmem:[%s465 + $0x10] sm:$0xff]
  %v469 = vld [vmem:[%s465 + $0x18] sm:$0xff]
  %s470 = scalar_lea.vmem [#allocation2], 192
  %v471 = vld [vmem:[%s470] sm:$0xff]
  %v472 = vld [vmem:[%s470 + $0x8] sm:$0xff]
  %v473 = vld [vmem:[%s470 + $0x10] sm:$0xff]
  %v474 = vld [vmem:[%s470 + $0x18] sm:$0xff]
  %v475 = vsel %vm445, %v466, %v471
  %v476 = vsel %vm446, %v467, %v472
  %v477 = vsel %vm447, %v468, %v473
  %v478 = vsel %vm448, %v469, %v474
  %479 = vst [vmem:[%s465] sm:$0xff] %v475
  %480 = vst [vmem:[%s465 + $0x8] sm:$0xff] %v476
  %481 = vst [vmem:[%s465 + $0x10] sm:$0xff] %v477
  %482 = vst [vmem:[%s465 + $0x18] sm:$0xff] %v478
  %v483 = vsel %vm445, %v471, %v466
  %v484 = vsel %vm446, %v472, %v467
  %v485 = vsel %vm447, %v473, %v468
  %v486 = vsel %vm448, %v474, %v469
  %487 = vst [vmem:[%s470] sm:$0xff] %v483
  %488 = vst [vmem:[%s470 + $0x8] sm:$0xff] %v484
  %489 = vst [vmem:[%s470 + $0x10] sm:$0xff] %v485
  %490 = vst [vmem:[%s470 + $0x18] sm:$0xff] %v486
  %s491 = scalar_lea.vmem [#allocation2], 64
  %v492 = vld [vmem:[%s491] sm:$0xff]
  %v493 = vld [vmem:[%s491 + $0x8] sm:$0xff]
  %v494 = vld [vmem:[%s491 + $0x10] sm:$0xff]
  %v495 = vld [vmem:[%s491 + $0x18] sm:$0xff]
  %s496 = scalar_lea.vmem [#allocation2], 160
  %v497 = vld [vmem:[%s496] sm:$0xff]
  %v498 = vld [vmem:[%s496 + $0x8] sm:$0xff]
  %v499 = vld [vmem:[%s496 + $0x10] sm:$0xff]
  %v500 = vld [vmem:[%s496 + $0x18] sm:$0xff]
  %v501 = vsel %vm445, %v492, %v497
  %v502 = vsel %vm446, %v493, %v498
  %v503 = vsel %vm447, %v494, %v499
  %v504 = vsel %vm448, %v495, %v500
  %505 = vst [vmem:[%s491] sm:$0xff] %v501
  %506 = vst [vmem:[%s491 + $0x8] sm:$0xff] %v502
  %507 = vst [vmem:[%s491 + $0x10] sm:$0xff] %v503
  %508 = vst [vmem:[%s491 + $0x18] sm:$0xff] %v504
  %v509 = vsel %vm445, %v497, %v492
  %v510 = vsel %vm446, %v498, %v493
  %v511 = vsel %vm447, %v499, %v494
  %v512 = vsel %vm448, %v500, %v495
  %513 = vst [vmem:[%s496] sm:$0xff] %v509
  %514 = vst [vmem:[%s496 + $0x8] sm:$0xff] %v510
  %515 = vst [vmem:[%s496 + $0x10] sm:$0xff] %v511
  %516 = vst [vmem:[%s496 + $0x18] sm:$0xff] %v512
  %s517 = scalar_lea.vmem [#allocation2], 96
  %v518 = vld [vmem:[%s517] sm:$0xff]
  %v519 = vld [vmem:[%s517 + $0x8] sm:$0xff]
  %v520 = vld [vmem:[%s517 + $0x10] sm:$0xff]
  %v521 = vld [vmem:[%s517 + $0x18] sm:$0xff]
  %s522 = scalar_lea.vmem [#allocation2], 128
  %v523 = vld [vmem:[%s522] sm:$0xff]
  %v524 = vld [vmem:[%s522 + $0x8] sm:$0xff]
  %v525 = vld [vmem:[%s522 + $0x10] sm:$0xff]
  %v526 = vld [vmem:[%s522 + $0x18] sm:$0xff]
  %v527 = vsel %vm445, %v518, %v523
  %v528 = vsel %vm446, %v519, %v524
  %v529 = vsel %vm447, %v520, %v525
  %v530 = vsel %vm448, %v521, %v526
  %531 = vst [vmem:[%s517] sm:$0xff] %v527
  %532 = vst [vmem:[%s517 + $0x8] sm:$0xff] %v528
  %533 = vst [vmem:[%s517 + $0x10] sm:$0xff] %v529
  %534 = vst [vmem:[%s517 + $0x18] sm:$0xff] %v530
  %v535 = vsel %vm445, %v523, %v518
  %v536 = vsel %vm446, %v524, %v519
  %v537 = vsel %vm447, %v525, %v520
  %v538 = vsel %vm448, %v526, %v521
  %539 = vst [vmem:[%s522] sm:$0xff] %v535
  %540 = vst [vmem:[%s522 + $0x8] sm:$0xff] %v536
  %541 = vst [vmem:[%s522 + $0x10] sm:$0xff] %v537
  %542 = vst [vmem:[%s522 + $0x18] sm:$0xff] %v538
  %v543 = vld [vmem:[%s3] sm:$0xff]
  %v544 = vld [vmem:[%s3 + $0x8] sm:$0xff]
  %v545 = vld [vmem:[%s3 + $0x10] sm:$0xff]
  %v546 = vld [vmem:[%s3 + $0x18] sm:$0xff]
  %v547 = vld [vmem:[%s3 + $0x20] sm:$0xff]
  %v548 = vld [vmem:[%s3 + $0x28] sm:$0xff]
  %v549 = vld [vmem:[%s3 + $0x30] sm:$0xff]
  %v550 = vld [vmem:[%s3 + $0x38] sm:$0xff]
  %v551 = vld [vmem:[%s3 + $0x40] sm:$0xff]
  %v552 = vld [vmem:[%s3 + $0x48] sm:$0xff]
  %v553 = vld [vmem:[%s3 + $0x50] sm:$0xff]
  %v554 = vld [vmem:[%s3 + $0x58] sm:$0xff]
  %v555 = vld [vmem:[%s3 + $0x60] sm:$0xff]
  %v556 = vld [vmem:[%s3 + $0x68] sm:$0xff]
  %v557 = vld [vmem:[%s3 + $0x70] sm:$0xff]
  %v558 = vld [vmem:[%s3 + $0x78] sm:$0xff]
  %v559 = vld [vmem:[%s3 + $0x80] sm:$0xff]
  %v560 = vld [vmem:[%s3 + $0x88] sm:$0xff]
  %v561 = vld [vmem:[%s3 + $0x90] sm:$0xff]
  %v562 = vld [vmem:[%s3 + $0x98] sm:$0xff]
  %v563 = vld [vmem:[%s3 + $0xa0] sm:$0xff]
  %v564 = vld [vmem:[%s3 + $0xa8] sm:$0xff]
  %v565 = vld [vmem:[%s3 + $0xb0] sm:$0xff]
  %v566 = vld [vmem:[%s3 + $0xb8] sm:$0xff]
  %v567 = vld [vmem:[%s3 + $0xc0] sm:$0xff]
  %v568 = vld [vmem:[%s3 + $0xc8] sm:$0xff]
  %v569 = vld [vmem:[%s3 + $0xd0] sm:$0xff]
  %v570 = vld [vmem:[%s3 + $0xd8] sm:$0xff]
  %v571 = vld [vmem:[%s3 + $0xe0] sm:$0xff]
  %v572 = vld [vmem:[%s3 + $0xe8] sm:$0xff]
  %v573 = vld [vmem:[%s3 + $0xf0] sm:$0xff]
  %v574 = vld [vmem:[%s3 + $0xf8] sm:$0xff]
  %v575 = vld [vmem:[%s3 + $0x100] sm:$0xff]
  %v576 = vld [vmem:[%s3 + $0x108] sm:$0xff]
  %v577 = vld [vmem:[%s3 + $0x110] sm:$0xff]
  %v578 = vld [vmem:[%s3 + $0x118] sm:$0xff]
  %v579 = vld [vmem:[%s3 + $0x120] sm:$0xff]
  %v580 = vld [vmem:[%s3 + $0x128] sm:$0xff]
  %v581 = vld [vmem:[%s3 + $0x130] sm:$0xff]
  %v582 = vld [vmem:[%s3 + $0x138] sm:$0xff]
  %v583 = vld [vmem:[%s3 + $0x140] sm:$0xff]
  %v584 = vld [vmem:[%s3 + $0x148] sm:$0xff]
  %v585 = vld [vmem:[%s3 + $0x150] sm:$0xff]
  %v586 = vld [vmem:[%s3 + $0x158] sm:$0xff]
  %v587 = vld [vmem:[%s3 + $0x160] sm:$0xff]
  %v588 = vld [vmem:[%s3 + $0x168] sm:$0xff]
  %v589 = vld [vmem:[%s3 + $0x170] sm:$0xff]
  %v590 = vld [vmem:[%s3 + $0x178] sm:$0xff]
  %v591 = vld [vmem:[%s3 + $0x180] sm:$0xff]
  %v592 = vld [vmem:[%s3 + $0x188] sm:$0xff]
  %v593 = vld [vmem:[%s3 + $0x190] sm:$0xff]
  %v594 = vld [vmem:[%s3 + $0x198] sm:$0xff]
  %v595 = vld [vmem:[%s3 + $0x1a0] sm:$0xff]
  %v596 = vld [vmem:[%s3 + $0x1a8] sm:$0xff]
  %v597 = vld [vmem:[%s3 + $0x1b0] sm:$0xff]
  %v598 = vld [vmem:[%s3 + $0x1b8] sm:$0xff]
  %v599 = vld [vmem:[%s3 + $0x1c0] sm:$0xff]
  %v600 = vld [vmem:[%s3 + $0x1c8] sm:$0xff]
  %v601 = vld [vmem:[%s3 + $0x1d0] sm:$0xff]
  %v602 = vld [vmem:[%s3 + $0x1d8] sm:$0xff]
  %v603 = vld [vmem:[%s3 + $0x1e0] sm:$0xff]
  %v604 = vld [vmem:[%s3 + $0x1e8] sm:$0xff]
  %v605 = vld [vmem:[%s3 + $0x1f0] sm:$0xff]
  %v606 = vld [vmem:[%s3 + $0x1f8] sm:$0xff]
  %v607 = vld [vmem:[#allocation2] sm:$0xff]
  %v608 = vld [vmem:[#allocation2 + $0x8] sm:$0xff]
  %v609 = vld [vmem:[#allocation2 + $0x10] sm:$0xff]
  %v610 = vld [vmem:[#allocation2 + $0x18] sm:$0xff]
  %611 = vmatprep.subr.mxu0 %v544
  %612 = vmatpush1.msra.mxu0 %v543
  %613 = vmatprep.subr.mxu0 %v548
  %614 = vmatpush1.msra.mxu0 %v547
  %615 = vmatprep.subr.mxu0 %v552
  %616 = vmatpush1.msra.mxu0 %v551
  %617 = vmatprep.subr.mxu0 %v556
  %618 = vmatpush1.msra.mxu0 %v555
  %619 = vmatprep.subr.mxu0 %v560
  %620 = vmatpush1.msra.mxu0 %v559
  %621 = vmatprep.subr.mxu0 %v564
  %622 = vmatpush1.msra.mxu0 %v563
  %623 = vmatprep.subr.mxu0 %v568
  %624 = vmatpush1.msra.mxu0 %v567
  %625 = vmatprep.subr.mxu0 %v572
  %626 = vmatpush1.msra.mxu0 %v571
  %627 = vmatprep.subr.mxu0 %v576
  %628 = vmatpush1.msra.mxu0 %v575
  %629 = vmatprep.subr.mxu0 %v580
  %630 = vmatpush1.msra.mxu0 %v579
  %631 = vmatprep.subr.mxu0 %v584
  %632 = vmatpush1.msra.mxu0 %v583
  %633 = vmatprep.subr.mxu0 %v588
  %634 = vmatpush1.msra.mxu0 %v587
  %635 = vmatprep.subr.mxu0 %v592
  %636 = vmatpush1.msra.mxu0 %v591
  %637 = vmatprep.subr.mxu0 %v596
  %638 = vmatpush1.msra.mxu0 %v595
  %639 = vmatprep.subr.mxu0 %v600
  %640 = vmatpush1.msra.mxu0 %v599
  %641 = vmatprep.subr.mxu0 %v604
  %642 = vmatpush1.msra.mxu0 %v603
  %643 = vmatprep.subr.mxu0 0.0
  %644 = vmatpush1.msra.mxu0 0.0
  %645 = vmatprep.subr.mxu0 0.0
  %646 = vmatpush1.msra.mxu0 0.0
  %647 = vmatprep.subr.mxu0 0.0
  %648 = vmatpush1.msra.mxu0 0.0
  %649 = vmatprep.subr.mxu0 0.0
  %650 = vmatpush1.msra.mxu0 0.0
  %651 = vmatprep.subr.mxu0 0.0
  %652 = vmatpush1.msra.mxu0 0.0
  %653 = vmatprep.subr.mxu0 0.0
  %654 = vmatpush1.msra.mxu0 0.0
  %655 = vmatprep.subr.mxu0 0.0
  %656 = vmatpush1.msra.mxu0 0.0
  %657 = vmatprep.subr.mxu0 0.0
  %658 = vmatpush1.msra.mxu0 0.0
  %659 = vmatprep.subr.mxu0 0.0
  %660 = vmatpush1.msra.mxu0 0.0
  %661 = vmatprep.subr.mxu0 0.0
  %662 = vmatpush1.msra.mxu0 0.0
  %663 = vmatprep.subr.mxu0 0.0
  %664 = vmatpush1.msra.mxu0 0.0
  %665 = vmatprep.subr.mxu0 0.0
  %666 = vmatpush1.msra.mxu0 0.0
  %667 = vmatprep.subr.mxu0 0.0
  %668 = vmatpush1.msra.mxu0 0.0
  %669 = vmatprep.subr.mxu0 0.0
  %670 = vmatpush1.msra.mxu0 0.0
  %671 = vmatprep.subr.mxu0 0.0
  %672 = vmatpush1.msra.mxu0 0.0
  %673 = vmatprep.subr.mxu0 0.0
  %674 = vmatpush1.msra.mxu0 0.0
  %675 = vmatprep.mubr.f32.mxu0 0.0
  %676 = vmatmul.mubr.f32.gmra.mrb[0].mxu0 0.0
  %v677 = vpop.f32.mrb[0].mxu0
  %v678 = vadd.f32 0.0, %v677
  %v679 = vpop.f32.mrb[0].mxu0
  %v680 = vadd.f32 0.0, %v679
  %681 = vdwg.mxu0
  %682 = vmatprep.subr.mxu0 %v546
  %683 = vmatpush1.msra.mxu0 %v545
  %684 = vmatprep.subr.mxu0 %v550
  %685 = vmatpush1.msra.mxu0 %v549
  %686 = vmatprep.subr.mxu0 %v554
  %687 = vmatpush1.msra.mxu0 %v553
  %688 = vmatprep.subr.mxu0 %v558
  %689 = vmatpush1.msra.mxu0 %v557
  %690 = vmatprep.subr.mxu0 %v562
  %691 = vmatpush1.msra.mxu0 %v561
  %692 = vmatprep.subr.mxu0 %v566
  %693 = vmatpush1.msra.mxu0 %v565
  %694 = vmatprep.subr.mxu0 %v570
  %695 = vmatpush1.msra.mxu0 %v569
  %696 = vmatprep.subr.mxu0 %v574
  %697 = vmatpush1.msra.mxu0 %v573
  %698 = vmatprep.subr.mxu0 %v578
  %699 = vmatpush1.msra.mxu0 %v577
  %700 = vmatprep.subr.mxu0 %v582
  %701 = vmatpush1.msra.mxu0 %v581
  %702 = vmatprep.subr.mxu0 %v586
  %703 = vmatpush1.msra.mxu0 %v585
  %704 = vmatprep.subr.mxu0 %v590
  %705 = vmatpush1.msra.mxu0 %v589
  %706 = vmatprep.subr.mxu0 %v594
  %707 = vmatpush1.msra.mxu0 %v593
  %708 = vmatprep.subr.mxu0 %v598
  %709 = vmatpush1.msra.mxu0 %v597
  %710 = vmatprep.subr.mxu0 %v602
  %711 = vmatpush1.msra.mxu0 %v601
  %712 = vmatprep.subr.mxu0 %v606
  %713 = vmatpush1.msra.mxu0 %v605
  %714 = vmatprep.subr.mxu0 0.0
  %715 = vmatpush1.msra.mxu0 0.0
  %716 = vmatprep.subr.mxu0 0.0
  %717 = vmatpush1.msra.mxu0 0.0
  %718 = vmatprep.subr.mxu0 0.0
  %719 = vmatpush1.msra.mxu0 0.0
  %720 = vmatprep.subr.mxu0 0.0
  %721 = vmatpush1.msra.mxu0 0.0
  %722 = vmatprep.subr.mxu0 0.0
  %723 = vmatpush1.msra.mxu0 0.0
  %724 = vmatprep.subr.mxu0 0.0
  %725 = vmatpush1.msra.mxu0 0.0
  %726 = vmatprep.subr.mxu0 0.0
  %727 = vmatpush1.msra.mxu0 0.0
  %728 = vmatprep.subr.mxu0 0.0
  %729 = vmatpush1.msra.mxu0 0.0
  %730 = vmatprep.subr.mxu0 0.0
  %731 = vmatpush1.msra.mxu0 0.0
  %732 = vmatprep.subr.mxu0 0.0
  %733 = vmatpush1.msra.mxu0 0.0
  %734 = vmatprep.subr.mxu0 0.0
  %735 = vmatpush1.msra.mxu0 0.0
  %736 = vmatprep.subr.mxu0 0.0
  %737 = vmatpush1.msra.mxu0 0.0
  %738 = vmatprep.subr.mxu0 0.0
  %739 = vmatpush1.msra.mxu0 0.0
  %740 = vmatprep.subr.mxu0 0.0
  %741 = vmatpush1.msra.mxu0 0.0
  %742 = vmatprep.subr.mxu0 0.0
  %743 = vmatpush1.msra.mxu0 0.0
  %744 = vmatprep.subr.mxu0 0.0
  %745 = vmatpush1.msra.mxu0 0.0
  %746 = vmatprep.mubr.f32.mxu0 0.0
  %747 = vmatmul.mubr.f32.gmra.mrb[0].mxu0 0.0
  %v748 = vpop.f32.mrb[0].mxu0
  %v749 = vadd.f32 0.0, %v748
  %v750 = vpop.f32.mrb[0].mxu0
  %v751 = vadd.f32 0.0, %v750
  %752 = vdwg.mxu0
  %v753 = vadd.f32 %v607, %v678
  %v754 = vadd.f32 %v608, %v680
  %v755 = vadd.f32 %v609, %v749
  %v756 = vadd.f32 %v610, %v751
  %v757 = vxor.u32 %v753, 2147483648
  %v758 = vmul.f32 %v757, 1.442695
  %v759 = vpow.pop %v758
  %v760 = vadd.f32 %v759, 1.0
  %v761 = vrcp.pop %v760
  %v762 = vmul.f32 1.0, %v761
  %v763 = vxor.u32 %v754, 2147483648
  %v764 = vmul.f32 %v763, 1.442695
  %v765 = vpow.pop %v764
  %v766 = vadd.f32 %v765, 1.0
  %v767 = vrcp.pop %v766
  %v768 = vmul.f32 1.0, %v767
  %v769 = vtanh.pop %v755
  %v770 = vxor.u32 %v756, 2147483648
  %v771 = vmul.f32 %v770, 1.442695
  %v772 = vpow.pop %v771
  %v773 = vadd.f32 %v772, 1.0
  %v774 = vrcp.pop %v773
  %v775 = vmul.f32 1.0, %v774
  %v776 = vmul.f32 %v768, 0.0
  %v777 = vmul.f32 %v762, %v769
  %v778 = vadd.f32 %v776, %v777
  %v779 = vtanh.pop %v778
  %v780 = vmul.f32 %v775, %v779
  %v781 = vld [vmem:[%s465] sm:$0xff]
  %v782 = vld [vmem:[%s465 + $0x8] sm:$0xff]
  %v783 = vld [vmem:[%s465 + $0x10] sm:$0xff]
  %v784 = vld [vmem:[%s465 + $0x18] sm:$0xff]
  %785 = vmatprep.subr.mxu0 %v544
  %786 = vmatpush1.msra.mxu0 %v543
  %787 = vmatprep.subr.mxu0 %v548
  %788 = vmatpush1.msra.mxu0 %v547
  %789 = vmatprep.subr.mxu0 %v552
  %790 = vmatpush1.msra.mxu0 %v551
  %791 = vmatprep.subr.mxu0 %v556
  %792 = vmatpush1.msra.mxu0 %v555
  %793 = vmatprep.subr.mxu0 %v560
  %794 = vmatpush1.msra.mxu0 %v559
  %795 = vmatprep.subr.mxu0 %v564
  %796 = vmatpush1.msra.mxu0 %v563
  %797 = vmatprep.subr.mxu0 %v568
  %798 = vmatpush1.msra.mxu0 %v567
  %799 = vmatprep.subr.mxu0 %v572
  %800 = vmatpush1.msra.mxu0 %v571
  %801 = vmatprep.subr.mxu0 %v576
  %802 = vmatpush1.msra.mxu0 %v575
  %803 = vmatprep.subr.mxu0 %v580
  %804 = vmatpush1.msra.mxu0 %v579
  %805 = vmatprep.subr.mxu0 %v584
  %806 = vmatpush1.msra.mxu0 %v583
  %807 = vmatprep.subr.mxu0 %v588
  %808 = vmatpush1.msra.mxu0 %v587
  %809 = vmatprep.subr.mxu0 %v592
  %810 = vmatpush1.msra.mxu0 %v591
  %811 = vmatprep.subr.mxu0 %v596
  %812 = vmatpush1.msra.mxu0 %v595
  %813 = vmatprep.subr.mxu0 %v600
  %814 = vmatpush1.msra.mxu0 %v599
  %815 = vmatprep.subr.mxu0 %v604
  %816 = vmatpush1.msra.mxu0 %v603
  %817 = vmatprep.subr.mxu0 0.0
  %818 = vmatpush1.msra.mxu0 0.0
  %819 = vmatprep.subr.mxu0 0.0
  %820 = vmatpush1.msra.mxu0 0.0
  %821 = vmatprep.subr.mxu0 0.0
  %822 = vmatpush1.msra.mxu0 0.0
  %823 = vmatprep.subr.mxu0 0.0
  %824 = vmatpush1.msra.mxu0 0.0
  %825 = vmatprep.subr.mxu0 0.0
  %826 = vmatpush1.msra.mxu0 0.0
  %827 = vmatprep.subr.mxu0 0.0
  %828 = vmatpush1.msra.mxu0 0.0
  %829 = vmatprep.subr.mxu0 0.0
  %830 = vmatpush1.msra.mxu0 0.0
  %831 = vmatprep.subr.mxu0 0.0
  %832 = vmatpush1.msra.mxu0 0.0
  %833 = vmatprep.subr.mxu0 0.0
  %834 = vmatpush1.msra.mxu0 0.0
  %835 = vmatprep.subr.mxu0 0.0
  %836 = vmatpush1.msra.mxu0 0.0
  %837 = vmatprep.subr.mxu0 0.0
  %838 = vmatpush1.msra.mxu0 0.0
  %839 = vmatprep.subr.mxu0 0.0
  %840 = vmatpush1.msra.mxu0 0.0
  %841 = vmatprep.subr.mxu0 0.0
  %842 = vmatpush1.msra.mxu0 0.0
  %843 = vmatprep.subr.mxu0 0.0
  %844 = vmatpush1.msra.mxu0 0.0
  %845 = vmatprep.subr.mxu0 0.0
  %846 = vmatpush1.msra.mxu0 0.0
  %847 = vmatprep.subr.mxu0 0.0
  %848 = vmatpush1.msra.mxu0 0.0
  %849 = vmatprep.mubr.f32.mxu0 0.0
  %850 = vmatmul.mubr.f32.gmra.mrb[0].mxu0 %v780
  %v851 = vpop.f32.mrb[0].mxu0
  %v852 = vadd.f32 0.0, %v851
  %v853 = vpop.f32.mrb[0].mxu0
  %v854 = vadd.f32 0.0, %v853
  %855 = vdwg.mxu0
  %856 = vmatprep.subr.mxu0 %v546
  %857 = vmatpush1.msra.mxu0 %v545
  %858 = vmatprep.subr.mxu0 %v550
  %859 = vmatpush1.msra.mxu0 %v549
  %860 = vmatprep.subr.mxu0 %v554
  %861 = vmatpush1.msra.mxu0 %v553
  %862 = vmatprep.subr.mxu0 %v558
  %863 = vmatpush1.msra.mxu0 %v557
  %864 = vmatprep.subr.mxu0 %v562
  %865 = vmatpush1.msra.mxu0 %v561
  %866 = vmatprep.subr.mxu0 %v566
  %867 = vmatpush1.msra.mxu0 %v565
  %868 = vmatprep.subr.mxu0 %v570
  %869 = vmatpush1.msra.mxu0 %v569
  %870 = vmatprep.subr.mxu0 %v574
  %871 = vmatpush1.msra.mxu0 %v573
  %872 = vmatprep.subr.mxu0 %v578
  %873 = vmatpush1.msra.mxu0 %v577
  %874 = vmatprep.subr.mxu0 %v582
  %875 = vmatpush1.msra.mxu0 %v581
  %876 = vmatprep.subr.mxu0 %v586
  %877 = vmatpush1.msra.mxu0 %v585
  %878 = vmatprep.subr.mxu0 %v590
  %879 = vmatpush1.msra.mxu0 %v589
  %880 = vmatprep.subr.mxu0 %v594
  %881 = vmatpush1.msra.mxu0 %v593
  %882 = vmatprep.subr.mxu0 %v598
  %883 = vmatpush1.msra.mxu0 %v597
  %884 = vmatprep.subr.mxu0 %v602
  %885 = vmatpush1.msra.mxu0 %v601
  %886 = vmatprep.subr.mxu0 %v606
  %887 = vmatpush1.msra.mxu0 %v605
  %888 = vmatprep.subr.mxu0 0.0
  %889 = vmatpush1.msra.mxu0 0.0
  %890 = vmatprep.subr.mxu0 0.0
  %891 = vmatpush1.msra.mxu0 0.0
  %892 = vmatprep.subr.mxu0 0.0
  %893 = vmatpush1.msra.mxu0 0.0
  %894 = vmatprep.subr.mxu0 0.0
  %895 = vmatpush1.msra.mxu0 0.0
  %896 = vmatprep.subr.mxu0 0.0
  %897 = vmatpush1.msra.mxu0 0.0
  %898 = vmatprep.subr.mxu0 0.0
  %899 = vmatpush1.msra.mxu0 0.0
  %900 = vmatprep.subr.mxu0 0.0
  %901 = vmatpush1.msra.mxu0 0.0
  %902 = vmatprep.subr.mxu0 0.0
  %903 = vmatpush1.msra.mxu0 0.0
  %904 = vmatprep.subr.mxu0 0.0
  %905 = vmatpush1.msra.mxu0 0.0
  %906 = vmatprep.subr.mxu0 0.0
  %907 = vmatpush1.msra.mxu0 0.0
  %908 = vmatprep.subr.mxu0 0.0
  %909 = vmatpush1.msra.mxu0 0.0
  %910 = vmatprep.subr.mxu0 0.0
  %911 = vmatpush1.msra.mxu0 0.0
  %912 = vmatprep.subr.mxu0 0.0
  %913 = vmatpush1.msra.mxu0 0.0
  %914 = vmatprep.subr.mxu0 0.0
  %915 = vmatpush1.msra.mxu0 0.0
  %916 = vmatprep.subr.mxu0 0.0
  %917 = vmatpush1.msra.mxu0 0.0
  %918 = vmatprep.subr.mxu0 0.0
  %919 = vmatpush1.msra.mxu0 0.0
  %920 = vmatprep.mubr.f32.mxu0 0.0
  %921 = vmatmul.mubr.f32.gmra.mrb[0].mxu0 %v780
  %v922 = vpop.f32.mrb[0].mxu0
  %v923 = vadd.f32 0.0, %v922
  %v924 = vpop.f32.mrb[0].mxu0
  %v925 = vadd.f32 0.0, %v924
  %926 = vdwg.mxu0
  %v927 = vadd.f32 %v781, %v852
  %v928 = vadd.f32 %v782, %v854
  %v929 = vadd.f32 %v783, %v923
  %v930 = vadd.f32 %v784, %v925
  %v931 = vxor.u32 %v927, 2147483648
  %v932 = vmul.f32 %v931, 1.442695
  %v933 = vpow.pop %v932
  %v934 = vadd.f32 %v933, 1.0
  %v935 = vrcp.pop %v934
  %v936 = vmul.f32 1.0, %v935
  %v937 = vxor.u32 %v928, 2147483648
  %v938 = vmul.f32 %v937, 1.442695
  %v939 = vpow.pop %v938
  %v940 = vadd.f32 %v939, 1.0
  %v941 = vrcp.pop %v940
  %v942 = vmul.f32 1.0, %v941
  %v943 = vtanh.pop %v929
  %v944 = vxor.u32 %v930, 2147483648
  %v945 = vmul.f32 %v944, 1.442695
  %v946 = vpow.pop %v945
  %v947 = vadd.f32 %v946, 1.0
  %v948 = vrcp.pop %v947
  %v949 = vmul.f32 1.0, %v948
  %v950 = vmul.f32 %v942, %v778
  %v951 = vmul.f32 %v936, %v943
  %v952 = vadd.f32 %v950, %v951
  %v953 = vtanh.pop %v952
  %v954 = vmul.f32 %v949, %v953
  %v955 = vld [vmem:[%s491] sm:$0xff]
  %v956 = vld [vmem:[%s491 + $0x8] sm:$0xff]
  %v957 = vld [vmem:[%s491 + $0x10] sm:$0xff]
  %v958 = vld [vmem:[%s491 + $0x18] sm:$0xff]
  %959 = vmatprep.subr.mxu0 %v544
  %960 = vmatpush1.msra.mxu0 %v543
  %961 = vmatprep.subr.mxu0 %v548
  %962 = vmatpush1.msra.mxu0 %v547
  %963 = vmatprep.subr.mxu0 %v552
  %964 = vmatpush1.msra.mxu0 %v551
  %965 = vmatprep.subr.mxu0 %v556
  %966 = vmatpush1.msra.mxu0 %v555
  %967 = vmatprep.subr.mxu0 %v560
  %968 = vmatpush1.msra.mxu0 %v559
  %969 = vmatprep.subr.mxu0 %v564
  %970 = vmatpush1.msra.mxu0 %v563
  %971 = vmatprep.subr.mxu0 %v568
  %972 = vmatpush1.msra.mxu0 %v567
  %973 = vmatprep.subr.mxu0 %v572
  %974 = vmatpush1.msra.mxu0 %v571
  %975 = vmatprep.subr.mxu0 %v576
  %976 = vmatpush1.msra.mxu0 %v575
  %977 = vmatprep.subr.mxu0 %v580
  %978 = vmatpush1.msra.mxu0 %v579
  %979 = vmatprep.subr.mxu0 %v584
  %980 = vmatpush1.msra.mxu0 %v583
  %981 = vmatprep.subr.mxu0 %v588
  %982 = vmatpush1.msra.mxu0 %v587
  %983 = vmatprep.subr.mxu0 %v592
  %984 = vmatpush1.msra.mxu0 %v591
  %985 = vmatprep.subr.mxu0 %v596
  %986 = vmatpush1.msra.mxu0 %v595
  %987 = vmatprep.subr.mxu0 %v600
  %988 = vmatpush1.msra.mxu0 %v599
  %989 = vmatprep.subr.mxu0 %v604
  %990 = vmatpush1.msra.mxu0 %v603
  %991 = vmatprep.subr.mxu0 0.0
  %992 = vmatpush1.msra.mxu0 0.0
  %993 = vmatprep.subr.mxu0 0.0
  %994 = vmatpush1.msra.mxu0 0.0
  %995 = vmatprep.subr.mxu0 0.0
  %996 = vmatpush1.msra.mxu0 0.0
  %997 = vmatprep.subr.mxu0 0.0
  %998 = vmatpush1.msra.mxu0 0.0
  %999 = vmatprep.subr.mxu0 0.0
  %1000 = vmatpush1.msra.mxu0 0.0
  %1001 = vmatprep.subr.mxu0 0.0
  %1002 = vmatpush1.msra.mxu0 0.0
  %1003 = vmatprep.subr.mxu0 0.0
  %1004 = vmatpush1.msra.mxu0 0.0
  %1005 = vmatprep.subr.mxu0 0.0
  %1006 = vmatpush1.msra.mxu0 0.0
  %1007 = vmatprep.subr.mxu0 0.0
  %1008 = vmatpush1.msra.mxu0 0.0
  %1009 = vmatprep.subr.mxu0 0.0
  %1010 = vmatpush1.msra.mxu0 0.0
  %1011 = vmatprep.subr.mxu0 0.0
  %1012 = vmatpush1.msra.mxu0 0.0
  %1013 = vmatprep.subr.mxu0 0.0
  %1014 = vmatpush1.msra.mxu0 0.0
  %1015 = vmatprep.subr.mxu0 0.0
  %1016 = vmatpush1.msra.mxu0 0.0
  %1017 = vmatprep.subr.mxu0 0.0
  %1018 = vmatpush1.msra.mxu0 0.0
  %1019 = vmatprep.subr.mxu0 0.0
  %1020 = vmatpush1.msra.mxu0 0.0
  %1021 = vmatprep.subr.mxu0 0.0
  %1022 = vmatpush1.msra.mxu0 0.0
  %1023 = vmatprep.mubr.f32.mxu0 0.0
  %1024 = vmatmul.mubr.f32.gmra.mrb[0].mxu0 %v954
  %v1025 = vpop.f32.mrb[0].mxu0
  %v1026 = vadd.f32 0.0, %v1025
  %v1027 = vpop.f32.mrb[0].mxu0
  %v1028 = vadd.f32 0.0, %v1027
  %1029 = vdwg.mxu0
  %1030 = vmatprep.subr.mxu0 %v546
  %1031 = vmatpush1.msra.mxu0 %v545
  %1032 = vmatprep.subr.mxu0 %v550
  %1033 = vmatpush1.msra.mxu0 %v549
  %1034 = vmatprep.subr.mxu0 %v554
  %1035 = vmatpush1.msra.mxu0 %v553
  %1036 = vmatprep.subr.mxu0 %v558
  %1037 = vmatpush1.msra.mxu0 %v557
  %1038 = vmatprep.subr.mxu0 %v562
  %1039 = vmatpush1.msra.mxu0 %v561
  %1040 = vmatprep.subr.mxu0 %v566
  %1041 = vmatpush1.msra.mxu0 %v565
  %1042 = vmatprep.subr.mxu0 %v570
  %1043 = vmatpush1.msra.mxu0 %v569
  %1044 = vmatprep.subr.mxu0 %v574
  %1045 = vmatpush1.msra.mxu0 %v573
  %1046 = vmatprep.subr.mxu0 %v578
  %1047 = vmatpush1.msra.mxu0 %v577
  %1048 = vmatprep.subr.mxu0 %v582
  %1049 = vmatpush1.msra.mxu0 %v581
  %1050 = vmatprep.subr.mxu0 %v586
  %1051 = vmatpush1.msra.mxu0 %v585
  %1052 = vmatprep.subr.mxu0 %v590
  %1053 = vmatpush1.msra.mxu0 %v589
  %1054 = vmatprep.subr.mxu0 %v594
  %1055 = vmatpush1.msra.mxu0 %v593
  %1056 = vmatprep.subr.mxu0 %v598
  %1057 = vmatpush1.msra.mxu0 %v597
  %1058 = vmatprep.subr.mxu0 %v602
  %1059 = vmatpush1.msra.mxu0 %v601
  %1060 = vmatprep.subr.mxu0 %v606
  %1061 = vmatpush1.msra.mxu0 %v605
  %1062 = vmatprep.subr.mxu0 0.0
  %1063 = vmatpush1.msra.mxu0 0.0
  %1064 = vmatprep.subr.mxu0 0.0
  %1065 = vmatpush1.msra.mxu0 0.0
  %1066 = vmatprep.subr.mxu0 0.0
  %1067 = vmatpush1.msra.mxu0 0.0
  %1068 = vmatprep.subr.mxu0 0.0
  %1069 = vmatpush1.msra.mxu0 0.0
  %1070 = vmatprep.subr.mxu0 0.0
  %1071 = vmatpush1.msra.mxu0 0.0
  %1072 = vmatprep.subr.mxu0 0.0
  %1073 = vmatpush1.msra.mxu0 0.0
  %1074 = vmatprep.subr.mxu0 0.0
  %1075 = vmatpush1.msra.mxu0 0.0
  %1076 = vmatprep.subr.mxu0 0.0
  %1077 = vmatpush1.msra.mxu0 0.0
  %1078 = vmatprep.subr.mxu0 0.0
  %1079 = vmatpush1.msra.mxu0 0.0
  %1080 = vmatprep.subr.mxu0 0.0
  %1081 = vmatpush1.msra.mxu0 0.0
  %1082 = vmatprep.subr.mxu0 0.0
  %1083 = vmatpush1.msra.mxu0 0.0
  %1084 = vmatprep.subr.mxu0 0.0
  %1085 = vmatpush1.msra.mxu0 0.0
  %1086 = vmatprep.subr.mxu0 0.0
  %1087 = vmatpush1.msra.mxu0 0.0
  %1088 = vmatprep.subr.mxu0 0.0
  %1089 = vmatpush1.msra.mxu0 0.0
  %1090 = vmatprep.subr.mxu0 0.0
  %1091 = vmatpush1.msra.mxu0 0.0
  %1092 = vmatprep.subr.mxu0 0.0
  %1093 = vmatpush1.msra.mxu0 0.0
  %1094 = vmatprep.mubr.f32.mxu0 0.0
  %1095 = vmatmul.mubr.f32.gmra.mrb[0].mxu0 %v954
  %v1096 = vpop.f32.mrb[0].mxu0
  %v1097 = vadd.f32 0.0, %v1096
  %v1098 = vpop.f32.mrb[0].mxu0
  %v1099 = vadd.f32 0.0, %v1098
  %1100 = vdwg.mxu0
  %v1101 = vadd.f32 %v955, %v1026
  %v1102 = vadd.f32 %v956, %v1028
  %v1103 = vadd.f32 %v957, %v1097
  %v1104 = vadd.f32 %v958, %v1099
  %v1105 = vxor.u32 %v1101, 2147483648
  %v1106 = vmul.f32 %v1105, 1.442695
  %v1107 = vpow.pop %v1106
  %v1108 = vadd.f32 %v1107, 1.0
  %v1109 = vrcp.pop %v1108
  %v1110 = vmul.f32 1.0, %v1109
  %v1111 = vxor.u32 %v1102, 2147483648
  %v1112 = vmul.f32 %v1111, 1.442695
  %v1113 = vpow.pop %v1112
  %v1114 = vadd.f32 %v1113, 1.0
  %v1115 = vrcp.pop %v1114
  %v1116 = vmul.f32 1.0, %v1115
  %v1117 = vtanh.pop %v1103
  %v1118 = vxor.u32 %v1104, 2147483648
  %v1119 = vmul.f32 %v1118, 1.442695
  %v1120 = vpow.pop %v1119
  %v1121 = vadd.f32 %v1120, 1.0
  %v1122 = vrcp.pop %v1121
  %v1123 = vmul.f32 1.0, %v1122
  %v1124 = vmul.f32 %v1116, %v952
  %v1125 = vmul.f32 %v1110, %v1117
  %v1126 = vadd.f32 %v1124, %v1125
  %v1127 = vtanh.pop %v1126
  %v1128 = vmul.f32 %v1123, %v1127
  %v1129 = vld [vmem:[%s517] sm:$0xff]
  %v1130 = vld [vmem:[%s517 + $0x8] sm:$0xff]
  %v1131 = vld [vmem:[%s517 + $0x10] sm:$0xff]
  %v1132 = vld [vmem:[%s517 + $0x18] sm:$0xff]
  %1133 = vmatprep.subr.mxu0 %v544
  %1134 = vmatpush1.msra.mxu0 %v543
  %1135 = vmatprep.subr.mxu0 %v548
  %1136 = vmatpush1.msra.mxu0 %v547
  %1137 = vmatprep.subr.mxu0 %v552
  %1138 = vmatpush1.msra.mxu0 %v551
  %1139 = vmatprep.subr.mxu0 %v556
  %1140 = vmatpush1.msra.mxu0 %v555
  %1141 = vmatprep.subr.mxu0 %v560
  %1142 = vmatpush1.msra.mxu0 %v559
  %1143 = vmatprep.subr.mxu0 %v564
  %1144 = vmatpush1.msra.mxu0 %v563
  %1145 = vmatprep.subr.mxu0 %v568
  %1146 = vmatpush1.msra.mxu0 %v567
  %1147 = vmatprep.subr.mxu0 %v572
  %1148 = vmatpush1.msra.mxu0 %v571
  %1149 = vmatprep.subr.mxu0 %v576
  %1150 = vmatpush1.msra.mxu0 %v575
  %1151 = vmatprep.subr.mxu0 %v580
  %1152 = vmatpush1.msra.mxu0 %v579
  %1153 = vmatprep.subr.mxu0 %v584
  %1154 = vmatpush1.msra.mxu0 %v583
  %1155 = vmatprep.subr.mxu0 %v588
  %1156 = vmatpush1.msra.mxu0 %v587
  %1157 = vmatprep.subr.mxu0 %v592
  %1158 = vmatpush1.msra.mxu0 %v591
  %1159 = vmatprep.subr.mxu0 %v596
  %1160 = vmatpush1.msra.mxu0 %v595
  %1161 = vmatprep.subr.mxu0 %v600
  %1162 = vmatpush1.msra.mxu0 %v599
  %1163 = vmatprep.subr.mxu0 %v604
  %1164 = vmatpush1.msra.mxu0 %v603
  %1165 = vmatprep.subr.mxu0 0.0
  %1166 = vmatpush1.msra.mxu0 0.0
  %1167 = vmatprep.subr.mxu0 0.0
  %1168 = vmatpush1.msra.mxu0 0.0
  %1169 = vmatprep.subr.mxu0 0.0
  %1170 = vmatpush1.msra.mxu0 0.0
  %1171 = vmatprep.subr.mxu0 0.0
  %1172 = vmatpush1.msra.mxu0 0.0
  %1173 = vmatprep.subr.mxu0 0.0
  %1174 = vmatpush1.msra.mxu0 0.0
  %1175 = vmatprep.subr.mxu0 0.0
  %1176 = vmatpush1.msra.mxu0 0.0
  %1177 = vmatprep.subr.mxu0 0.0
  %1178 = vmatpush1.msra.mxu0 0.0
  %1179 = vmatprep.subr.mxu0 0.0
  %1180 = vmatpush1.msra.mxu0 0.0
  %1181 = vmatprep.subr.mxu0 0.0
  %1182 = vmatpush1.msra.mxu0 0.0
  %1183 = vmatprep.subr.mxu0 0.0
  %1184 = vmatpush1.msra.mxu0 0.0
  %1185 = vmatprep.subr.mxu0 0.0
  %1186 = vmatpush1.msra.mxu0 0.0
  %1187 = vmatprep.subr.mxu0 0.0
  %1188 = vmatpush1.msra.mxu0 0.0
  %1189 = vmatprep.subr.mxu0 0.0
  %1190 = vmatpush1.msra.mxu0 0.0
  %1191 = vmatprep.subr.mxu0 0.0
  %1192 = vmatpush1.msra.mxu0 0.0
  %1193 = vmatprep.subr.mxu0 0.0
  %1194 = vmatpush1.msra.mxu0 0.0
  %1195 = vmatprep.subr.mxu0 0.0
  %1196 = vmatpush1.msra.mxu0 0.0
  %1197 = vmatprep.mubr.f32.mxu0 0.0
  %1198 = vmatmul.mubr.f32.gmra.mrb[0].mxu0 %v1128
  %v1199 = vpop.f32.mrb[0].mxu0
  %v1200 = vadd.f32 0.0, %v1199
  %v1201 = vpop.f32.mrb[0].mxu0
  %v1202 = vadd.f32 0.0, %v1201
  %1203 = vdwg.mxu0
  %1204 = vmatprep.subr.mxu0 %v546
  %1205 = vmatpush1.msra.mxu0 %v545
  %1206 = vmatprep.subr.mxu0 %v550
  %1207 = vmatpush1.msra.mxu0 %v549
  %1208 = vmatprep.subr.mxu0 %v554
  %1209 = vmatpush1.msra.mxu0 %v553
  %1210 = vmatprep.subr.mxu0 %v558
  %1211 = vmatpush1.msra.mxu0 %v557
  %1212 = vmatprep.subr.mxu0 %v562
  %1213 = vmatpush1.msra.mxu0 %v561
  %1214 = vmatprep.subr.mxu0 %v566
  %1215 = vmatpush1.msra.mxu0 %v565
  %1216 = vmatprep.subr.mxu0 %v570
  %1217 = vmatpush1.msra.mxu0 %v569
  %1218 = vmatprep.subr.mxu0 %v574
  %1219 = vmatpush1.msra.mxu0 %v573
  %1220 = vmatprep.subr.mxu0 %v578
  %1221 = vmatpush1.msra.mxu0 %v577
  %1222 = vmatprep.subr.mxu0 %v582
  %1223 = vmatpush1.msra.mxu0 %v581
  %1224 = vmatprep.subr.mxu0 %v586
  %1225 = vmatpush1.msra.mxu0 %v585
  %1226 = vmatprep.subr.mxu0 %v590
  %1227 = vmatpush1.msra.mxu0 %v589
  %1228 = vmatprep.subr.mxu0 %v594
  %1229 = vmatpush1.msra.mxu0 %v593
  %1230 = vmatprep.subr.mxu0 %v598
  %1231 = vmatpush1.msra.mxu0 %v597
  %1232 = vmatprep.subr.mxu0 %v602
  %1233 = vmatpush1.msra.mxu0 %v601
  %1234 = vmatprep.subr.mxu0 %v606
  %1235 = vmatpush1.msra.mxu0 %v605
  %1236 = vmatprep.subr.mxu0 0.0
  %1237 = vmatpush1.msra.mxu0 0.0
  %1238 = vmatprep.subr.mxu0 0.0
  %1239 = vmatpush1.msra.mxu0 0.0
  %1240 = vmatprep.subr.mxu0 0.0
  %1241 = vmatpush1.msra.mxu0 0.0
  %1242 = vmatprep.subr.mxu0 0.0
  %1243 = vmatpush1.msra.mxu0 0.0
  %1244 = vmatprep.subr.mxu0 0.0
  %1245 = vmatpush1.msra.mxu0 0.0
  %1246 = vmatprep.subr.mxu0 0.0
  %1247 = vmatpush1.msra.mxu0 0.0
  %1248 = vmatprep.subr.mxu0 0.0
  %1249 = vmatpush1.msra.mxu0 0.0
  %1250 = vmatprep.subr.mxu0 0.0
  %1251 = vmatpush1.msra.mxu0 0.0
  %1252 = vmatprep.subr.mxu0 0.0
  %1253 = vmatpush1.msra.mxu0 0.0
  %1254 = vmatprep.subr.mxu0 0.0
  %1255 = vmatpush1.msra.mxu0 0.0
  %1256 = vmatprep.subr.mxu0 0.0
  %1257 = vmatpush1.msra.mxu0 0.0
  %1258 = vmatprep.subr.mxu0 0.0
  %1259 = vmatpush1.msra.mxu0 0.0
  %1260 = vmatprep.subr.mxu0 0.0
  %1261 = vmatpush1.msra.mxu0 0.0
  %1262 = vmatprep.subr.mxu0 0.0
  %1263 = vmatpush1.msra.mxu0 0.0
  %1264 = vmatprep.subr.mxu0 0.0
  %1265 = vmatpush1.msra.mxu0 0.0
  %1266 = vmatprep.subr.mxu0 0.0
  %1267 = vmatpush1.msra.mxu0 0.0
  %1268 = vmatprep.mubr.f32.mxu0 0.0
  %1269 = vmatmul.mubr.f32.gmra.mrb[0].mxu0 %v1128
  %v1270 = vpop.f32.mrb[0].mxu0
  %v1271 = vadd.f32 0.0, %v1270
  %v1272 = vpop.f32.mrb[0].mxu0
  %v1273 = vadd.f32 0.0, %v1272
  %1274 = vdwg.mxu0
  %v1275 = vadd.f32 %v1129, %v1200
  %v1276 = vadd.f32 %v1130, %v1202
  %v1277 = vadd.f32 %v1131, %v1271
  %v1278 = vadd.f32 %v1132, %v1273
  %v1279 = vxor.u32 %v1275, 2147483648
  %v1280 = vmul.f32 %v1279, 1.442695
  %v1281 = vpow.pop %v1280
  %v1282 = vadd.f32 %v1281, 1.0
  %v1283 = vrcp.pop %v1282
  %v1284 = vmul.f32 1.0, %v1283
  %v1285 = vxor.u32 %v1276, 2147483648
  %v1286 = vmul.f32 %v1285, 1.442695
  %v1287 = vpow.pop %v1286
  %v1288 = vadd.f32 %v1287, 1.0
  %v1289 = vrcp.pop %v1288
  %v1290 = vmul.f32 1.0, %v1289
  %v1291 = vtanh.pop %v1277
  %v1292 = vxor.u32 %v1278, 2147483648
  %v1293 = vmul.f32 %v1292, 1.442695
  %v1294 = vpow.pop %v1293
  %v1295 = vadd.f32 %v1294, 1.0
  %v1296 = vrcp.pop %v1295
  %v1297 = vmul.f32 1.0, %v1296
  %v1298 = vmul.f32 %v1290, %v1126
  %v1299 = vmul.f32 %v1284, %v1291
  %v1300 = vadd.f32 %v1298, %v1299
  %v1301 = vtanh.pop %v1300
  %v1302 = vmul.f32 %v1297, %v1301
  %v1303 = vld [vmem:[%s522] sm:$0xff]
  %v1304 = vld [vmem:[%s522 + $0x8] sm:$0xff]
  %v1305 = vld [vmem:[%s522 + $0x10] sm:$0xff]
  %v1306 = vld [vmem:[%s522 + $0x18] sm:$0xff]
  %1307 = vmatprep.subr.mxu0 %v544
  %1308 = vmatpush1.msra.mxu0 %v543
  %1309 = vmatprep.subr.mxu0 %v548
  %1310 = vmatpush1.msra.mxu0 %v547
  %1311 = vmatprep.subr.mxu0 %v552
  %1312 = vmatpush1.msra.mxu0 %v551
  %1313 = vmatprep.subr.mxu0 %v556
  %1314 = vmatpush1.msra.mxu0 %v555
  %1315 = vmatprep.subr.mxu0 %v560
  %1316 = vmatpush1.msra.mxu0 %v559
  %1317 = vmatprep.subr.mxu0 %v564
  %1318 = vmatpush1.msra.mxu0 %v563
  %1319 = vmatprep.subr.mxu0 %v568
  %1320 = vmatpush1.msra.mxu0 %v567
  %1321 = vmatprep.subr.mxu0 %v572
  %1322 = vmatpush1.msra.mxu0 %v571
  %1323 = vmatprep.subr.mxu0 %v576
  %1324 = vmatpush1.msra.mxu0 %v575
  %1325 = vmatprep.subr.mxu0 %v580
  %1326 = vmatpush1.msra.mxu0 %v579
  %1327 = vmatprep.subr.mxu0 %v584
  %1328 = vmatpush1.msra.mxu0 %v583
  %1329 = vmatprep.subr.mxu0 %v588
  %1330 = vmatpush1.msra.mxu0 %v587
  %1331 = vmatprep.subr.mxu0 %v592
  %1332 = vmatpush1.msra.mxu0 %v591
  %1333 = vmatprep.subr.mxu0 %v596
  %1334 = vmatpush1.msra.mxu0 %v595
  %1335 = vmatprep.subr.mxu0 %v600
  %1336 = vmatpush1.msra.mxu0 %v599
  %1337 = vmatprep.subr.mxu0 %v604
  %1338 = vmatpush1.msra.mxu0 %v603
  %1339 = vmatprep.subr.mxu0 0.0
  %1340 = vmatpush1.msra.mxu0 0.0
  %1341 = vmatprep.subr.mxu0 0.0
  %1342 = vmatpush1.msra.mxu0 0.0
  %1343 = vmatprep.subr.mxu0 0.0
  %1344 = vmatpush1.msra.mxu0 0.0
  %1345 = vmatprep.subr.mxu0 0.0
  %1346 = vmatpush1.msra.mxu0 0.0
  %1347 = vmatprep.subr.mxu0 0.0
  %1348 = vmatpush1.msra.mxu0 0.0
  %1349 = vmatprep.subr.mxu0 0.0
  %1350 = vmatpush1.msra.mxu0 0.0
  %1351 = vmatprep.subr.mxu0 0.0
  %1352 = vmatpush1.msra.mxu0 0.0
  %1353 = vmatprep.subr.mxu0 0.0
  %1354 = vmatpush1.msra.mxu0 0.0
  %1355 = vmatprep.subr.mxu0 0.0
  %1356 = vmatpush1.msra.mxu0 0.0
  %1357 = vmatprep.subr.mxu0 0.0
  %1358 = vmatpush1.msra.mxu0 0.0
  %1359 = vmatprep.subr.mxu0 0.0
  %1360 = vmatpush1.msra.mxu0 0.0
  %1361 = vmatprep.subr.mxu0 0.0
  %1362 = vmatpush1.msra.mxu0 0.0
  %1363 = vmatprep.subr.mxu0 0.0
  %1364 = vmatpush1.msra.mxu0 0.0
  %1365 = vmatprep.subr.mxu0 0.0
  %1366 = vmatpush1.msra.mxu0 0.0
  %1367 = vmatprep.subr.mxu0 0.0
  %1368 = vmatpush1.msra.mxu0 0.0
  %1369 = vmatprep.subr.mxu0 0.0
  %1370 = vmatpush1.msra.mxu0 0.0
  %1371 = vmatprep.mubr.f32.mxu0 0.0
  %1372 = vmatmul.mubr.f32.gmra.mrb[0].mxu0 %v1302
  %v1373 = vpop.f32.mrb[0].mxu0
  %v1374 = vadd.f32 0.0, %v1373
  %v1375 = vpop.f32.mrb[0].mxu0
  %v1376 = vadd.f32 0.0, %v1375
  %1377 = vdwg.mxu0
  %1378 = vmatprep.subr.mxu0 %v546
  %1379 = vmatpush1.msra.mxu0 %v545
  %1380 = vmatprep.subr.mxu0 %v550
  %1381 = vmatpush1.msra.mxu0 %v549
  %1382 = vmatprep.subr.mxu0 %v554
  %1383 = vmatpush1.msra.mxu0 %v553
  %1384 = vmatprep.subr.mxu0 %v558
  %1385 = vmatpush1.msra.mxu0 %v557
  %1386 = vmatprep.subr.mxu0 %v562
  %1387 = vmatpush1.msra.mxu0 %v561
  %1388 = vmatprep.subr.mxu0 %v566
  %1389 = vmatpush1.msra.mxu0 %v565
  %1390 = vmatprep.subr.mxu0 %v570
  %1391 = vmatpush1.msra.mxu0 %v569
  %1392 = vmatprep.subr.mxu0 %v574
  %1393 = vmatpush1.msra.mxu0 %v573
  %1394 = vmatprep.subr.mxu0 %v578
  %1395 = vmatpush1.msra.mxu0 %v577
  %1396 = vmatprep.subr.mxu0 %v582
  %1397 = vmatpush1.msra.mxu0 %v581
  %1398 = vmatprep.subr.mxu0 %v586
  %1399 = vmatpush1.msra.mxu0 %v585
  %1400 = vmatprep.subr.mxu0 %v590
  %1401 = vmatpush1.msra.mxu0 %v589
  %1402 = vmatprep.subr.mxu0 %v594
  %1403 = vmatpush1.msra.mxu0 %v593
  %1404 = vmatprep.subr.mxu0 %v598
  %1405 = vmatpush1.msra.mxu0 %v597
  %1406 = vmatprep.subr.mxu0 %v602
  %1407 = vmatpush1.msra.mxu0 %v601
  %1408 = vmatprep.subr.mxu0 %v606
  %1409 = vmatpush1.msra.mxu0 %v605
  %1410 = vmatprep.subr.mxu0 0.0
  %1411 = vmatpush1.msra.mxu0 0.0
  %1412 = vmatprep.subr.mxu0 0.0
  %1413 = vmatpush1.msra.mxu0 0.0
  %1414 = vmatprep.subr.mxu0 0.0
  %1415 = vmatpush1.msra.mxu0 0.0
  %1416 = vmatprep.subr.mxu0 0.0
  %1417 = vmatpush1.msra.mxu0 0.0
  %1418 = vmatprep.subr.mxu0 0.0
  %1419 = vmatpush1.msra.mxu0 0.0
  %1420 = vmatprep.subr.mxu0 0.0
  %1421 = vmatpush1.msra.mxu0 0.0
  %1422 = vmatprep.subr.mxu0 0.0
  %1423 = vmatpush1.msra.mxu0 0.0
  %1424 = vmatprep.subr.mxu0 0.0
  %1425 = vmatpush1.msra.mxu0 0.0
  %1426 = vmatprep.subr.mxu0 0.0
  %1427 = vmatpush1.msra.mxu0 0.0
  %1428 = vmatprep.subr.mxu0 0.0
  %1429 = vmatpush1.msra.mxu0 0.0
  %1430 = vmatprep.subr.mxu0 0.0
  %1431 = vmatpush1.msra.mxu0 0.0
  %1432 = vmatprep.subr.mxu0 0.0
  %1433 = vmatpush1.msra.mxu0 0.0
  %1434 = vmatprep.subr.mxu0 0.0
  %1435 = vmatpush1.msra.mxu0 0.0
  %1436 = vmatprep.subr.mxu0 0.0
  %1437 = vmatpush1.msra.mxu0 0.0
  %1438 = vmatprep.subr.mxu0 0.0
  %1439 = vmatpush1.msra.mxu0 0.0
  %1440 = vmatprep.subr.mxu0 0.0
  %1441 = vmatpush1.msra.mxu0 0.0
  %1442 = vmatprep.mubr.f32.mxu0 0.0
  %1443 = vmatmul.mubr.f32.gmra.mrb[0].mxu0 %v1302
  %v1444 = vpop.f32.mrb[0].mxu0
  %v1445 = vadd.f32 0.0, %v1444
  %v1446 = vpop.f32.mrb[0].mxu0
  %v1447 = vadd.f32 0.0, %v1446
  %1448 = vdwg.mxu0
  %v1449 = vadd.f32 %v1303, %v1374
  %v1450 = vadd.f32 %v1304, %v1376
  %v1451 = vadd.f32 %v1305, %v1445
  %v1452 = vadd.f32 %v1306, %v1447
  %v1453 = vxor.u32 %v1449, 2147483648
  %v1454 = vmul.f32 %v1453, 1.442695
  %v1455 = vpow.pop %v1454
  %v1456 = vadd.f32 %v1455, 1.0
  %v1457 = vrcp.pop %v1456
  %v1458 = vmul.f32 1.0, %v1457
  %v1459 = vxor.u32 %v1450, 2147483648
  %v1460 = vmul.f32 %v1459, 1.442695
  %v1461 = vpow.pop %v1460
  %v1462 = vadd.f32 %v1461, 1.0
  %v1463 = vrcp.pop %v1462
  %v1464 = vmul.f32 1.0, %v1463
  %v1465 = vtanh.pop %v1451
  %v1466 = vxor.u32 %v1452, 2147483648
  %v1467 = vmul.f32 %v1466, 1.442695
  %v1468 = vpow.pop %v1467
  %v1469 = vadd.f32 %v1468, 1.0
  %v1470 = vrcp.pop %v1469
  %v1471 = vmul.f32 1.0, %v1470
  %v1472 = vmul.f32 %v1464, %v1300
  %v1473 = vmul.f32 %v1458, %v1465
  %v1474 = vadd.f32 %v1472, %v1473
  %v1475 = vtanh.pop %v1474
  %v1476 = vmul.f32 %v1471, %v1475
  %v1477 = vld [vmem:[%s496] sm:$0xff]
  %v1478 = vld [vmem:[%s496 + $0x8] sm:$0xff]
  %v1479 = vld [vmem:[%s496 + $0x10] sm:$0xff]
  %v1480 = vld [vmem:[%s496 + $0x18] sm:$0xff]
  %1481 = vmatprep.subr.mxu0 %v544
  %1482 = vmatpush1.msra.mxu0 %v543
  %1483 = vmatprep.subr.mxu0 %v548
  %1484 = vmatpush1.msra.mxu0 %v547
  %1485 = vmatprep.subr.mxu0 %v552
  %1486 = vmatpush1.msra.mxu0 %v551
  %1487 = vmatprep.subr.mxu0 %v556
  %1488 = vmatpush1.msra.mxu0 %v555
  %1489 = vmatprep.subr.mxu0 %v560
  %1490 = vmatpush1.msra.mxu0 %v559
  %1491 = vmatprep.subr.mxu0 %v564
  %1492 = vmatpush1.msra.mxu0 %v563
  %1493 = vmatprep.subr.mxu0 %v568
  %1494 = vmatpush1.msra.mxu0 %v567
  %1495 = vmatprep.subr.mxu0 %v572
  %1496 = vmatpush1.msra.mxu0 %v571
  %1497 = vmatprep.subr.mxu0 %v576
  %1498 = vmatpush1.msra.mxu0 %v575
  %1499 = vmatprep.subr.mxu0 %v580
  %1500 = vmatpush1.msra.mxu0 %v579
  %1501 = vmatprep.subr.mxu0 %v584
  %1502 = vmatpush1.msra.mxu0 %v583
  %1503 = vmatprep.subr.mxu0 %v588
  %1504 = vmatpush1.msra.mxu0 %v587
  %1505 = vmatprep.subr.mxu0 %v592
  %1506 = vmatpush1.msra.mxu0 %v591
  %1507 = vmatprep.subr.mxu0 %v596
  %1508 = vmatpush1.msra.mxu0 %v595
  %1509 = vmatprep.subr.mxu0 %v600
  %1510 = vmatpush1.msra.mxu0 %v599
  %1511 = vmatprep.subr.mxu0 %v604
  %1512 = vmatpush1.msra.mxu0 %v603
  %1513 = vmatprep.subr.mxu0 0.0
  %1514 = vmatpush1.msra.mxu0 0.0
  %1515 = vmatprep.subr.mxu0 0.0
  %1516 = vmatpush1.msra.mxu0 0.0
  %1517 = vmatprep.subr.mxu0 0.0
  %1518 = vmatpush1.msra.mxu0 0.0
  %1519 = vmatprep.subr.mxu0 0.0
  %1520 = vmatpush1.msra.mxu0 0.0
  %1521 = vmatprep.subr.mxu0 0.0
  %1522 = vmatpush1.msra.mxu0 0.0
  %1523 = vmatprep.subr.mxu0 0.0
  %1524 = vmatpush1.msra.mxu0 0.0
  %1525 = vmatprep.subr.mxu0 0.0
  %1526 = vmatpush1.msra.mxu0 0.0
  %1527 = vmatprep.subr.mxu0 0.0
  %1528 = vmatpush1.msra.mxu0 0.0
  %1529 = vmatprep.subr.mxu0 0.0
  %1530 = vmatpush1.msra.mxu0 0.0
  %1531 = vmatprep.subr.mxu0 0.0
  %1532 = vmatpush1.msra.mxu0 0.0
  %1533 = vmatprep.subr.mxu0 0.0
  %1534 = vmatpush1.msra.mxu0 0.0
  %1535 = vmatprep.subr.mxu0 0.0
  %1536 = vmatpush1.msra.mxu0 0.0
  %1537 = vmatprep.subr.mxu0 0.0
  %1538 = vmatpush1.msra.mxu0 0.0
  %1539 = vmatprep.subr.mxu0 0.0
  %1540 = vmatpush1.msra.mxu0 0.0
  %1541 = vmatprep.subr.mxu0 0.0
  %1542 = vmatpush1.msra.mxu0 0.0
  %1543 = vmatprep.subr.mxu0 0.0
  %1544 = vmatpush1.msra.mxu0 0.0
  %1545 = vmatprep.mubr.f32.mxu0 0.0
  %1546 = vmatmul.mubr.f32.gmra.mrb[0].mxu0 %v1476
  %v1547 = vpop.f32.mrb[0].mxu0
  %v1548 = vadd.f32 0.0, %v1547
  %v1549 = vpop.f32.mrb[0].mxu0
  %v1550 = vadd.f32 0.0, %v1549
  %1551 = vdwg.mxu0
  %1552 = vmatprep.subr.mxu0 %v546
  %1553 = vmatpush1.msra.mxu0 %v545
  %1554 = vmatprep.subr.mxu0 %v550
  %1555 = vmatpush1.msra.mxu0 %v549
  %1556 = vmatprep.subr.mxu0 %v554
  %1557 = vmatpush1.msra.mxu0 %v553
  %1558 = vmatprep.subr.mxu0 %v558
  %1559 = vmatpush1.msra.mxu0 %v557
  %1560 = vmatprep.subr.mxu0 %v562
  %1561 = vmatpush1.msra.mxu0 %v561
  %1562 = vmatprep.subr.mxu0 %v566
  %1563 = vmatpush1.msra.mxu0 %v565
  %1564 = vmatprep.subr.mxu0 %v570
  %1565 = vmatpush1.msra.mxu0 %v569
  %1566 = vmatprep.subr.mxu0 %v574
  %1567 = vmatpush1.msra.mxu0 %v573
  %1568 = vmatprep.subr.mxu0 %v578
  %1569 = vmatpush1.msra.mxu0 %v577
  %1570 = vmatprep.subr.mxu0 %v582
  %1571 = vmatpush1.msra.mxu0 %v581
  %1572 = vmatprep.subr.mxu0 %v586
  %1573 = vmatpush1.msra.mxu0 %v585
  %1574 = vmatprep.subr.mxu0 %v590
  %1575 = vmatpush1.msra.mxu0 %v589
  %1576 = vmatprep.subr.mxu0 %v594
  %1577 = vmatpush1.msra.mxu0 %v593
  %1578 = vmatprep.subr.mxu0 %v598
  %1579 = vmatpush1.msra.mxu0 %v597
  %1580 = vmatprep.subr.mxu0 %v602
  %1581 = vmatpush1.msra.mxu0 %v601
  %1582 = vmatprep.subr.mxu0 %v606
  %1583 = vmatpush1.msra.mxu0 %v605
  %1584 = vmatprep.subr.mxu0 0.0
  %1585 = vmatpush1.msra.mxu0 0.0
  %1586 = vmatprep.subr.mxu0 0.0
  %1587 = vmatpush1.msra.mxu0 0.0
  %1588 = vmatprep.subr.mxu0 0.0
  %1589 = vmatpush1.msra.mxu0 0.0
  %1590 = vmatprep.subr.mxu0 0.0
  %1591 = vmatpush1.msra.mxu0 0.0
  %1592 = vmatprep.subr.mxu0 0.0
  %1593 = vmatpush1.msra.mxu0 0.0
  %1594 = vmatprep.subr.mxu0 0.0
  %1595 = vmatpush1.msra.mxu0 0.0
  %1596 = vmatprep.subr.mxu0 0.0
  %1597 = vmatpush1.msra.mxu0 0.0
  %1598 = vmatprep.subr.mxu0 0.0
  %1599 = vmatpush1.msra.mxu0 0.0
  %1600 = vmatprep.subr.mxu0 0.0
  %1601 = vmatpush1.msra.mxu0 0.0
  %1602 = vmatprep.subr.mxu0 0.0
  %1603 = vmatpush1.msra.mxu0 0.0
  %1604 = vmatprep.subr.mxu0 0.0
  %1605 = vmatpush1.msra.mxu0 0.0
  %1606 = vmatprep.subr.mxu0 0.0
  %1607 = vmatpush1.msra.mxu0 0.0
  %1608 = vmatprep.subr.mxu0 0.0
  %1609 = vmatpush1.msra.mxu0 0.0
  %1610 = vmatprep.subr.mxu0 0.0
  %1611 = vmatpush1.msra.mxu0 0.0
  %1612 = vmatprep.subr.mxu0 0.0
  %1613 = vmatpush1.msra.mxu0 0.0
  %1614 = vmatprep.subr.mxu0 0.0
  %1615 = vmatpush1.msra.mxu0 0.0
  %1616 = vmatprep.mubr.f32.mxu0 0.0
  %1617 = vmatmul.mubr.f32.gmra.mrb[0].mxu0 %v1476
  %v1618 = vpop.f32.mrb[0].mxu0
  %v1619 = vadd.f32 0.0, %v1618
  %v1620 = vpop.f32.mrb[0].mxu0
  %v1621 = vadd.f32 0.0, %v1620
  %1622 = vdwg.mxu0
  %v1623 = vadd.f32 %v1477, %v1548
  %v1624 = vadd.f32 %v1478, %v1550
  %v1625 = vadd.f32 %v1479, %v1619
  %v1626 = vadd.f32 %v1480, %v1621
  %v1627 = vxor.u32 %v1623, 2147483648
  %v1628 = vmul.f32 %v1627, 1.442695
  %v1629 = vpow.pop %v1628
  %v1630 = vadd.f32 %v1629, 1.0
  %v1631 = vrcp.pop %v1630
  %v1632 = vmul.f32 1.0, %v1631
  %v1633 = vxor.u32 %v1624, 2147483648
  %v1634 = vmul.f32 %v1633, 1.442695
  %v1635 = vpow.pop %v1634
  %v1636 = vadd.f32 %v1635, 1.0
  %v1637 = vrcp.pop %v1636
  %v1638 = vmul.f32 1.0, %v1637
  %v1639 = vtanh.pop %v1625
  %v1640 = vxor.u32 %v1626, 2147483648
  %v1641 = vmul.f32 %v1640, 1.442695
  %v1642 = vpow.pop %v1641
  %v1643 = vadd.f32 %v1642, 1.0
  %v1644 = vrcp.pop %v1643
  %v1645 = vmul.f32 1.0, %v1644
  %v1646 = vmul.f32 %v1638, %v1474
  %v1647 = vmul.f32 %v1632, %v1639
  %v1648 = vadd.f32 %v1646, %v1647
  %v1649 = vtanh.pop %v1648
  %v1650 = vmul.f32 %v1645, %v1649
  %v1651 = vld [vmem:[%s470] sm:$0xff]
  %v1652 = vld [vmem:[%s470 + $0x8] sm:$0xff]
  %v1653 = vld [vmem:[%s470 + $0x10] sm:$0xff]
  %v1654 = vld [vmem:[%s470 + $0x18] sm:$0xff]
  %1655 = vmatprep.subr.mxu0 %v544
  %1656 = vmatpush1.msra.mxu0 %v543
  %1657 = vmatprep.subr.mxu0 %v548
  %1658 = vmatpush1.msra.mxu0 %v547
  %1659 = vmatprep.subr.mxu0 %v552
  %1660 = vmatpush1.msra.mxu0 %v551
  %1661 = vmatprep.subr.mxu0 %v556
  %1662 = vmatpush1.msra.mxu0 %v555
  %1663 = vmatprep.subr.mxu0 %v560
  %1664 = vmatpush1.msra.mxu0 %v559
  %1665 = vmatprep.subr.mxu0 %v564
  %1666 = vmatpush1.msra.mxu0 %v563
  %1667 = vmatprep.subr.mxu0 %v568
  %1668 = vmatpush1.msra.mxu0 %v567
  %1669 = vmatprep.subr.mxu0 %v572
  %1670 = vmatpush1.msra.mxu0 %v571
  %1671 = vmatprep.subr.mxu0 %v576
  %1672 = vmatpush1.msra.mxu0 %v575
  %1673 = vmatprep.subr.mxu0 %v580
  %1674 = vmatpush1.msra.mxu0 %v579
  %1675 = vmatprep.subr.mxu0 %v584
  %1676 = vmatpush1.msra.mxu0 %v583
  %1677 = vmatprep.subr.mxu0 %v588
  %1678 = vmatpush1.msra.mxu0 %v587
  %1679 = vmatprep.subr.mxu0 %v592
  %1680 = vmatpush1.msra.mxu0 %v591
  %1681 = vmatprep.subr.mxu0 %v596
  %1682 = vmatpush1.msra.mxu0 %v595
  %1683 = vmatprep.subr.mxu0 %v600
  %1684 = vmatpush1.msra.mxu0 %v599
  %1685 = vmatprep.subr.mxu0 %v604
  %1686 = vmatpush1.msra.mxu0 %v603
  %1687 = vmatprep.subr.mxu0 0.0
  %1688 = vmatpush1.msra.mxu0 0.0
  %1689 = vmatprep.subr.mxu0 0.0
  %1690 = vmatpush1.msra.mxu0 0.0
  %1691 = vmatprep.subr.mxu0 0.0
  %1692 = vmatpush1.msra.mxu0 0.0
  %1693 = vmatprep.subr.mxu0 0.0
  %1694 = vmatpush1.msra.mxu0 0.0
  %1695 = vmatprep.subr.mxu0 0.0
  %1696 = vmatpush1.msra.mxu0 0.0
  %1697 = vmatprep.subr.mxu0 0.0
  %1698 = vmatpush1.msra.mxu0 0.0
  %1699 = vmatprep.subr.mxu0 0.0
  %1700 = vmatpush1.msra.mxu0 0.0
  %1701 = vmatprep.subr.mxu0 0.0
  %1702 = vmatpush1.msra.mxu0 0.0
  %1703 = vmatprep.subr.mxu0 0.0
  %1704 = vmatpush1.msra.mxu0 0.0
  %1705 = vmatprep.subr.mxu0 0.0
  %1706 = vmatpush1.msra.mxu0 0.0
  %1707 = vmatprep.subr.mxu0 0.0
  %1708 = vmatpush1.msra.mxu0 0.0
  %1709 = vmatprep.subr.mxu0 0.0
  %1710 = vmatpush1.msra.mxu0 0.0
  %1711 = vmatprep.subr.mxu0 0.0
  %1712 = vmatpush1.msra.mxu0 0.0
  %1713 = vmatprep.subr.mxu0 0.0
  %1714 = vmatpush1.msra.mxu0 0.0
  %1715 = vmatprep.subr.mxu0 0.0
  %1716 = vmatpush1.msra.mxu0 0.0
  %1717 = vmatprep.subr.mxu0 0.0
  %1718 = vmatpush1.msra.mxu0 0.0
  %1719 = vmatprep.mubr.f32.mxu0 0.0
  %1720 = vmatmul.mubr.f32.gmra.mrb[0].mxu0 %v1650
  %v1721 = vpop.f32.mrb[0].mxu0
  %v1722 = vadd.f32 0.0, %v1721
  %v1723 = vpop.f32.mrb[0].mxu0
  %v1724 = vadd.f32 0.0, %v1723
  %1725 = vdwg.mxu0
  %1726 = vmatprep.subr.mxu0 %v546
  %1727 = vmatpush1.msra.mxu0 %v545
  %1728 = vmatprep.subr.mxu0 %v550
  %1729 = vmatpush1.msra.mxu0 %v549
  %1730 = vmatprep.subr.mxu0 %v554
  %1731 = vmatpush1.msra.mxu0 %v553
  %1732 = vmatprep.subr.mxu0 %v558
  %1733 = vmatpush1.msra.mxu0 %v557
  %1734 = vmatprep.subr.mxu0 %v562
  %1735 = vmatpush1.msra.mxu0 %v561
  %1736 = vmatprep.subr.mxu0 %v566
  %1737 = vmatpush1.msra.mxu0 %v565
  %1738 = vmatprep.subr.mxu0 %v570
  %1739 = vmatpush1.msra.mxu0 %v569
  %1740 = vmatprep.subr.mxu0 %v574
  %1741 = vmatpush1.msra.mxu0 %v573
  %1742 = vmatprep.subr.mxu0 %v578
  %1743 = vmatpush1.msra.mxu0 %v577
  %1744 = vmatprep.subr.mxu0 %v582
  %1745 = vmatpush1.msra.mxu0 %v581
  %1746 = vmatprep.subr.mxu0 %v586
  %1747 = vmatpush1.msra.mxu0 %v585
  %1748 = vmatprep.subr.mxu0 %v590
  %1749 = vmatpush1.msra.mxu0 %v589
  %1750 = vmatprep.subr.mxu0 %v594
  %1751 = vmatpush1.msra.mxu0 %v593
  %1752 = vmatprep.subr.mxu0 %v598
  %1753 = vmatpush1.msra.mxu0 %v597
  %1754 = vmatprep.subr.mxu0 %v602
  %1755 = vmatpush1.msra.mxu0 %v601
  %1756 = vmatprep.subr.mxu0 %v606
  %1757 = vmatpush1.msra.mxu0 %v605
  %1758 = vmatprep.subr.mxu0 0.0
  %1759 = vmatpush1.msra.mxu0 0.0
  %1760 = vmatprep.subr.mxu0 0.0
  %1761 = vmatpush1.msra.mxu0 0.0
  %1762 = vmatprep.subr.mxu0 0.0
  %1763 = vmatpush1.msra.mxu0 0.0
  %1764 = vmatprep.subr.mxu0 0.0
  %1765 = vmatpush1.msra.mxu0 0.0
  %1766 = vmatprep.subr.mxu0 0.0
  %1767 = vmatpush1.msra.mxu0 0.0
  %1768 = vmatprep.subr.mxu0 0.0
  %1769 = vmatpush1.msra.mxu0 0.0
  %1770 = vmatprep.subr.mxu0 0.0
  %1771 = vmatpush1.msra.mxu0 0.0
  %1772 = vmatprep.subr.mxu0 0.0
  %1773 = vmatpush1.msra.mxu0 0.0
  %1774 = vmatprep.subr.mxu0 0.0
  %1775 = vmatpush1.msra.mxu0 0.0
  %1776 = vmatprep.subr.mxu0 0.0
  %1777 = vmatpush1.msra.mxu0 0.0
  %1778 = vmatprep.subr.mxu0 0.0
  %1779 = vmatpush1.msra.mxu0 0.0
  %1780 = vmatprep.subr.mxu0 0.0
  %1781 = vmatpush1.msra.mxu0 0.0
  %1782 = vmatprep.subr.mxu0 0.0
  %1783 = vmatpush1.msra.mxu0 0.0
  %1784 = vmatprep.subr.mxu0 0.0
  %1785 = vmatpush1.msra.mxu0 0.0
  %1786 = vmatprep.subr.mxu0 0.0
  %1787 = vmatpush1.msra.mxu0 0.0
  %1788 = vmatprep.subr.mxu0 0.0
  %1789 = vmatpush1.msra.mxu0 0.0
  %1790 = vmatprep.mubr.f32.mxu0 0.0
  %1791 = vmatmul.mubr.f32.gmra.mrb[0].mxu0 %v1650
  %v1792 = vpop.f32.mrb[0].mxu0
  %v1793 = vadd.f32 0.0, %v1792
  %v1794 = vpop.f32.mrb[0].mxu0
  %v1795 = vadd.f32 0.0, %v1794
  %1796 = vdwg.mxu0
  %v1797 = vadd.f32 %v1651, %v1722
  %v1798 = vadd.f32 %v1652, %v1724
  %v1799 = vadd.f32 %v1653, %v1793
  %v1800 = vadd.f32 %v1654, %v1795
  %v1801 = vxor.u32 %v1797, 2147483648
  %v1802 = vmul.f32 %v1801, 1.442695
  %v1803 = vpow.pop %v1802
  %v1804 = vadd.f32 %v1803, 1.0
  %v1805 = vrcp.pop %v1804
  %v1806 = vmul.f32 1.0, %v1805
  %v1807 = vxor.u32 %v1798, 2147483648
  %v1808 = vmul.f32 %v1807, 1.442695
  %v1809 = vpow.pop %v1808
  %v1810 = vadd.f32 %v1809, 1.0
  %v1811 = vrcp.pop %v1810
  %v1812 = vmul.f32 1.0, %v1811
  %v1813 = vtanh.pop %v1799
  %v1814 = vxor.u32 %v1800, 2147483648
  %v1815 = vmul.f32 %v1814, 1.442695
  %v1816 = vpow.pop %v1815
  %v1817 = vadd.f32 %v1816, 1.0
  %v1818 = vrcp.pop %v1817
  %v1819 = vmul.f32 1.0, %v1818
  %v1820 = vmul.f32 %v1812, %v1648
  %v1821 = vmul.f32 %v1806, %v1813
  %v1822 = vadd.f32 %v1820, %v1821
  %v1823 = vtanh.pop %v1822
  %v1824 = vmul.f32 %v1819, %v1823
  %v1825 = vld [vmem:[%s436] sm:$0xff]
  %v1826 = vld [vmem:[%s436 + $0x8] sm:$0xff]
  %v1827 = vld [vmem:[%s436 + $0x10] sm:$0xff]
  %v1828 = vld [vmem:[%s436 + $0x18] sm:$0xff]
  %1829 = vmatprep.subr.mxu0 %v544
  %1830 = vmatpush1.msra.mxu0 %v543
  %1831 = vmatprep.subr.mxu0 %v548
  %1832 = vmatpush1.msra.mxu0 %v547
  %1833 = vmatprep.subr.mxu0 %v552
  %1834 = vmatpush1.msra.mxu0 %v551
  %1835 = vmatprep.subr.mxu0 %v556
  %1836 = vmatpush1.msra.mxu0 %v555
  %1837 = vmatprep.subr.mxu0 %v560
  %1838 = vmatpush1.msra.mxu0 %v559
  %1839 = vmatprep.subr.mxu0 %v564
  %1840 = vmatpush1.msra.mxu0 %v563
  %1841 = vmatprep.subr.mxu0 %v568
  %1842 = vmatpush1.msra.mxu0 %v567
  %1843 = vmatprep.subr.mxu0 %v572
  %1844 = vmatpush1.msra.mxu0 %v571
  %1845 = vmatprep.subr.mxu0 %v576
  %1846 = vmatpush1.msra.mxu0 %v575
  %1847 = vmatprep.subr.mxu0 %v580
  %1848 = vmatpush1.msra.mxu0 %v579
  %1849 = vmatprep.subr.mxu0 %v584
  %1850 = vmatpush1.msra.mxu0 %v583
  %1851 = vmatprep.subr.mxu0 %v588
  %1852 = vmatpush1.msra.mxu0 %v587
  %1853 = vmatprep.subr.mxu0 %v592
  %1854 = vmatpush1.msra.mxu0 %v591
  %1855 = vmatprep.subr.mxu0 %v596
  %1856 = vmatpush1.msra.mxu0 %v595
  %1857 = vmatprep.subr.mxu0 %v600
  %1858 = vmatpush1.msra.mxu0 %v599
  %1859 = vmatprep.subr.mxu0 %v604
  %1860 = vmatpush1.msra.mxu0 %v603
  %1861 = vmatprep.subr.mxu0 0.0
  %1862 = vmatpush1.msra.mxu0 0.0
  %1863 = vmatprep.subr.mxu0 0.0
  %1864 = vmatpush1.msra.mxu0 0.0
  %1865 = vmatprep.subr.mxu0 0.0
  %1866 = vmatpush1.msra.mxu0 0.0
  %1867 = vmatprep.subr.mxu0 0.0
  %1868 = vmatpush1.msra.mxu0 0.0
  %1869 = vmatprep.subr.mxu0 0.0
  %1870 = vmatpush1.msra.mxu0 0.0
  %1871 = vmatprep.subr.mxu0 0.0
  %1872 = vmatpush1.msra.mxu0 0.0
  %1873 = vmatprep.subr.mxu0 0.0
  %1874 = vmatpush1.msra.mxu0 0.0
  %1875 = vmatprep.subr.mxu0 0.0
  %1876 = vmatpush1.msra.mxu0 0.0
  %1877 = vmatprep.subr.mxu0 0.0
  %1878 = vmatpush1.msra.mxu0 0.0
  %1879 = vmatprep.subr.mxu0 0.0
  %1880 = vmatpush1.msra.mxu0 0.0
  %1881 = vmatprep.subr.mxu0 0.0
  %1882 = vmatpush1.msra.mxu0 0.0
  %1883 = vmatprep.subr.mxu0 0.0
  %1884 = vmatpush1.msra.mxu0 0.0
  %1885 = vmatprep.subr.mxu0 0.0
  %1886 = vmatpush1.msra.mxu0 0.0
  %1887 = vmatprep.subr.mxu0 0.0
  %1888 = vmatpush1.msra.mxu0 0.0
  %1889 = vmatprep.subr.mxu0 0.0
  %1890 = vmatpush1.msra.mxu0 0.0
  %1891 = vmatprep.subr.mxu0 0.0
  %1892 = vmatpush1.msra.mxu0 0.0
  %1893 = vmatprep.mubr.f32.mxu0 0.0
  %1894 = vmatmul.mubr.f32.gmra.mrb[0].mxu0 %v1824
  %v1895 = vpop.f32.mrb[0].mxu0
  %v1896 = vadd.f32 0.0, %v1895
  %v1897 = vpop.f32.mrb[0].mxu0
  %v1898 = vadd.f32 0.0, %v1897
  %1899 = vdwg.mxu0
  %1900 = vmatprep.subr.mxu0 %v546
  %1901 = vmatpush1.msra.mxu0 %v545
  %1902 = vmatprep.subr.mxu0 %v550
  %1903 = vmatpush1.msra.mxu0 %v549
  %1904 = vmatprep.subr.mxu0 %v554
  %1905 = vmatpush1.msra.mxu0 %v553
  %1906 = vmatprep.subr.mxu0 %v558
  %1907 = vmatpush1.msra.mxu0 %v557
  %1908 = vmatprep.subr.mxu0 %v562
  %1909 = vmatpush1.msra.mxu0 %v561
  %1910 = vmatprep.subr.mxu0 %v566
  %1911 = vmatpush1.msra.mxu0 %v565
  %1912 = vmatprep.subr.mxu0 %v570
  %1913 = vmatpush1.msra.mxu0 %v569
  %1914 = vmatprep.subr.mxu0 %v574
  %1915 = vmatpush1.msra.mxu0 %v573
  %1916 = vmatprep.subr.mxu0 %v578
  %1917 = vmatpush1.msra.mxu0 %v577
  %1918 = vmatprep.subr.mxu0 %v582
  %1919 = vmatpush1.msra.mxu0 %v581
  %1920 = vmatprep.subr.mxu0 %v586
  %1921 = vmatpush1.msra.mxu0 %v585
  %1922 = vmatprep.subr.mxu0 %v590
  %1923 = vmatpush1.msra.mxu0 %v589
  %1924 = vmatprep.subr.mxu0 %v594
  %1925 = vmatpush1.msra.mxu0 %v593
  %1926 = vmatprep.subr.mxu0 %v598
  %1927 = vmatpush1.msra.mxu0 %v597
  %1928 = vmatprep.subr.mxu0 %v602
  %1929 = vmatpush1.msra.mxu0 %v601
  %1930 = vmatprep.subr.mxu0 %v606
  %1931 = vmatpush1.msra.mxu0 %v605
  %1932 = vmatprep.subr.mxu0 0.0
  %1933 = vmatpush1.msra.mxu0 0.0
  %1934 = vmatprep.subr.mxu0 0.0
  %1935 = vmatpush1.msra.mxu0 0.0
  %1936 = vmatprep.subr.mxu0 0.0
  %1937 = vmatpush1.msra.mxu0 0.0
  %1938 = vmatprep.subr.mxu0 0.0
  %1939 = vmatpush1.msra.mxu0 0.0
  %1940 = vmatprep.subr.mxu0 0.0
  %1941 = vmatpush1.msra.mxu0 0.0
  %1942 = vmatprep.subr.mxu0 0.0
  %1943 = vmatpush1.msra.mxu0 0.0
  %1944 = vmatprep.subr.mxu0 0.0
  %1945 = vmatpush1.msra.mxu0 0.0
  %1946 = vmatprep.subr.mxu0 0.0
  %1947 = vmatpush1.msra.mxu0 0.0
  %1948 = vmatprep.subr.mxu0 0.0
  %1949 = vmatpush1.msra.mxu0 0.0
  %1950 = vmatprep.subr.mxu0 0.0
  %1951 = vmatpush1.msra.mxu0 0.0
  %1952 = vmatprep.subr.mxu0 0.0
  %1953 = vmatpush1.msra.mxu0 0.0
  %1954 = vmatprep.subr.mxu0 0.0
  %1955 = vmatpush1.msra.mxu0 0.0
  %1956 = vmatprep.subr.mxu0 0.0
  %1957 = vmatpush1.msra.mxu0 0.0
  %1958 = vmatprep.subr.mxu0 0.0
  %1959 = vmatpush1.msra.mxu0 0.0
  %1960 = vmatprep.subr.mxu0 0.0
  %1961 = vmatpush1.msra.mxu0 0.0
  %1962 = vmatprep.subr.mxu0 0.0
  %1963 = vmatpush1.msra.mxu0 0.0
  %1964 = vmatprep.mubr.f32.mxu0 0.0
  %1965 = vmatmul.mubr.f32.gmra.mrb[0].mxu0 %v1824
  %v1966 = vpop.f32.mrb[0].mxu0
  %v1967 = vadd.f32 0.0, %v1966
  %v1968 = vpop.f32.mrb[0].mxu0
  %v1969 = vadd.f32 0.0, %v1968
  %1970 = vdwg.mxu0
  %v1971 = vadd.f32 %v1825, %v1896
  %v1972 = vadd.f32 %v1826, %v1898
  %v1973 = vadd.f32 %v1827, %v1967
  %v1974 = vadd.f32 %v1828, %v1969
  %v1975 = vxor.u32 %v1971, 2147483648
  %v1976 = vmul.f32 %v1975, 1.442695
  %v1977 = vpow.pop %v1976
  %v1978 = vadd.f32 %v1977, 1.0
  %v1979 = vrcp.pop %v1978
  %v1980 = vmul.f32 1.0, %v1979
  %v1981 = vxor.u32 %v1972, 2147483648
  %v1982 = vmul.f32 %v1981, 1.442695
  %v1983 = vpow.pop %v1982
  %v1984 = vadd.f32 %v1983, 1.0
  %v1985 = vrcp.pop %v1984
  %v1986 = vmul.f32 1.0, %v1985
  %v1987 = vtanh.pop %v1973
  %v1988 = vxor.u32 %v1974, 2147483648
  %v1989 = vmul.f32 %v1988, 1.442695
  %v1990 = vpow.pop %v1989
  %v1991 = vadd.f32 %v1990, 1.0
  %v1992 = vrcp.pop %v1991
  %v1993 = vmul.f32 1.0, %v1992
  %v1994 = vmul.f32 %v1986, %v1822
  %v1995 = vmul.f32 %v1980, %v1987
  %v1996 = vadd.f32 %v1994, %v1995
  %v1997 = vtanh.pop %v1996
  %v1998 = vmul.f32 %v1993, %v1997
  %v1999 = vld [vmem:[%s4] sm:$0xff]
  %v2000 = vld [vmem:[%s4 + $0x8] sm:$0xff]
  %v2001 = vld [vmem:[%s4 + $0x10] sm:$0xff]
  %v2002 = vld [vmem:[%s4 + $0x18] sm:$0xff]
  %v2003 = vld [vmem:[%s4 + $0x20] sm:$0xff]
  %v2004 = vld [vmem:[%s4 + $0x28] sm:$0xff]
  %v2005 = vld [vmem:[%s4 + $0x30] sm:$0xff]
  %v2006 = vld [vmem:[%s4 + $0x38] sm:$0xff]
  %v2007 = vld [vmem:[%s4 + $0x40] sm:$0xff]
  %v2008 = vld [vmem:[%s4 + $0x48] sm:$0xff]
  %v2009 = vld [vmem:[%s4 + $0x50] sm:$0xff]
  %v2010 = vld [vmem:[%s4 + $0x58] sm:$0xff]
  %v2011 = vld [vmem:[%s4 + $0x60] sm:$0xff]
  %v2012 = vld [vmem:[%s4 + $0x68] sm:$0xff]
  %v2013 = vld [vmem:[%s4 + $0x70] sm:$0xff]
  %v2014 = vld [vmem:[%s4 + $0x78] sm:$0xff]
  %v2015 = vld [vmem:[%s5] sm:$0x1]
  %v2017 = vlaneseq
  %v2018 = vshrl.u32 %v2017, 7
  %v2019 = vsub.s32 0, %v2018
  %v2020 = vrot.slane %v2015, %v2019
  %2022 = vmatprep.subr.mxu0 0.0
  %2023 = vmatpush1.msra.mxu0 %v1999
  %2024 = vmatprep.subr.mxu0 0.0
  %2025 = vmatpush1.msra.mxu0 %v2000
  %2026 = vmatprep.subr.mxu0 0.0
  %2027 = vmatpush1.msra.mxu0 %v2001
  %2028 = vmatprep.subr.mxu0 0.0
  %2029 = vmatpush1.msra.mxu0 %v2002
  %2030 = vmatprep.subr.mxu0 0.0
  %2031 = vmatpush1.msra.mxu0 %v2003
  %2032 = vmatprep.subr.mxu0 0.0
  %2033 = vmatpush1.msra.mxu0 %v2004
  %2034 = vmatprep.subr.mxu0 0.0
  %2035 = vmatpush1.msra.mxu0 %v2005
  %2036 = vmatprep.subr.mxu0 0.0
  %2037 = vmatpush1.msra.mxu0 %v2006
  %2038 = vmatprep.subr.mxu0 0.0
  %2039 = vmatpush1.msra.mxu0 %v2007
  %2040 = vmatprep.subr.mxu0 0.0
  %2041 = vmatpush1.msra.mxu0 %v2008
  %2042 = vmatprep.subr.mxu0 0.0
  %2043 = vmatpush1.msra.mxu0 %v2009
  %2044 = vmatprep.subr.mxu0 0.0
  %2045 = vmatpush1.msra.mxu0 %v2010
  %2046 = vmatprep.subr.mxu0 0.0
  %2047 = vmatpush1.msra.mxu0 %v2011
  %2048 = vmatprep.subr.mxu0 0.0
  %2049 = vmatpush1.msra.mxu0 %v2012
  %2050 = vmatprep.subr.mxu0 0.0
  %2051 = vmatpush1.msra.mxu0 %v2013
  %2052 = vmatprep.subr.mxu0 0.0
  %2053 = vmatpush1.msra.mxu0 %v2014
  %2054 = vmatprep.subr.mxu0 0.0
  %2055 = vmatpush1.msra.mxu0 0.0
  %2056 = vmatprep.subr.mxu0 0.0
  %2057 = vmatpush1.msra.mxu0 0.0
  %2058 = vmatprep.subr.mxu0 0.0
  %2059 = vmatpush1.msra.mxu0 0.0
  %2060 = vmatprep.subr.mxu0 0.0
  %2061 = vmatpush1.msra.mxu0 0.0
  %2062 = vmatprep.subr.mxu0 0.0
  %2063 = vmatpush1.msra.mxu0 0.0
  %2064 = vmatprep.subr.mxu0 0.0
  %2065 = vmatpush1.msra.mxu0 0.0
  %2066 = vmatprep.subr.mxu0 0.0
  %2067 = vmatpush1.msra.mxu0 0.0
  %2068 = vmatprep.subr.mxu0 0.0
  %2069 = vmatpush1.msra.mxu0 0.0
  %2070 = vmatprep.subr.mxu0 0.0
  %2071 = vmatpush1.msra.mxu0 0.0
  %2072 = vmatprep.subr.mxu0 0.0
  %2073 = vmatpush1.msra.mxu0 0.0
  %2074 = vmatprep.subr.mxu0 0.0
  %2075 = vmatpush1.msra.mxu0 0.0
  %2076 = vmatprep.subr.mxu0 0.0
  %2077 = vmatpush1.msra.mxu0 0.0
  %2078 = vmatprep.subr.mxu0 0.0
  %2079 = vmatpush1.msra.mxu0 0.0
  %2080 = vmatprep.subr.mxu0 0.0
  %2081 = vmatpush1.msra.mxu0 0.0
  %2082 = vmatprep.subr.mxu0 0.0
  %2083 = vmatpush1.msra.mxu0 0.0
  %2084 = vmatprep.subr.mxu0 0.0
  %2085 = vmatpush1.msra.mxu0 0.0
  %2086 = vmatprep.mubr.f32.mxu0 0.0
  %2087 = vmatmul.mubr.f32.gmra.mrb[0].mxu0 %v1998
  %v2088 = vpop.f32.mrb[0].mxu0
  %v2089 = vadd.f32 %v2020, %v2088
  %v2090 = vpop.f32.mrb[0].mxu0
  %2091 = vdwg.mxu0
  %2092 = vst [vmem:[%s6] sm:$0xff] %v2089
  // Predicated region
  $region26: #{_lambda_.3} parent=0 // pred_check
    _
  $region27: #{_lambda_.3} parent=0 // pred_check_branch
    %2094 = sbr.rel (0) target = $region29
  $region28: #{_lambda_.3} parent=0 // pred_region
    _
  $region29: #{_lambda_.3} parent=0 // pred_fallthru
    _
  // Predicated region
  $region30: #{_lambda_.3} parent=0 // pred_check
    _
  $region31: #{_lambda_.3} parent=0 // pred_check_branch
    %2096 = sbr.rel (0) target = $region33
  $region32: #{_lambda_.3} parent=0 // pred_region
    _
  $region33: #{_lambda_.3} parent=0 // pred_fallthru
    _

</llo_original>
